<compile_context>
chip_gen: v7x
topology: tpu7x:2x2x1
jax: 0.10.0
libtpu: 0.0.40
codegen_flags: <defaults>
</compile_context>

<pallas_src>
import math
from functools import partial

import jax
import jax.numpy as jnp
from jax.experimental import pallas as pl
from jax.experimental.pallas import tpu as pltpu


# --------------------------- in-kernel helpers -------------------------------

def _erf_approx(x):
    # Abramowitz & Stegun 7.1.26 rational erf approximation (|err| <= 1.5e-7);
    # matches PyTorch's exact (erf-based) nn.GELU() to ~1e-7 in f32.
    a1, a2, a3, a4, a5 = (0.254829592, -0.284496736, 1.421413741,
                          -1.453152027, 1.061405429)
    p = 0.3275911
    ax = jnp.abs(x)
    t = 1.0 / (1.0 + p * ax)
    poly = ((((a5 * t + a4) * t + a3) * t + a2) * t + a1) * t
    e = 1.0 - poly * jnp.exp(-ax * ax)
    return jnp.where(x >= 0, e, -e)


def _gelu_exact(x):
    return 0.5 * x * (1.0 + _erf_approx(x * (1.0 / math.sqrt(2.0))))


# --------------------------- fused Pallas kernel -----------------------------

def _adapter_block_kernel(x_ref, f_ref, wlin_ref, blin_ref, wq_ref, bq_ref,
                          wkv_ref, bkv_ref, wo_ref, bo_ref, g_ref, beta_ref,
                          cw_ref, scale_ref, shift_ref, o_ref, xp_ref,
                          *, n_heads, sm_scale, H, W, down_sample, ln_eps):
    bf = jnp.bfloat16
    x = x_ref[0]                                   # (Lq, C)  f32, Lq = H*W
    fm = f_ref[0]                                  # (Lkv, D) f32
    Lq, C = x.shape
    dh = C // n_heads

    # ---- Linear(feats_dim -> in_channels) and Q / KV projections (bf16 MXU, f32 acc)
    f_lin = jnp.dot(fm.astype(bf), wlin_ref[...],
                    preferred_element_type=jnp.float32) + blin_ref[...]      # (Lkv, C)
    q = jnp.dot(x.astype(bf), wq_ref[...],
                preferred_element_type=jnp.float32) + bq_ref[...]            # (Lq, C)
    kv = jnp.dot(f_lin.astype(bf), wkv_ref[...],
                 preferred_element_type=jnp.float32) + bkv_ref[...]          # (Lkv, 2C)
    k = kv[:, :C]
    v = kv[:, C:]

    # ---- per-head scaled-dot-product attention (softmax in f32, recip on EUP)
    heads = []
    for h in range(n_heads):                       # static unroll, n_heads small
        qh = q[:, h * dh:(h + 1) * dh].astype(bf)  # (Lq, dh)
        kh = k[:, h * dh:(h + 1) * dh].astype(bf)  # (Lkv, dh)
        vh = v[:, h * dh:(h + 1) * dh].astype(bf)  # (Lkv, dh)
        s = jax.lax.dot_general(qh, kh, (((1,), (1,)), ((), ())),
                                preferred_element_type=jnp.float32) * sm_scale
        m = jnp.max(s, axis=-1, keepdims=True)
        p = jnp.exp(s - m)
        p = p * pl.reciprocal(jnp.sum(p, axis=-1, keepdims=True), approx=True)
        heads.append(jnp.dot(p.astype(bf), vh,
                             preferred_element_type=jnp.float32))            # (Lq, dh)
    attn = jnp.concatenate(heads, axis=-1)                                   # (Lq, C)

    attn_out = jnp.dot(attn.astype(bf), wo_ref[...],
                       preferred_element_type=jnp.float32) + bo_ref[...]     # (Lq, C)

    # ---- residual + LayerNorm (f32)
    z = x + attn_out
    mu = jnp.mean(z, axis=-1, keepdims=True)
    var = jnp.mean(jnp.square(z - mu), axis=-1, keepdims=True)
    zn = (z - mu) * jax.lax.rsqrt(var + ln_eps)
    zn = zn * g_ref[...] + beta_ref[...]                                     # (Lq, C)

    # ---- zero-padded NHWC tile in VMEM scratch (conv padding=1 folded in-kernel)
    xp_ref[...] = jnp.zeros(xp_ref.shape, jnp.float32)
    xp_ref[1:H + 1, 1:W + 1, :] = zn.reshape(H, W, C)

    # ---- 3x3 conv as a single im2col matmul (K = 9*C), then BN(eval) + GELU
    patches = [xp_ref[kh:kh + H, kw:kw + W, :].reshape(H * W, C)
               for kh in range(3) for kw in range(3)]
    patch = jnp.concatenate(patches, axis=-1).astype(bf)                     # (H*W, 9C)
    y = jnp.dot(patch, cw_ref[...], preferred_element_type=jnp.float32)      # (H*W, Cout)
    y = y * scale_ref[...] + shift_ref[...]                                  # BatchNorm2d (folded)
    y = _gelu_exact(y)                                                       # nn.GELU()
    Cout = y.shape[-1]

    if not down_sample:
        o_ref[0] = y.reshape(H, W, Cout)
    else:                                                                    # MaxPool2d(2), vectorized
        y5 = y.reshape(H // 2, 2, W // 2, 2, Cout)
        o_ref[0] = jnp.maximum(jnp.maximum(y5[:, 0, :, 0], y5[:, 0, :, 1]),
                               jnp.maximum(y5[:, 1, :, 0], y5[:, 1, :, 1]))


# --------------------------- module forward ---------------------------------

def adapter_block_forward(x, f, params, *, n_heads, down_sample=True):
    """x: [n, c, h, w] (NCHW), f: [n, d, l, s]  ->  [n, out_c, h', w'] (NCHW)."""
    N, C, H, W = x.shape
    _, D, L, S = f.shape
    Lq, Lkv = H * W, L * S
    dh = C // n_heads
    Cout = params["conv_w"].shape[-1]
    bf = jnp.bfloat16

    # boundary layout changes only (everything else stays in VMEM inside the kernel)
    x_nlc = jnp.transpose(x, (0, 2, 3, 1)).reshape(N, Lq, C)     # n (h w) c
    f_nld = jnp.transpose(f, (0, 2, 3, 1)).reshape(N, Lkv, D)    # n (l s) d

    # split MHA in_proj into Q and fused KV; transpose to (in, out); bf16 weights for MXU
    wq_t = params["in_proj_w"][:C].T.astype(bf)                  # (C, C)
    wkv_t = params["in_proj_w"][C:].T.astype(bf)                 # (C, 2C)
    bq = params["in_proj_b"][:C]
    bkv = params["in_proj_b"][C:]
    w_lin_t = params["w_lin"].T.astype(bf)                       # (D, C)
    wo_t = params["w_out"].T.astype(bf)                          # (C, C)

    # fold eval-mode BatchNorm2d into per-channel scale/shift (f32)
    bn_eps = 1e-5
    bn_scale = params["bn_g"] * jax.lax.rsqrt(params["bn_var"] + bn_eps)
    bn_shift = params["bn_b"] - params["bn_mean"] * bn_scale

    # conv weight laid out (kh, kw, Cin, Cout) -> (9*Cin, Cout), matching im2col column order.
    # TODO(synk): real PyTorch Conv2d weights are (Cout, Cin, kh, kw); permute(2,3,1,0) first.
    conv_w = params["conv_w"].reshape(9 * C, Cout).astype(bf)

    def row(v):
        return v.reshape(1, -1).astype(jnp.float32)

    inputs = (x_nlc, f_nld,
              w_lin_t, row(params["b_lin"]),
              wq_t, row(bq), wkv_t, row(bkv),
              wo_t, row(params["b_out"]),
              row(params["ln_g"]), row(params["ln_b"]),
              conv_w, row(bn_scale), row(bn_shift))

    def full_spec(a):                                            # weights: resident across grid
        return pl.BlockSpec(a.shape, lambda n: (0, 0))

    in_specs = [pl.BlockSpec((1, Lq, C), lambda n: (n, 0, 0)),
                pl.BlockSpec((1, Lkv, D), lambda n: (n, 0, 0))] + \
               [full_spec(a) for a in inputs[2:]]

    Hp, Wp = (H // 2, W // 2) if down_sample else (H, W)

    kernel = partial(_adapter_block_kernel, n_heads=n_heads,
                     sm_scale=1.0 / math.sqrt(dh), H=H, W=W,
                     down_sample=down_sample, ln_eps=1e-5)

    out_nhwc = pl.pallas_call(
        kernel,
        out_shape=jax.ShapeDtypeStruct((N, Hp, Wp, Cout), jnp.float32),
        grid_spec=pltpu.PrefetchScalarGridSpec(
            num_scalar_prefetch=0,
            grid=(N,),
            in_specs=in_specs,
            out_specs=pl.BlockSpec((1, Hp, Wp, Cout), lambda n: (n, 0, 0, 0)),
            scratch_shapes=[pltpu.VMEM((H + 2, W + 2, C), jnp.float32)],
        ),
        compiler_params=pltpu.CompilerParams(
            dimension_semantics=("parallel",)),   # shard batch across v7x's 2 TCs
    )(*inputs)

    return jnp.transpose(out_nhwc, (0, 3, 1, 2))                 # NHWC -> NCHW


def init_params(key, in_channels, feats_dim, out_channels):
    ks = jax.random.split(key, 11)
    s = 0.05
    return {
        "w_lin": s * jax.random.normal(ks[0], (in_channels, feats_dim), jnp.float32),
        "b_lin": s * jax.random.normal(ks[1], (in_channels,), jnp.float32),
        "in_proj_w": s * jax.random.normal(ks[2], (3 * in_channels, in_channels), jnp.float32),
        "in_proj_b": s * jax.random.normal(ks[3], (3 * in_channels,), jnp.float32),
        "w_out": s * jax.random.normal(ks[4], (in_channels, in_channels), jnp.float32),
        "b_out": s * jax.random.normal(ks[5], (in_channels,), jnp.float32),
        "ln_g": jnp.ones((in_channels,), jnp.float32),
        "ln_b": jnp.zeros((in_channels,), jnp.float32),
        "conv_w": s * jax.random.normal(ks[6], (3, 3, in_channels, out_channels), jnp.float32),
        "bn_g": 1.0 + 0.1 * jax.random.normal(ks[7], (out_channels,), jnp.float32),
        "bn_b": 0.1 * jax.random.normal(ks[8], (out_channels,), jnp.float32),
        "bn_mean": 0.1 * jax.random.normal(ks[9], (out_channels,), jnp.float32),
        "bn_var": 1.0 + 0.1 * jnp.abs(jax.random.normal(ks[10], (out_channels,), jnp.float32)),
    }


if __name__ == "__main__":
    key = jax.random.PRNGKey(0)
    kx, kf, kp = jax.random.split(key, 3)

    N, C_in, H, W = 2, 32, 8, 8          # x: [n, c, h, w]
    D, L, S = 48, 4, 8                   # f: [n, d, l, s]
    C_out, n_heads = 16, 4

    x = jax.random.normal(kx, (N, C_in, H, W), jnp.float32)
    f = jax.random.normal(kf, (N, D, L, S), jnp.float32)
    params = init_params(kp, C_in, D, C_out)

    fwd = jax.jit(partial(adapter_block_forward, n_heads=n_heads, down_sample=True))
    out = jax.block_until_ready(fwd(x, f, params))
    assert out.shape == (N, C_out, H // 2, W // 2), out.shape
    assert bool(jnp.all(jnp.isfinite(out)))
    print("KERNEL_OK")
</pallas_src>

<mosaic_0001>
module attributes {stable_mosaic.version = 11 : i64} {
  func.func @_adapter_block_kernel(%arg0: i32, %arg1: memref<1x64x32xf32, #tpu.memory_space<vmem>>, %arg2: memref<1x32x48xf32, #tpu.memory_space<vmem>>, %arg3: memref<48x32xbf16, #tpu.memory_space<vmem>>, %arg4: memref<1x32xf32, #tpu.memory_space<vmem>>, %arg5: memref<32x32xbf16, #tpu.memory_space<vmem>>, %arg6: memref<1x32xf32, #tpu.memory_space<vmem>>, %arg7: memref<32x64xbf16, #tpu.memory_space<vmem>>, %arg8: memref<1x64xf32, #tpu.memory_space<vmem>>, %arg9: memref<32x32xbf16, #tpu.memory_space<vmem>>, %arg10: memref<1x32xf32, #tpu.memory_space<vmem>>, %arg11: memref<1x32xf32, #tpu.memory_space<vmem>>, %arg12: memref<1x32xf32, #tpu.memory_space<vmem>>, %arg13: memref<288x16xbf16, #tpu.memory_space<vmem>>, %arg14: memref<1x16xf32, #tpu.memory_space<vmem>>, %arg15: memref<1x16xf32, #tpu.memory_space<vmem>>, %arg16: memref<1x4x4x16xf32, #tpu.memory_space<vmem>>, %arg17: memref<10x10x32xf32, #tpu.memory_space<vmem>>) attributes {dimension_semantics = [#tpu.dimension_semantics<parallel>], iteration_bounds = array<i64: 2>, scalar_prefetch = 0 : i64, scratch_operands = 1 : i64, tpu.core_type = #tpu.core_type<tc>, window_params = [{transform_indices = @transform_0, window_bounds = array<i64: 1, 64, 32>}, {transform_indices = @transform_1, window_bounds = array<i64: 1, 32, 48>}, {pipeline_mode = #tpu.pipeline_mode<synchronous>, transform_indices = @transform_2, window_bounds = array<i64: 48, 32>}, {pipeline_mode = #tpu.pipeline_mode<synchronous>, transform_indices = @transform_3, window_bounds = array<i64: 1, 32>}, {pipeline_mode = #tpu.pipeline_mode<synchronous>, transform_indices = @transform_4, window_bounds = array<i64: 32, 32>}, {pipeline_mode = #tpu.pipeline_mode<synchronous>, transform_indices = @transform_5, window_bounds = array<i64: 1, 32>}, {pipeline_mode = #tpu.pipeline_mode<synchronous>, transform_indices = @transform_6, window_bounds = array<i64: 32, 64>}, {pipeline_mode = #tpu.pipeline_mode<synchronous>, transform_indices = @transform_7, window_bounds = array<i64: 1, 64>}, {pipeline_mode = #tpu.pipeline_mode<synchronous>, transform_indices = @transform_8, window_bounds = array<i64: 32, 32>}, {pipeline_mode = #tpu.pipeline_mode<synchronous>, transform_indices = @transform_9, window_bounds = array<i64: 1, 32>}, {pipeline_mode = #tpu.pipeline_mode<synchronous>, transform_indices = @transform_10, window_bounds = array<i64: 1, 32>}, {pipeline_mode = #tpu.pipeline_mode<synchronous>, transform_indices = @transform_11, window_bounds = array<i64: 1, 32>}, {pipeline_mode = #tpu.pipeline_mode<synchronous>, transform_indices = @transform_12, window_bounds = array<i64: 288, 16>}, {pipeline_mode = #tpu.pipeline_mode<synchronous>, transform_indices = @transform_13, window_bounds = array<i64: 1, 16>}, {pipeline_mode = #tpu.pipeline_mode<synchronous>, transform_indices = @transform_14, window_bounds = array<i64: 1, 16>}, {transform_indices = @transform_15, window_bounds = array<i64: 1, 4, 4, 16>}]} {
    %c0 = arith.constant 0 : index
    %c0_0 = arith.constant 0 : index
    %c0_1 = arith.constant 0 : index
    %0 = vector.load %arg1[%c0, %c0_0, %c0_1] : memref<1x64x32xf32, #tpu.memory_space<vmem>>, vector<1x64x32xf32>
    %1 = vector.shape_cast %0 : vector<1x64x32xf32> to vector<64x32xf32>
    %c0_2 = arith.constant 0 : index
    %c0_3 = arith.constant 0 : index
    %c0_4 = arith.constant 0 : index
    %2 = vector.load %arg2[%c0_2, %c0_3, %c0_4] : memref<1x32x48xf32, #tpu.memory_space<vmem>>, vector<1x32x48xf32>
    %3 = vector.shape_cast %2 : vector<1x32x48xf32> to vector<32x48xf32>
    %4 = arith.truncf %3 : vector<32x48xf32> to vector<32x48xbf16>
    %c0_5 = arith.constant 0 : index
    %c0_6 = arith.constant 0 : index
    %5 = vector.load %arg3[%c0_5, %c0_6] : memref<48x32xbf16, #tpu.memory_space<vmem>>, vector<48x32xbf16>
    %cst = arith.constant dense<0.000000e+00> : vector<32x32xf32>
    %6 = tpu.matmul %4, %5, %cst {dimension_numbers = #tpu.dot_dimension_numbers<[1], [0], [0], [1], [0, 0, 1, 1], [], []>} : vector<32x48xbf16>, vector<48x32xbf16>, vector<32x32xf32> -> vector<32x32xf32>
    %c0_7 = arith.constant 0 : index
    %c0_8 = arith.constant 0 : index
    %7 = vector.load %arg4[%c0_7, %c0_8] : memref<1x32xf32, #tpu.memory_space<vmem>>, vector<1x32xf32>
    %8 = vector.broadcast %7 : vector<1x32xf32> to vector<32x32xf32>
    %9 = arith.addf %6, %8 : vector<32x32xf32>
    %10 = arith.truncf %1 : vector<64x32xf32> to vector<64x32xbf16>
    %c0_9 = arith.constant 0 : index
    %c0_10 = arith.constant 0 : index
    %11 = vector.load %arg5[%c0_9, %c0_10] : memref<32x32xbf16, #tpu.memory_space<vmem>>, vector<32x32xbf16>
    %cst_11 = arith.constant dense<0.000000e+00> : vector<64x32xf32>
    %12 = tpu.matmul %10, %11, %cst_11 {dimension_numbers = #tpu.dot_dimension_numbers<[1], [0], [0], [1], [0, 0, 1, 1], [], []>} : vector<64x32xbf16>, vector<32x32xbf16>, vector<64x32xf32> -> vector<64x32xf32>
    %c0_12 = arith.constant 0 : index
    %c0_13 = arith.constant 0 : index
    %13 = vector.load %arg6[%c0_12, %c0_13] : memref<1x32xf32, #tpu.memory_space<vmem>>, vector<1x32xf32>
    %14 = vector.broadcast %13 : vector<1x32xf32> to vector<64x32xf32>
    %15 = arith.addf %12, %14 : vector<64x32xf32>
    %16 = arith.truncf %9 : vector<32x32xf32> to vector<32x32xbf16>
    %c0_14 = arith.constant 0 : index
    %c0_15 = arith.constant 0 : index
    %17 = vector.load %arg7[%c0_14, %c0_15] : memref<32x64xbf16, #tpu.memory_space<vmem>>, vector<32x64xbf16>
    %cst_16 = arith.constant dense<0.000000e+00> : vector<32x64xf32>
    %18 = tpu.matmul %16, %17, %cst_16 {dimension_numbers = #tpu.dot_dimension_numbers<[1], [0], [0], [1], [0, 0, 1, 1], [], []>} : vector<32x32xbf16>, vector<32x64xbf16>, vector<32x64xf32> -> vector<32x64xf32>
    %c0_17 = arith.constant 0 : index
    %c0_18 = arith.constant 0 : index
    %19 = vector.load %arg8[%c0_17, %c0_18] : memref<1x64xf32, #tpu.memory_space<vmem>>, vector<1x64xf32>
    %20 = vector.broadcast %19 : vector<1x64xf32> to vector<32x64xf32>
    %21 = arith.addf %18, %20 : vector<32x64xf32>
    %22 = vector.extract_strided_slice %21 {offsets = [0, 0], sizes = [32, 32], strides = [1, 1]} : vector<32x64xf32> to vector<32x32xf32>
    %23 = vector.extract_strided_slice %21 {offsets = [0, 32], sizes = [32, 32], strides = [1, 1]} : vector<32x64xf32> to vector<32x32xf32>
    %24 = vector.extract_strided_slice %15 {offsets = [0, 0], sizes = [64, 8], strides = [1, 1]} : vector<64x32xf32> to vector<64x8xf32>
    %25 = arith.truncf %24 : vector<64x8xf32> to vector<64x8xbf16>
    %26 = vector.extract_strided_slice %22 {offsets = [0, 0], sizes = [32, 8], strides = [1, 1]} : vector<32x32xf32> to vector<32x8xf32>
    %27 = arith.truncf %26 : vector<32x8xf32> to vector<32x8xbf16>
    %28 = vector.extract_strided_slice %23 {offsets = [0, 0], sizes = [32, 8], strides = [1, 1]} : vector<32x32xf32> to vector<32x8xf32>
    %29 = arith.truncf %28 : vector<32x8xf32> to vector<32x8xbf16>
    %cst_19 = arith.constant dense<0.000000e+00> : vector<64x32xf32>
    %30 = tpu.matmul %25, %27, %cst_19 {dimension_numbers = #tpu.dot_dimension_numbers<[1], [1], [0], [0], [0, 0, 1, 0], [], []>} : vector<64x8xbf16>, vector<32x8xbf16>, vector<64x32xf32> -> vector<64x32xf32>
    %cst_20 = arith.constant 0.353553385 : f32
    %31 = vector.broadcast %cst_20 : f32 to vector<64x32xf32>
    %32 = arith.mulf %30, %31 : vector<64x32xf32>
    %cst_21 = arith.constant dense<0xFF800000> : vector<64xf32>
    %33 = vector.multi_reduction <maximumf>, %32, %cst_21 [1] : vector<64x32xf32> to vector<64xf32>
    %34 = vector.shape_cast %33 : vector<64xf32> to vector<64x1xf32>
    %35 = vector.broadcast %34 : vector<64x1xf32> to vector<64x32xf32>
    %36 = arith.subf %32, %35 : vector<64x32xf32>
    %37 = math.exp %36 : vector<64x32xf32>
    %cst_22 = arith.constant dense<0.000000e+00> : vector<64xf32>
    %38 = vector.multi_reduction <add>, %37, %cst_22 [1] : vector<64x32xf32> to vector<64xf32>
    %39 = vector.shape_cast %38 : vector<64xf32> to vector<64x1xf32>
    %40 = tpu.reciprocal %39 {approx = true} : vector<64x1xf32> -> vector<64x1xf32>
    %41 = vector.broadcast %40 : vector<64x1xf32> to vector<64x32xf32>
    %42 = arith.mulf %37, %41 : vector<64x32xf32>
    %43 = arith.truncf %42 : vector<64x32xf32> to vector<64x32xbf16>
    %cst_23 = arith.constant dense<0.000000e+00> : vector<64x8xf32>
    %44 = tpu.matmul %43, %29, %cst_23 {dimension_numbers = #tpu.dot_dimension_numbers<[1], [0], [0], [1], [0, 0, 1, 1], [], []>} : vector<64x32xbf16>, vector<32x8xbf16>, vector<64x8xf32> -> vector<64x8xf32>
    %45 = vector.extract_strided_slice %15 {offsets = [0, 8], sizes = [64, 8], strides = [1, 1]} : vector<64x32xf32> to vector<64x8xf32>
    %46 = arith.truncf %45 : vector<64x8xf32> to vector<64x8xbf16>
    %47 = vector.extract_strided_slice %22 {offsets = [0, 8], sizes = [32, 8], strides = [1, 1]} : vector<32x32xf32> to vector<32x8xf32>
    %48 = arith.truncf %47 : vector<32x8xf32> to vector<32x8xbf16>
    %49 = vector.extract_strided_slice %23 {offsets = [0, 8], sizes = [32, 8], strides = [1, 1]} : vector<32x32xf32> to vector<32x8xf32>
    %50 = arith.truncf %49 : vector<32x8xf32> to vector<32x8xbf16>
    %cst_24 = arith.constant dense<0.000000e+00> : vector<64x32xf32>
    %51 = tpu.matmul %46, %48, %cst_24 {dimension_numbers = #tpu.dot_dimension_numbers<[1], [1], [0], [0], [0, 0, 1, 0], [], []>} : vector<64x8xbf16>, vector<32x8xbf16>, vector<64x32xf32> -> vector<64x32xf32>
    %cst_25 = arith.constant 0.353553385 : f32
    %52 = vector.broadcast %cst_25 : f32 to vector<64x32xf32>
    %53 = arith.mulf %51, %52 : vector<64x32xf32>
    %cst_26 = arith.constant dense<0xFF800000> : vector<64xf32>
    %54 = vector.multi_reduction <maximumf>, %53, %cst_26 [1] : vector<64x32xf32> to vector<64xf32>
    %55 = vector.shape_cast %54 : vector<64xf32> to vector<64x1xf32>
    %56 = vector.broadcast %55 : vector<64x1xf32> to vector<64x32xf32>
    %57 = arith.subf %53, %56 : vector<64x32xf32>
    %58 = math.exp %57 : vector<64x32xf32>
    %cst_27 = arith.constant dense<0.000000e+00> : vector<64xf32>
    %59 = vector.multi_reduction <add>, %58, %cst_27 [1] : vector<64x32xf32> to vector<64xf32>
    %60 = vector.shape_cast %59 : vector<64xf32> to vector<64x1xf32>
    %61 = tpu.reciprocal %60 {approx = true} : vector<64x1xf32> -> vector<64x1xf32>
    %62 = vector.broadcast %61 : vector<64x1xf32> to vector<64x32xf32>
    %63 = arith.mulf %58, %62 : vector<64x32xf32>
    %64 = arith.truncf %63 : vector<64x32xf32> to vector<64x32xbf16>
    %cst_28 = arith.constant dense<0.000000e+00> : vector<64x8xf32>
    %65 = tpu.matmul %64, %50, %cst_28 {dimension_numbers = #tpu.dot_dimension_numbers<[1], [0], [0], [1], [0, 0, 1, 1], [], []>} : vector<64x32xbf16>, vector<32x8xbf16>, vector<64x8xf32> -> vector<64x8xf32>
    %66 = vector.extract_strided_slice %15 {offsets = [0, 16], sizes = [64, 8], strides = [1, 1]} : vector<64x32xf32> to vector<64x8xf32>
    %67 = arith.truncf %66 : vector<64x8xf32> to vector<64x8xbf16>
    %68 = vector.extract_strided_slice %22 {offsets = [0, 16], sizes = [32, 8], strides = [1, 1]} : vector<32x32xf32> to vector<32x8xf32>
    %69 = arith.truncf %68 : vector<32x8xf32> to vector<32x8xbf16>
    %70 = vector.extract_strided_slice %23 {offsets = [0, 16], sizes = [32, 8], strides = [1, 1]} : vector<32x32xf32> to vector<32x8xf32>
    %71 = arith.truncf %70 : vector<32x8xf32> to vector<32x8xbf16>
    %cst_29 = arith.constant dense<0.000000e+00> : vector<64x32xf32>
    %72 = tpu.matmul %67, %69, %cst_29 {dimension_numbers = #tpu.dot_dimension_numbers<[1], [1], [0], [0], [0, 0, 1, 0], [], []>} : vector<64x8xbf16>, vector<32x8xbf16>, vector<64x32xf32> -> vector<64x32xf32>
    %cst_30 = arith.constant 0.353553385 : f32
    %73 = vector.broadcast %cst_30 : f32 to vector<64x32xf32>
    %74 = arith.mulf %72, %73 : vector<64x32xf32>
    %cst_31 = arith.constant dense<0xFF800000> : vector<64xf32>
    %75 = vector.multi_reduction <maximumf>, %74, %cst_31 [1] : vector<64x32xf32> to vector<64xf32>
    %76 = vector.shape_cast %75 : vector<64xf32> to vector<64x1xf32>
    %77 = vector.broadcast %76 : vector<64x1xf32> to vector<64x32xf32>
    %78 = arith.subf %74, %77 : vector<64x32xf32>
    %79 = math.exp %78 : vector<64x32xf32>
    %cst_32 = arith.constant dense<0.000000e+00> : vector<64xf32>
    %80 = vector.multi_reduction <add>, %79, %cst_32 [1] : vector<64x32xf32> to vector<64xf32>
    %81 = vector.shape_cast %80 : vector<64xf32> to vector<64x1xf32>
    %82 = tpu.reciprocal %81 {approx = true} : vector<64x1xf32> -> vector<64x1xf32>
    %83 = vector.broadcast %82 : vector<64x1xf32> to vector<64x32xf32>
    %84 = arith.mulf %79, %83 : vector<64x32xf32>
    %85 = arith.truncf %84 : vector<64x32xf32> to vector<64x32xbf16>
    %cst_33 = arith.constant dense<0.000000e+00> : vector<64x8xf32>
    %86 = tpu.matmul %85, %71, %cst_33 {dimension_numbers = #tpu.dot_dimension_numbers<[1], [0], [0], [1], [0, 0, 1, 1], [], []>} : vector<64x32xbf16>, vector<32x8xbf16>, vector<64x8xf32> -> vector<64x8xf32>
    %87 = vector.extract_strided_slice %15 {offsets = [0, 24], sizes = [64, 8], strides = [1, 1]} : vector<64x32xf32> to vector<64x8xf32>
    %88 = arith.truncf %87 : vector<64x8xf32> to vector<64x8xbf16>
    %89 = vector.extract_strided_slice %22 {offsets = [0, 24], sizes = [32, 8], strides = [1, 1]} : vector<32x32xf32> to vector<32x8xf32>
    %90 = arith.truncf %89 : vector<32x8xf32> to vector<32x8xbf16>
    %91 = vector.extract_strided_slice %23 {offsets = [0, 24], sizes = [32, 8], strides = [1, 1]} : vector<32x32xf32> to vector<32x8xf32>
    %92 = arith.truncf %91 : vector<32x8xf32> to vector<32x8xbf16>
    %cst_34 = arith.constant dense<0.000000e+00> : vector<64x32xf32>
    %93 = tpu.matmul %88, %90, %cst_34 {dimension_numbers = #tpu.dot_dimension_numbers<[1], [1], [0], [0], [0, 0, 1, 0], [], []>} : vector<64x8xbf16>, vector<32x8xbf16>, vector<64x32xf32> -> vector<64x32xf32>
    %cst_35 = arith.constant 0.353553385 : f32
    %94 = vector.broadcast %cst_35 : f32 to vector<64x32xf32>
    %95 = arith.mulf %93, %94 : vector<64x32xf32>
    %cst_36 = arith.constant dense<0xFF800000> : vector<64xf32>
    %96 = vector.multi_reduction <maximumf>, %95, %cst_36 [1] : vector<64x32xf32> to vector<64xf32>
    %97 = vector.shape_cast %96 : vector<64xf32> to vector<64x1xf32>
    %98 = vector.broadcast %97 : vector<64x1xf32> to vector<64x32xf32>
    %99 = arith.subf %95, %98 : vector<64x32xf32>
    %100 = math.exp %99 : vector<64x32xf32>
    %cst_37 = arith.constant dense<0.000000e+00> : vector<64xf32>
    %101 = vector.multi_reduction <add>, %100, %cst_37 [1] : vector<64x32xf32> to vector<64xf32>
    %102 = vector.shape_cast %101 : vector<64xf32> to vector<64x1xf32>
    %103 = tpu.reciprocal %102 {approx = true} : vector<64x1xf32> -> vector<64x1xf32>
    %104 = vector.broadcast %103 : vector<64x1xf32> to vector<64x32xf32>
    %105 = arith.mulf %100, %104 : vector<64x32xf32>
    %106 = arith.truncf %105 : vector<64x32xf32> to vector<64x32xbf16>
    %cst_38 = arith.constant dense<0.000000e+00> : vector<64x8xf32>
    %107 = tpu.matmul %106, %92, %cst_38 {dimension_numbers = #tpu.dot_dimension_numbers<[1], [0], [0], [1], [0, 0, 1, 1], [], []>} : vector<64x32xbf16>, vector<32x8xbf16>, vector<64x8xf32> -> vector<64x8xf32>
    %108 = tpu.concatenate %44, %65, %86, %107 in 1 : vector<64x8xf32>, vector<64x8xf32>, vector<64x8xf32>, vector<64x8xf32> -> vector<64x32xf32>
    %109 = arith.truncf %108 : vector<64x32xf32> to vector<64x32xbf16>
    %c0_39 = arith.constant 0 : index
    %c0_40 = arith.constant 0 : index
    %110 = vector.load %arg9[%c0_39, %c0_40] : memref<32x32xbf16, #tpu.memory_space<vmem>>, vector<32x32xbf16>
    %cst_41 = arith.constant dense<0.000000e+00> : vector<64x32xf32>
    %111 = tpu.matmul %109, %110, %cst_41 {dimension_numbers = #tpu.dot_dimension_numbers<[1], [0], [0], [1], [0, 0, 1, 1], [], []>} : vector<64x32xbf16>, vector<32x32xbf16>, vector<64x32xf32> -> vector<64x32xf32>
    %c0_42 = arith.constant 0 : index
    %c0_43 = arith.constant 0 : index
    %112 = vector.load %arg10[%c0_42, %c0_43] : memref<1x32xf32, #tpu.memory_space<vmem>>, vector<1x32xf32>
    %113 = vector.broadcast %112 : vector<1x32xf32> to vector<64x32xf32>
    %114 = arith.addf %111, %113 : vector<64x32xf32>
    %115 = arith.addf %1, %114 : vector<64x32xf32>
    %cst_44 = arith.constant dense<0.000000e+00> : vector<64xf32>
    %116 = vector.multi_reduction <add>, %115, %cst_44 [1] : vector<64x32xf32> to vector<64xf32>
    %117 = vector.shape_cast %116 : vector<64xf32> to vector<64x1xf32>
    %cst_45 = arith.constant 3.200000e+01 : f32
    %118 = vector.broadcast %cst_45 : f32 to vector<64x1xf32>
    %119 = arith.divf %117, %118 : vector<64x1xf32>
    %120 = vector.broadcast %119 : vector<64x1xf32> to vector<64x32xf32>
    %121 = arith.subf %115, %120 : vector<64x32xf32>
    %122 = arith.mulf %121, %121 : vector<64x32xf32>
    %cst_46 = arith.constant dense<0.000000e+00> : vector<64xf32>
    %123 = vector.multi_reduction <add>, %122, %cst_46 [1] : vector<64x32xf32> to vector<64xf32>
    %124 = vector.shape_cast %123 : vector<64xf32> to vector<64x1xf32>
    %cst_47 = arith.constant 3.200000e+01 : f32
    %125 = vector.broadcast %cst_47 : f32 to vector<64x1xf32>
    %126 = arith.divf %124, %125 : vector<64x1xf32>
    %127 = vector.broadcast %119 : vector<64x1xf32> to vector<64x32xf32>
    %128 = arith.subf %115, %127 : vector<64x32xf32>
    %cst_48 = arith.constant 9.99999974E-6 : f32
    %129 = vector.broadcast %cst_48 : f32 to vector<64x1xf32>
    %130 = arith.addf %126, %129 : vector<64x1xf32>
    %131 = math.rsqrt %130 : vector<64x1xf32>
    %132 = vector.broadcast %131 : vector<64x1xf32> to vector<64x32xf32>
    %133 = arith.mulf %128, %132 : vector<64x32xf32>
    %c0_49 = arith.constant 0 : index
    %c0_50 = arith.constant 0 : index
    %134 = vector.load %arg11[%c0_49, %c0_50] : memref<1x32xf32, #tpu.memory_space<vmem>>, vector<1x32xf32>
    %135 = vector.broadcast %134 : vector<1x32xf32> to vector<64x32xf32>
    %136 = arith.mulf %133, %135 : vector<64x32xf32>
    %c0_51 = arith.constant 0 : index
    %c0_52 = arith.constant 0 : index
    %137 = vector.load %arg12[%c0_51, %c0_52] : memref<1x32xf32, #tpu.memory_space<vmem>>, vector<1x32xf32>
    %138 = vector.broadcast %137 : vector<1x32xf32> to vector<64x32xf32>
    %139 = arith.addf %136, %138 : vector<64x32xf32>
    %cst_53 = arith.constant 0.000000e+00 : f32
    %140 = vector.broadcast %cst_53 : f32 to vector<10x10x32xf32>
    %c0_54 = arith.constant 0 : index
    %c0_55 = arith.constant 0 : index
    %c0_56 = arith.constant 0 : index
    %141 = vector.load %arg17[%c0_54, %c0_55, %c0_56] : memref<10x10x32xf32, #tpu.memory_space<vmem>>, vector<10x10x32xf32>
    tpu.vector_store %arg17[%c0_54, %c0_55, %c0_56], %140 {strides = array<i32>} : memref<10x10x32xf32, #tpu.memory_space<vmem>>, vector<10x10x32xf32>,
    %142 = vector.shape_cast %139 : vector<64x32xf32> to vector<8x8x32xf32>
    %c1 = arith.constant 1 : index
    %c1_57 = arith.constant 1 : index
    %c0_58 = arith.constant 0 : index
    %143 = vector.load %arg17[%c1, %c1_57, %c0_58] : memref<10x10x32xf32, #tpu.memory_space<vmem>>, vector<8x8x32xf32>
    tpu.vector_store %arg17[%c1, %c1_57, %c0_58], %142 {strides = array<i32>} : memref<10x10x32xf32, #tpu.memory_space<vmem>>, vector<8x8x32xf32>,
    %c0_59 = arith.constant 0 : index
    %c0_60 = arith.constant 0 : index
    %c0_61 = arith.constant 0 : index
    %144 = vector.load %arg17[%c0_59, %c0_60, %c0_61] : memref<10x10x32xf32, #tpu.memory_space<vmem>>, vector<8x8x32xf32>
    %145 = vector.shape_cast %144 : vector<8x8x32xf32> to vector<64x32xf32>
    %c0_62 = arith.constant 0 : index
    %c1_63 = arith.constant 1 : index
    %c0_64 = arith.constant 0 : index
    %146 = vector.load %arg17[%c0_62, %c1_63, %c0_64] : memref<10x10x32xf32, #tpu.memory_space<vmem>>, vector<8x8x32xf32>
    %147 = vector.shape_cast %146 : vector<8x8x32xf32> to vector<64x32xf32>
    %c0_65 = arith.constant 0 : index
    %c2 = arith.constant 2 : index
    %c0_66 = arith.constant 0 : index
    %148 = vector.load %arg17[%c0_65, %c2, %c0_66] : memref<10x10x32xf32, #tpu.memory_space<vmem>>, vector<8x8x32xf32>
    %149 = vector.shape_cast %148 : vector<8x8x32xf32> to vector<64x32xf32>
    %c1_67 = arith.constant 1 : index
    %c0_68 = arith.constant 0 : index
    %c0_69 = arith.constant 0 : index
    %150 = vector.load %arg17[%c1_67, %c0_68, %c0_69] : memref<10x10x32xf32, #tpu.memory_space<vmem>>, vector<8x8x32xf32>
    %151 = vector.shape_cast %150 : vector<8x8x32xf32> to vector<64x32xf32>
    %c1_70 = arith.constant 1 : index
    %c1_71 = arith.constant 1 : index
    %c0_72 = arith.constant 0 : index
    %152 = vector.load %arg17[%c1_70, %c1_71, %c0_72] : memref<10x10x32xf32, #tpu.memory_space<vmem>>, vector<8x8x32xf32>
    %153 = vector.shape_cast %152 : vector<8x8x32xf32> to vector<64x32xf32>
    %c1_73 = arith.constant 1 : index
    %c2_74 = arith.constant 2 : index
    %c0_75 = arith.constant 0 : index
    %154 = vector.load %arg17[%c1_73, %c2_74, %c0_75] : memref<10x10x32xf32, #tpu.memory_space<vmem>>, vector<8x8x32xf32>
    %155 = vector.shape_cast %154 : vector<8x8x32xf32> to vector<64x32xf32>
    %c2_76 = arith.constant 2 : index
    %c0_77 = arith.constant 0 : index
    %c0_78 = arith.constant 0 : index
    %156 = vector.load %arg17[%c2_76, %c0_77, %c0_78] : memref<10x10x32xf32, #tpu.memory_space<vmem>>, vector<8x8x32xf32>
    %157 = vector.shape_cast %156 : vector<8x8x32xf32> to vector<64x32xf32>
    %c2_79 = arith.constant 2 : index
    %c1_80 = arith.constant 1 : index
    %c0_81 = arith.constant 0 : index
    %158 = vector.load %arg17[%c2_79, %c1_80, %c0_81] : memref<10x10x32xf32, #tpu.memory_space<vmem>>, vector<8x8x32xf32>
    %159 = vector.shape_cast %158 : vector<8x8x32xf32> to vector<64x32xf32>
    %c2_82 = arith.constant 2 : index
    %c2_83 = arith.constant 2 : index
    %c0_84 = arith.constant 0 : index
    %160 = vector.load %arg17[%c2_82, %c2_83, %c0_84] : memref<10x10x32xf32, #tpu.memory_space<vmem>>, vector<8x8x32xf32>
    %161 = vector.shape_cast %160 : vector<8x8x32xf32> to vector<64x32xf32>
    %162 = tpu.concatenate %145, %147, %149, %151, %153, %155, %157, %159, %161 in 1 : vector<64x32xf32>, vector<64x32xf32>, vector<64x32xf32>, vector<64x32xf32>, vector<64x32xf32>, vector<64x32xf32>, vector<64x32xf32>, vector<64x32xf32>, vector<64x32xf32> -> vector<64x288xf32>
    %163 = arith.truncf %162 : vector<64x288xf32> to vector<64x288xbf16>
    %c0_85 = arith.constant 0 : index
    %c0_86 = arith.constant 0 : index
    %164 = vector.load %arg13[%c0_85, %c0_86] : memref<288x16xbf16, #tpu.memory_space<vmem>>, vector<288x16xbf16>
    %cst_87 = arith.constant dense<0.000000e+00> : vector<64x16xf32>
    %165 = tpu.matmul %163, %164, %cst_87 {dimension_numbers = #tpu.dot_dimension_numbers<[1], [0], [0], [1], [0, 0, 1, 1], [], []>} : vector<64x288xbf16>, vector<288x16xbf16>, vector<64x16xf32> -> vector<64x16xf32>
    %c0_88 = arith.constant 0 : index
    %c0_89 = arith.constant 0 : index
    %166 = vector.load %arg14[%c0_88, %c0_89] : memref<1x16xf32, #tpu.memory_space<vmem>>, vector<1x16xf32>
    %167 = vector.broadcast %166 : vector<1x16xf32> to vector<64x16xf32>
    %168 = arith.mulf %165, %167 : vector<64x16xf32>
    %c0_90 = arith.constant 0 : index
    %c0_91 = arith.constant 0 : index
    %169 = vector.load %arg15[%c0_90, %c0_91] : memref<1x16xf32, #tpu.memory_space<vmem>>, vector<1x16xf32>
    %170 = vector.broadcast %169 : vector<1x16xf32> to vector<64x16xf32>
    %171 = arith.addf %168, %170 : vector<64x16xf32>
    %cst_92 = arith.constant 5.000000e-01 : f32
    %172 = vector.broadcast %cst_92 : f32 to vector<64x16xf32>
    %173 = arith.mulf %172, %171 : vector<64x16xf32>
    %cst_93 = arith.constant 0.707106769 : f32
    %174 = vector.broadcast %cst_93 : f32 to vector<64x16xf32>
    %175 = arith.mulf %171, %174 : vector<64x16xf32>
    %176 = math.absf %175 : vector<64x16xf32>
    %cst_94 = arith.constant 0.327591091 : f32
    %177 = vector.broadcast %cst_94 : f32 to vector<64x16xf32>
    %178 = arith.mulf %177, %176 : vector<64x16xf32>
    %cst_95 = arith.constant 1.000000e+00 : f32
    %179 = vector.broadcast %cst_95 : f32 to vector<64x16xf32>
    %180 = arith.addf %179, %178 : vector<64x16xf32>
    %cst_96 = arith.constant 1.000000e+00 : f32
    %181 = vector.broadcast %cst_96 : f32 to vector<64x16xf32>
    %182 = arith.divf %181, %180 : vector<64x16xf32>
    %cst_97 = arith.constant 1.06140542 : f32
    %183 = vector.broadcast %cst_97 : f32 to vector<64x16xf32>
    %184 = arith.mulf %183, %182 : vector<64x16xf32>
    %cst_98 = arith.constant -1.45315206 : f32
    %185 = vector.broadcast %cst_98 : f32 to vector<64x16xf32>
    %186 = arith.addf %184, %185 : vector<64x16xf32>
    %187 = arith.mulf %186, %182 : vector<64x16xf32>
    %cst_99 = arith.constant 1.42141378 : f32
    %188 = vector.broadcast %cst_99 : f32 to vector<64x16xf32>
    %189 = arith.addf %187, %188 : vector<64x16xf32>
    %190 = arith.mulf %189, %182 : vector<64x16xf32>
    %cst_100 = arith.constant -0.284496725 : f32
    %191 = vector.broadcast %cst_100 : f32 to vector<64x16xf32>
    %192 = arith.addf %190, %191 : vector<64x16xf32>
    %193 = arith.mulf %192, %182 : vector<64x16xf32>
    %cst_101 = arith.constant 0.254829586 : f32
    %194 = vector.broadcast %cst_101 : f32 to vector<64x16xf32>
    %195 = arith.addf %193, %194 : vector<64x16xf32>
    %196 = arith.mulf %195, %182 : vector<64x16xf32>
    %cst_102 = arith.constant 0.000000e+00 : f32
    %197 = vector.broadcast %cst_102 : f32 to vector<64x16xf32>
    %198 = arith.subf %197, %176 : vector<64x16xf32>
    %199 = arith.mulf %198, %176 : vector<64x16xf32>
    %200 = math.exp %199 : vector<64x16xf32>
    %201 = arith.mulf %196, %200 : vector<64x16xf32>
    %cst_103 = arith.constant 1.000000e+00 : f32
    %202 = vector.broadcast %cst_103 : f32 to vector<64x16xf32>
    %203 = arith.subf %202, %201 : vector<64x16xf32>
    %cst_104 = arith.constant 0.000000e+00 : f32
    %204 = vector.broadcast %cst_104 : f32 to vector<64x16xf32>
    %205 = arith.cmpf oge, %175, %204 : vector<64x16xf32>
    %cst_105 = arith.constant 0.000000e+00 : f32
    %206 = vector.broadcast %cst_105 : f32 to vector<64x16xf32>
    %207 = arith.subf %206, %203 : vector<64x16xf32>
    %208 = arith.select %205, %203, %207 : vector<64x16xi1>, vector<64x16xf32>
    %cst_106 = arith.constant 1.000000e+00 : f32
    %209 = vector.broadcast %cst_106 : f32 to vector<64x16xf32>
    %210 = arith.addf %209, %208 : vector<64x16xf32>
    %211 = arith.mulf %173, %210 : vector<64x16xf32>
    %212 = vector.shape_cast %211 : vector<64x16xf32> to vector<4x2x4x2x16xf32>
    %213 = vector.extract_strided_slice %212 {offsets = [0, 0, 0, 0, 0], sizes = [4, 1, 4, 1, 16], strides = [1, 1, 1, 1, 1]} : vector<4x2x4x2x16xf32> to vector<4x1x4x1x16xf32>
    %214 = vector.shape_cast %213 : vector<4x1x4x1x16xf32> to vector<4x4x16xf32>
    %215 = vector.extract_strided_slice %212 {offsets = [0, 0, 0, 1, 0], sizes = [4, 1, 4, 1, 16], strides = [1, 1, 1, 1, 1]} : vector<4x2x4x2x16xf32> to vector<4x1x4x1x16xf32>
    %216 = vector.shape_cast %215 : vector<4x1x4x1x16xf32> to vector<4x4x16xf32>
    %217 = arith.maximumf %214, %216 : vector<4x4x16xf32>
    %218 = vector.extract_strided_slice %212 {offsets = [0, 1, 0, 0, 0], sizes = [4, 1, 4, 1, 16], strides = [1, 1, 1, 1, 1]} : vector<4x2x4x2x16xf32> to vector<4x1x4x1x16xf32>
    %219 = vector.shape_cast %218 : vector<4x1x4x1x16xf32> to vector<4x4x16xf32>
    %220 = vector.extract_strided_slice %212 {offsets = [0, 1, 0, 1, 0], sizes = [4, 1, 4, 1, 16], strides = [1, 1, 1, 1, 1]} : vector<4x2x4x2x16xf32> to vector<4x1x4x1x16xf32>
    %221 = vector.shape_cast %220 : vector<4x1x4x1x16xf32> to vector<4x4x16xf32>
    %222 = arith.maximumf %219, %221 : vector<4x4x16xf32>
    %223 = arith.maximumf %217, %222 : vector<4x4x16xf32>
    %c0_107 = arith.constant 0 : index
    %c0_108 = arith.constant 0 : index
    %c0_109 = arith.constant 0 : index
    %c0_110 = arith.constant 0 : index
    %224 = vector.load %arg16[%c0_107, %c0_108, %c0_109, %c0_110] : memref<1x4x4x16xf32, #tpu.memory_space<vmem>>, vector<1x4x4x16xf32>
    %225 = vector.shape_cast %224 : vector<1x4x4x16xf32> to vector<4x4x16xf32>
    %226 = vector.shape_cast %223 : vector<4x4x16xf32> to vector<1x4x4x16xf32>
    tpu.vector_store %arg16[%c0_107, %c0_108, %c0_109, %c0_110], %226 {strides = array<i32>} : memref<1x4x4x16xf32, #tpu.memory_space<vmem>>, vector<1x4x4x16xf32>,
    return
  }
  func.func @transform_0(%arg0: i32) -> (i32, i32, i32) {
    %c0_i32 = arith.constant 0 : i32
    %c0_i32_0 = arith.constant 0 : i32
    %c0_i32_1 = arith.constant 0 : i32
    return %arg0, %c0_i32, %c0_i32_0 : i32, i32, i32
  }
  func.func @transform_1(%arg0: i32) -> (i32, i32, i32) {
    %c0_i32 = arith.constant 0 : i32
    %c0_i32_0 = arith.constant 0 : i32
    %c0_i32_1 = arith.constant 0 : i32
    return %arg0, %c0_i32, %c0_i32_0 : i32, i32, i32
  }
  func.func @transform_2(%arg0: i32) -> (i32, i32) {
    %c0_i32 = arith.constant 0 : i32
    %c0_i32_0 = arith.constant 0 : i32
    %c0_i32_1 = arith.constant 0 : i32
    return %c0_i32, %c0_i32_0 : i32, i32
  }
  func.func @transform_3(%arg0: i32) -> (i32, i32) {
    %c0_i32 = arith.constant 0 : i32
    %c0_i32_0 = arith.constant 0 : i32
    %c0_i32_1 = arith.constant 0 : i32
    return %c0_i32, %c0_i32_0 : i32, i32
  }
  func.func @transform_4(%arg0: i32) -> (i32, i32) {
    %c0_i32 = arith.constant 0 : i32
    %c0_i32_0 = arith.constant 0 : i32
    %c0_i32_1 = arith.constant 0 : i32
    return %c0_i32, %c0_i32_0 : i32, i32
  }
  func.func @transform_5(%arg0: i32) -> (i32, i32) {
    %c0_i32 = arith.constant 0 : i32
    %c0_i32_0 = arith.constant 0 : i32
    %c0_i32_1 = arith.constant 0 : i32
    return %c0_i32, %c0_i32_0 : i32, i32
  }
  func.func @transform_6(%arg0: i32) -> (i32, i32) {
    %c0_i32 = arith.constant 0 : i32
    %c0_i32_0 = arith.constant 0 : i32
    %c0_i32_1 = arith.constant 0 : i32
    return %c0_i32, %c0_i32_0 : i32, i32
  }
  func.func @transform_7(%arg0: i32) -> (i32, i32) {
    %c0_i32 = arith.constant 0 : i32
    %c0_i32_0 = arith.constant 0 : i32
    %c0_i32_1 = arith.constant 0 : i32
    return %c0_i32, %c0_i32_0 : i32, i32
  }
  func.func @transform_8(%arg0: i32) -> (i32, i32) {
    %c0_i32 = arith.constant 0 : i32
    %c0_i32_0 = arith.constant 0 : i32
    %c0_i32_1 = arith.constant 0 : i32
    return %c0_i32, %c0_i32_0 : i32, i32
  }
  func.func @transform_9(%arg0: i32) -> (i32, i32) {
    %c0_i32 = arith.constant 0 : i32
    %c0_i32_0 = arith.constant 0 : i32
    %c0_i32_1 = arith.constant 0 : i32
    return %c0_i32, %c0_i32_0 : i32, i32
  }
  func.func @transform_10(%arg0: i32) -> (i32, i32) {
    %c0_i32 = arith.constant 0 : i32
    %c0_i32_0 = arith.constant 0 : i32
    %c0_i32_1 = arith.constant 0 : i32
    return %c0_i32, %c0_i32_0 : i32, i32
  }
  func.func @transform_11(%arg0: i32) -> (i32, i32) {
    %c0_i32 = arith.constant 0 : i32
    %c0_i32_0 = arith.constant 0 : i32
    %c0_i32_1 = arith.constant 0 : i32
    return %c0_i32, %c0_i32_0 : i32, i32
  }
  func.func @transform_12(%arg0: i32) -> (i32, i32) {
    %c0_i32 = arith.constant 0 : i32
    %c0_i32_0 = arith.constant 0 : i32
    %c0_i32_1 = arith.constant 0 : i32
    return %c0_i32, %c0_i32_0 : i32, i32
  }
  func.func @transform_13(%arg0: i32) -> (i32, i32) {
    %c0_i32 = arith.constant 0 : i32
    %c0_i32_0 = arith.constant 0 : i32
    %c0_i32_1 = arith.constant 0 : i32
    return %c0_i32, %c0_i32_0 : i32, i32
  }
  func.func @transform_14(%arg0: i32) -> (i32, i32) {
    %c0_i32 = arith.constant 0 : i32
    %c0_i32_0 = arith.constant 0 : i32
    %c0_i32_1 = arith.constant 0 : i32
    return %c0_i32, %c0_i32_0 : i32, i32
  }
  func.func @transform_15(%arg0: i32) -> (i32, i32, i32, i32) {
    %c0_i32 = arith.constant 0 : i32
    %c0_i32_0 = arith.constant 0 : i32
    %c0_i32_1 = arith.constant 0 : i32
    %c0_i32_2 = arith.constant 0 : i32
    return %arg0, %c0_i32, %c0_i32_0, %c0_i32_1 : i32, i32, i32, i32
  }
}

</mosaic_0001>

<llo_original>
// kernel: adapter_block_forward.1
$region0: #{adapter_block_forward.1}
  #allocation0 [shape = 'u32[]', space=smem, size = 0x4, offset = 0x4, fixed_abs, tag = 'smem constant byte address 0x4 - core index']
  #allocation1 [shape = 'u32[144,128]{1,0:T(1,128)}', space=vmem, size = 0x12000, scoped, tag = 'internal scratch']
  #allocation2 [shape = 'f32[10,10,32]{2,1,0:T(8,128)}', space=vmem, size = 0x14000, scoped, tag = 'scratch operand']
  %s0 = inlined_call_operand.vmem [shape: f32[2,64,32], index: 0, kind: input, shape index: {}]
  %s1 = inlined_call_operand.vmem [shape: f32[2,32,48], index: 1, kind: input, shape index: {}]
  %s2 = inlined_call_operand.vmem [shape: bf16[48,32], index: 2, kind: input, shape index: {}]
  %s3 = inlined_call_operand.vmem [shape: f32[1,32], index: 3, kind: input, shape index: {}]
  %s4 = inlined_call_operand.vmem [shape: bf16[32,32], index: 4, kind: input, shape index: {}]
  %s5 = inlined_call_operand.vmem [shape: f32[1,32], index: 5, kind: input, shape index: {}]
  %s6 = inlined_call_operand.vmem [shape: bf16[32,64], index: 6, kind: input, shape index: {}]
  %s7 = inlined_call_operand.vmem [shape: f32[1,64], index: 7, kind: input, shape index: {}]
  %s8 = inlined_call_operand.vmem [shape: bf16[32,32], index: 8, kind: input, shape index: {}]
  %s9 = inlined_call_operand.vmem [shape: f32[1,32], index: 9, kind: input, shape index: {}]
  %s10 = inlined_call_operand.vmem [shape: f32[1,32], index: 10, kind: input, shape index: {}]
  %s11 = inlined_call_operand.vmem [shape: f32[1,32], index: 11, kind: input, shape index: {}]
  %s12 = inlined_call_operand.vmem [shape: bf16[288,16], index: 12, kind: input, shape index: {}]
  %s13 = inlined_call_operand.vmem [shape: f32[1,16], index: 13, kind: input, shape index: {}]
  %s14 = inlined_call_operand.vmem [shape: f32[1,16], index: 14, kind: input, shape index: {}]
  %s15 = inlined_call_operand.hbm [shape: f32[2,4,4,16], index: 15, kind: output, shape index: {}]
  %s16 = sld [smem:[#allocation0]]
  $region93: #{adapter_block_forward.1} parent=0
    _
  %s18 = ssub.s32 1, %s16
  %s19 = scalar_select 0, %s18, %s16
  $region1: #{adapter_block_forward.1} parent=0
    #allocation3 [shape = 'u8[16384]{0}', space=vmem, size = 0x4000, scoped, tag = 'output window, operand 0']
    #allocation4 [shape = 's32[2]{0}', space=sflag, size = 0x8, scoped, tag = 'scoped memory for adapter_block_forward.1']
    %20 = vsyncpa [#allocation4], 0
    %s21 = scalar_lea.sflag [#allocation4], 1
    %22 = vsyncpa %s21, 0
    loop: start=0, step=1, limit=4
    $region2: #{adapter_block_forward.1} parent=1 // loop_pre_header
      _
    $region3: #{adapter_block_forward.1} parent=1 // loop_header
      %s24 = sphi 0, %s28
      %p25 = scmp.ge.s32.totalorder %s24, 4
      %s34 = sphi 0, %s36
      %s37 = sphi 0, %s34
      %s38 = sphi 0, %s37
      %s54 = sphi 0, %s38
      %s60 = sphi 0, %s62
      %s63 = sphi 0, %s60
      %s64 = sphi 0, %s63
      %s80 = sphi 0, %s64
      %s84 = sphi 0, %s84
      %s86 = sphi 0, %s84
      %s87 = sphi 0, %s86
      %s101 = sphi 0, %s87
      %s105 = sphi 0, %s105
      %s107 = sphi 0, %s105
      %s108 = sphi 0, %s107
      %s122 = sphi 0, %s108
      %s126 = sphi 0, %s126
      %s128 = sphi 0, %s126
      %s129 = sphi 0, %s128
      %s143 = sphi 0, %s129
      %s147 = sphi 0, %s147
      %s149 = sphi 0, %s147
      %s150 = sphi 0, %s149
      %s164 = sphi 0, %s150
      %s168 = sphi 0, %s168
      %s170 = sphi 0, %s168
      %s171 = sphi 0, %s170
      %s185 = sphi 0, %s171
      %s189 = sphi 0, %s189
      %s191 = sphi 0, %s189
      %s192 = sphi 0, %s191
      %s206 = sphi 0, %s192
      %s210 = sphi 0, %s210
      %s212 = sphi 0, %s210
      %s213 = sphi 0, %s212
      %s227 = sphi 0, %s213
      %s231 = sphi 0, %s231
      %s233 = sphi 0, %s231
      %s234 = sphi 0, %s233
      %s248 = sphi 0, %s234
      %s252 = sphi 0, %s252
      %s254 = sphi 0, %s252
      %s255 = sphi 0, %s254
      %s269 = sphi 0, %s255
      %s273 = sphi 0, %s273
      %s275 = sphi 0, %s273
      %s276 = sphi 0, %s275
      %s290 = sphi 0, %s276
      %s294 = sphi 0, %s294
      %s296 = sphi 0, %s294
      %s297 = sphi 0, %s296
      %s311 = sphi 0, %s297
      %s315 = sphi 0, %s315
      %s317 = sphi 0, %s315
      %s318 = sphi 0, %s317
      %s332 = sphi 0, %s318
      %s336 = sphi 0, %s336
      %s338 = sphi 0, %s336
      %s339 = sphi 0, %s338
      %s353 = sphi 0, %s339
      %s359 = sphi 0, %s361
      %s362 = sphi 0, %s359
      %s363 = sphi 0, %s362
      %s379 = sphi 0, %s363
    $region4: #{adapter_block_forward.1} parent=1 // loop_header_branch
      %27 = sbr.rel (%p25) target = $region8
    $region5: #{adapter_block_forward.1} parent=1 // loop_body
      %s29 = ssub.s32 %s24, 1
      %s30 = ssub.s32 %s24, 2
      %s31 = sadd.s32 %s24, 1
      %s32 = ssub.s32 %s24, %s31
      %p33 = scmp.eq.s32.totalorder %s32, 0
      %s35 = sadd.s32 %s34, 1
      %s36 = scalar_select %p33, %s34, %s35
      %p39 = pneg %p33
      %p40 = scmp.eq.s32.totalorder %s24, 1
      %p41 = por %p39, %p40
      %p42 = scmp.ne.s32.totalorder %s34, %s37
      %p43 = scmp.eq.s32.totalorder %s24, 0
      %p44 = por %p42, %p43
      %p45 = scmp.ne.s32.totalorder %s34, %s37
      %p46 = scmp.eq.s32.totalorder %s29, 1
      %p47 = por %p45, %p46
      %p48 = scmp.ne.s32.totalorder %s37, %s38
      %p49 = scmp.eq.s32.totalorder %s29, 0
      %p50 = por %p48, %p49
      %p51 = scmp.ne.s32.totalorder %s37, %s38
      %p52 = scmp.eq.s32.totalorder %s30, 1
      %p53 = por %p51, %p52
      %p55 = scmp.ne.s32.totalorder %s38, %s54
      %p56 = scmp.eq.s32.totalorder %s30, 0
      %p57 = por %p55, %p56
      %s58 = ssub.s32 %s24, %s31
      %p59 = scmp.eq.s32.totalorder %s58, 0
      %s61 = sadd.s32 %s60, 1
      %s62 = scalar_select %p59, %s60, %s61
      %p65 = pneg %p59
      %p66 = scmp.eq.s32.totalorder %s24, 1
      %p67 = por %p65, %p66
      %p68 = scmp.ne.s32.totalorder %s60, %s63
      %p69 = scmp.eq.s32.totalorder %s24, 0
      %p70 = por %p68, %p69
      %p71 = scmp.ne.s32.totalorder %s60, %s63
      %p72 = scmp.eq.s32.totalorder %s29, 1
      %p73 = por %p71, %p72
      %p74 = scmp.ne.s32.totalorder %s63, %s64
      %p75 = scmp.eq.s32.totalorder %s29, 0
      %p76 = por %p74, %p75
      %p77 = scmp.ne.s32.totalorder %s63, %s64
      %p78 = scmp.eq.s32.totalorder %s30, 1
      %p79 = por %p77, %p78
      %p81 = scmp.ne.s32.totalorder %s64, %s80
      %p82 = scmp.eq.s32.totalorder %s30, 0
      %p83 = por %p81, %p82
      %s85 = sadd.s32 %s84, 1
      %p88 = scmp.eq.s32.totalorder %s24, 1
      %p89 = scmp.ne.s32.totalorder %s84, %s86
      %p90 = scmp.eq.s32.totalorder %s24, 0
      %p91 = por %p89, %p90
      %p92 = scmp.ne.s32.totalorder %s84, %s86
      %p93 = scmp.eq.s32.totalorder %s29, 1
      %p94 = por %p92, %p93
      %p95 = scmp.ne.s32.totalorder %s86, %s87
      %p96 = scmp.eq.s32.totalorder %s29, 0
      %p97 = por %p95, %p96
      %p98 = scmp.ne.s32.totalorder %s86, %s87
      %p99 = scmp.eq.s32.totalorder %s30, 1
      %p100 = por %p98, %p99
      %p102 = scmp.ne.s32.totalorder %s87, %s101
      %p103 = scmp.eq.s32.totalorder %s30, 0
      %p104 = por %p102, %p103
      %s106 = sadd.s32 %s105, 1
      %p109 = scmp.eq.s32.totalorder %s24, 1
      %p110 = scmp.ne.s32.totalorder %s105, %s107
      %p111 = scmp.eq.s32.totalorder %s24, 0
      %p112 = por %p110, %p111
      %p113 = scmp.ne.s32.totalorder %s105, %s107
      %p114 = scmp.eq.s32.totalorder %s29, 1
      %p115 = por %p113, %p114
      %p116 = scmp.ne.s32.totalorder %s107, %s108
      %p117 = scmp.eq.s32.totalorder %s29, 0
      %p118 = por %p116, %p117
      %p119 = scmp.ne.s32.totalorder %s107, %s108
      %p120 = scmp.eq.s32.totalorder %s30, 1
      %p121 = por %p119, %p120
      %p123 = scmp.ne.s32.totalorder %s108, %s122
      %p124 = scmp.eq.s32.totalorder %s30, 0
      %p125 = por %p123, %p124
      %s127 = sadd.s32 %s126, 1
      %p130 = scmp.eq.s32.totalorder %s24, 1
      %p131 = scmp.ne.s32.totalorder %s126, %s128
      %p132 = scmp.eq.s32.totalorder %s24, 0
      %p133 = por %p131, %p132
      %p134 = scmp.ne.s32.totalorder %s126, %s128
      %p135 = scmp.eq.s32.totalorder %s29, 1
      %p136 = por %p134, %p135
      %p137 = scmp.ne.s32.totalorder %s128, %s129
      %p138 = scmp.eq.s32.totalorder %s29, 0
      %p139 = por %p137, %p138
      %p140 = scmp.ne.s32.totalorder %s128, %s129
      %p141 = scmp.eq.s32.totalorder %s30, 1
      %p142 = por %p140, %p141
      %p144 = scmp.ne.s32.totalorder %s129, %s143
      %p145 = scmp.eq.s32.totalorder %s30, 0
      %p146 = por %p144, %p145
      %s148 = sadd.s32 %s147, 1
      %p151 = scmp.eq.s32.totalorder %s24, 1
      %p152 = scmp.ne.s32.totalorder %s147, %s149
      %p153 = scmp.eq.s32.totalorder %s24, 0
      %p154 = por %p152, %p153
      %p155 = scmp.ne.s32.totalorder %s147, %s149
      %p156 = scmp.eq.s32.totalorder %s29, 1
      %p157 = por %p155, %p156
      %p158 = scmp.ne.s32.totalorder %s149, %s150
      %p159 = scmp.eq.s32.totalorder %s29, 0
      %p160 = por %p158, %p159
      %p161 = scmp.ne.s32.totalorder %s149, %s150
      %p162 = scmp.eq.s32.totalorder %s30, 1
      %p163 = por %p161, %p162
      %p165 = scmp.ne.s32.totalorder %s150, %s164
      %p166 = scmp.eq.s32.totalorder %s30, 0
      %p167 = por %p165, %p166
      %s169 = sadd.s32 %s168, 1
      %p172 = scmp.eq.s32.totalorder %s24, 1
      %p173 = scmp.ne.s32.totalorder %s168, %s170
      %p174 = scmp.eq.s32.totalorder %s24, 0
      %p175 = por %p173, %p174
      %p176 = scmp.ne.s32.totalorder %s168, %s170
      %p177 = scmp.eq.s32.totalorder %s29, 1
      %p178 = por %p176, %p177
      %p179 = scmp.ne.s32.totalorder %s170, %s171
      %p180 = scmp.eq.s32.totalorder %s29, 0
      %p181 = por %p179, %p180
      %p182 = scmp.ne.s32.totalorder %s170, %s171
      %p183 = scmp.eq.s32.totalorder %s30, 1
      %p184 = por %p182, %p183
      %p186 = scmp.ne.s32.totalorder %s171, %s185
      %p187 = scmp.eq.s32.totalorder %s30, 0
      %p188 = por %p186, %p187
      %s190 = sadd.s32 %s189, 1
      %p193 = scmp.eq.s32.totalorder %s24, 1
      %p194 = scmp.ne.s32.totalorder %s189, %s191
      %p195 = scmp.eq.s32.totalorder %s24, 0
      %p196 = por %p194, %p195
      %p197 = scmp.ne.s32.totalorder %s189, %s191
      %p198 = scmp.eq.s32.totalorder %s29, 1
      %p199 = por %p197, %p198
      %p200 = scmp.ne.s32.totalorder %s191, %s192
      %p201 = scmp.eq.s32.totalorder %s29, 0
      %p202 = por %p200, %p201
      %p203 = scmp.ne.s32.totalorder %s191, %s192
      %p204 = scmp.eq.s32.totalorder %s30, 1
      %p205 = por %p203, %p204
      %p207 = scmp.ne.s32.totalorder %s192, %s206
      %p208 = scmp.eq.s32.totalorder %s30, 0
      %p209 = por %p207, %p208
      %s211 = sadd.s32 %s210, 1
      %p214 = scmp.eq.s32.totalorder %s24, 1
      %p215 = scmp.ne.s32.totalorder %s210, %s212
      %p216 = scmp.eq.s32.totalorder %s24, 0
      %p217 = por %p215, %p216
      %p218 = scmp.ne.s32.totalorder %s210, %s212
      %p219 = scmp.eq.s32.totalorder %s29, 1
      %p220 = por %p218, %p219
      %p221 = scmp.ne.s32.totalorder %s212, %s213
      %p222 = scmp.eq.s32.totalorder %s29, 0
      %p223 = por %p221, %p222
      %p224 = scmp.ne.s32.totalorder %s212, %s213
      %p225 = scmp.eq.s32.totalorder %s30, 1
      %p226 = por %p224, %p225
      %p228 = scmp.ne.s32.totalorder %s213, %s227
      %p229 = scmp.eq.s32.totalorder %s30, 0
      %p230 = por %p228, %p229
      %s232 = sadd.s32 %s231, 1
      %p235 = scmp.eq.s32.totalorder %s24, 1
      %p236 = scmp.ne.s32.totalorder %s231, %s233
      %p237 = scmp.eq.s32.totalorder %s24, 0
      %p238 = por %p236, %p237
      %p239 = scmp.ne.s32.totalorder %s231, %s233
      %p240 = scmp.eq.s32.totalorder %s29, 1
      %p241 = por %p239, %p240
      %p242 = scmp.ne.s32.totalorder %s233, %s234
      %p243 = scmp.eq.s32.totalorder %s29, 0
      %p244 = por %p242, %p243
      %p245 = scmp.ne.s32.totalorder %s233, %s234
      %p246 = scmp.eq.s32.totalorder %s30, 1
      %p247 = por %p245, %p246
      %p249 = scmp.ne.s32.totalorder %s234, %s248
      %p250 = scmp.eq.s32.totalorder %s30, 0
      %p251 = por %p249, %p250
      %s253 = sadd.s32 %s252, 1
      %p256 = scmp.eq.s32.totalorder %s24, 1
      %p257 = scmp.ne.s32.totalorder %s252, %s254
      %p258 = scmp.eq.s32.totalorder %s24, 0
      %p259 = por %p257, %p258
      %p260 = scmp.ne.s32.totalorder %s252, %s254
      %p261 = scmp.eq.s32.totalorder %s29, 1
      %p262 = por %p260, %p261
      %p263 = scmp.ne.s32.totalorder %s254, %s255
      %p264 = scmp.eq.s32.totalorder %s29, 0
      %p265 = por %p263, %p264
      %p266 = scmp.ne.s32.totalorder %s254, %s255
      %p267 = scmp.eq.s32.totalorder %s30, 1
      %p268 = por %p266, %p267
      %p270 = scmp.ne.s32.totalorder %s255, %s269
      %p271 = scmp.eq.s32.totalorder %s30, 0
      %p272 = por %p270, %p271
      %s274 = sadd.s32 %s273, 1
      %p277 = scmp.eq.s32.totalorder %s24, 1
      %p278 = scmp.ne.s32.totalorder %s273, %s275
      %p279 = scmp.eq.s32.totalorder %s24, 0
      %p280 = por %p278, %p279
      %p281 = scmp.ne.s32.totalorder %s273, %s275
      %p282 = scmp.eq.s32.totalorder %s29, 1
      %p283 = por %p281, %p282
      %p284 = scmp.ne.s32.totalorder %s275, %s276
      %p285 = scmp.eq.s32.totalorder %s29, 0
      %p286 = por %p284, %p285
      %p287 = scmp.ne.s32.totalorder %s275, %s276
      %p288 = scmp.eq.s32.totalorder %s30, 1
      %p289 = por %p287, %p288
      %p291 = scmp.ne.s32.totalorder %s276, %s290
      %p292 = scmp.eq.s32.totalorder %s30, 0
      %p293 = por %p291, %p292
      %s295 = sadd.s32 %s294, 1
      %p298 = scmp.eq.s32.totalorder %s24, 1
      %p299 = scmp.ne.s32.totalorder %s294, %s296
      %p300 = scmp.eq.s32.totalorder %s24, 0
      %p301 = por %p299, %p300
      %p302 = scmp.ne.s32.totalorder %s294, %s296
      %p303 = scmp.eq.s32.totalorder %s29, 1
      %p304 = por %p302, %p303
      %p305 = scmp.ne.s32.totalorder %s296, %s297
      %p306 = scmp.eq.s32.totalorder %s29, 0
      %p307 = por %p305, %p306
      %p308 = scmp.ne.s32.totalorder %s296, %s297
      %p309 = scmp.eq.s32.totalorder %s30, 1
      %p310 = por %p308, %p309
      %p312 = scmp.ne.s32.totalorder %s297, %s311
      %p313 = scmp.eq.s32.totalorder %s30, 0
      %p314 = por %p312, %p313
      %s316 = sadd.s32 %s315, 1
      %p319 = scmp.eq.s32.totalorder %s24, 1
      %p320 = scmp.ne.s32.totalorder %s315, %s317
      %p321 = scmp.eq.s32.totalorder %s24, 0
      %p322 = por %p320, %p321
      %p323 = scmp.ne.s32.totalorder %s315, %s317
      %p324 = scmp.eq.s32.totalorder %s29, 1
      %p325 = por %p323, %p324
      %p326 = scmp.ne.s32.totalorder %s317, %s318
      %p327 = scmp.eq.s32.totalorder %s29, 0
      %p328 = por %p326, %p327
      %p329 = scmp.ne.s32.totalorder %s317, %s318
      %p330 = scmp.eq.s32.totalorder %s30, 1
      %p331 = por %p329, %p330
      %p333 = scmp.ne.s32.totalorder %s318, %s332
      %p334 = scmp.eq.s32.totalorder %s30, 0
      %p335 = por %p333, %p334
      %s337 = sadd.s32 %s336, 1
      %p340 = scmp.eq.s32.totalorder %s24, 1
      %p341 = scmp.ne.s32.totalorder %s336, %s338
      %p342 = scmp.eq.s32.totalorder %s24, 0
      %p343 = por %p341, %p342
      %p344 = scmp.ne.s32.totalorder %s336, %s338
      %p345 = scmp.eq.s32.totalorder %s29, 1
      %p346 = por %p344, %p345
      %p347 = scmp.ne.s32.totalorder %s338, %s339
      %p348 = scmp.eq.s32.totalorder %s29, 0
      %p349 = por %p347, %p348
      %p350 = scmp.ne.s32.totalorder %s338, %s339
      %p351 = scmp.eq.s32.totalorder %s30, 1
      %p352 = por %p350, %p351
      %p354 = scmp.ne.s32.totalorder %s339, %s353
      %p355 = scmp.eq.s32.totalorder %s30, 0
      %p356 = por %p354, %p355
      %s357 = ssub.s32 %s24, %s31
      %p358 = scmp.eq.s32.totalorder %s357, 0
      %s360 = sadd.s32 %s359, 1
      %s361 = scalar_select %p358, %s359, %s360
      %p364 = pneg %p358
      %p365 = scmp.eq.s32.totalorder %s24, 1
      %p366 = por %p364, %p365
      %p367 = scmp.ne.s32.totalorder %s359, %s362
      %p368 = scmp.eq.s32.totalorder %s24, 0
      %p369 = por %p367, %p368
      %p370 = scmp.ne.s32.totalorder %s359, %s362
      %p371 = scmp.eq.s32.totalorder %s29, 1
      %p372 = por %p370, %p371
      %p373 = scmp.ne.s32.totalorder %s362, %s363
      %p374 = scmp.eq.s32.totalorder %s29, 0
      %p375 = por %p373, %p374
      %p376 = scmp.ne.s32.totalorder %s362, %s363
      %p377 = scmp.eq.s32.totalorder %s30, 1
      %p378 = por %p376, %p377
      %p380 = scmp.ne.s32.totalorder %s363, %s379
      %p381 = scmp.eq.s32.totalorder %s30, 0
      %p382 = por %p380, %p381
      %p383 = scmp.le.s32.totalorder 1, %s24
      %p384 = scmp.lt.s32.totalorder %s24, 3
      %p385 = pnand %p383, %p384
      %p386 = pneg %p385
      // Predicated region
      $region9: #{adapter_block_forward.1} parent=5 // pred_check
        _
      $region10: #{adapter_block_forward.1} parent=5 // pred_check_branch
        %388 = sbr.rel (%p385) target = $region12
      $region11: #{adapter_block_forward.1} parent=5 // pred_region
        %s389 = ssub.s32 %s24, 1
        // Predicated region
        $region13: #{adapter_block_forward.1} parent=11 // pred_check
          %p390 = pneg %p97
        $region14: #{adapter_block_forward.1} parent=11 // pred_check_branch
          %392 = sbr.rel (%p390) target = $region16
        $region15: #{adapter_block_forward.1} parent=11 // pred_region
          _
        $region16: #{adapter_block_forward.1} parent=11 // pred_fallthru
          _
        // Predicated region
        $region17: #{adapter_block_forward.1} parent=11 // pred_check
          %p393 = pneg %p118
        $region18: #{adapter_block_forward.1} parent=11 // pred_check_branch
          %395 = sbr.rel (%p393) target = $region20
        $region19: #{adapter_block_forward.1} parent=11 // pred_region
          _
        $region20: #{adapter_block_forward.1} parent=11 // pred_fallthru
          _
        // Predicated region
        $region21: #{adapter_block_forward.1} parent=11 // pred_check
          %p396 = pneg %p139
        $region22: #{adapter_block_forward.1} parent=11 // pred_check_branch
          %398 = sbr.rel (%p396) target = $region24
        $region23: #{adapter_block_forward.1} parent=11 // pred_region
          _
        $region24: #{adapter_block_forward.1} parent=11 // pred_fallthru
          _
        // Predicated region
        $region25: #{adapter_block_forward.1} parent=11 // pred_check
          %p399 = pneg %p160
        $region26: #{adapter_block_forward.1} parent=11 // pred_check_branch
          %401 = sbr.rel (%p399) target = $region28
        $region27: #{adapter_block_forward.1} parent=11 // pred_region
          _
        $region28: #{adapter_block_forward.1} parent=11 // pred_fallthru
          _
        // Predicated region
        $region29: #{adapter_block_forward.1} parent=11 // pred_check
          %p402 = pneg %p181
        $region30: #{adapter_block_forward.1} parent=11 // pred_check_branch
          %404 = sbr.rel (%p402) target = $region32
        $region31: #{adapter_block_forward.1} parent=11 // pred_region
          _
        $region32: #{adapter_block_forward.1} parent=11 // pred_fallthru
          _
        // Predicated region
        $region33: #{adapter_block_forward.1} parent=11 // pred_check
          %p405 = pneg %p202
        $region34: #{adapter_block_forward.1} parent=11 // pred_check_branch
          %407 = sbr.rel (%p405) target = $region36
        $region35: #{adapter_block_forward.1} parent=11 // pred_region
          _
        $region36: #{adapter_block_forward.1} parent=11 // pred_fallthru
          _
        // Predicated region
        $region37: #{adapter_block_forward.1} parent=11 // pred_check
          %p408 = pneg %p223
        $region38: #{adapter_block_forward.1} parent=11 // pred_check_branch
          %410 = sbr.rel (%p408) target = $region40
        $region39: #{adapter_block_forward.1} parent=11 // pred_region
          _
        $region40: #{adapter_block_forward.1} parent=11 // pred_fallthru
          _
        // Predicated region
        $region41: #{adapter_block_forward.1} parent=11 // pred_check
          %p411 = pneg %p244
        $region42: #{adapter_block_forward.1} parent=11 // pred_check_branch
          %413 = sbr.rel (%p411) target = $region44
        $region43: #{adapter_block_forward.1} parent=11 // pred_region
          _
        $region44: #{adapter_block_forward.1} parent=11 // pred_fallthru
          _
        // Predicated region
        $region45: #{adapter_block_forward.1} parent=11 // pred_check
          %p414 = pneg %p265
        $region46: #{adapter_block_forward.1} parent=11 // pred_check_branch
          %416 = sbr.rel (%p414) target = $region48
        $region47: #{adapter_block_forward.1} parent=11 // pred_region
          _
        $region48: #{adapter_block_forward.1} parent=11 // pred_fallthru
          _
        // Predicated region
        $region49: #{adapter_block_forward.1} parent=11 // pred_check
          %p417 = pneg %p286
        $region50: #{adapter_block_forward.1} parent=11 // pred_check_branch
          %419 = sbr.rel (%p417) target = $region52
        $region51: #{adapter_block_forward.1} parent=11 // pred_region
          _
        $region52: #{adapter_block_forward.1} parent=11 // pred_fallthru
          _
        // Predicated region
        $region53: #{adapter_block_forward.1} parent=11 // pred_check
          %p420 = pneg %p307
        $region54: #{adapter_block_forward.1} parent=11 // pred_check_branch
          %422 = sbr.rel (%p420) target = $region56
        $region55: #{adapter_block_forward.1} parent=11 // pred_region
          _
        $region56: #{adapter_block_forward.1} parent=11 // pred_fallthru
          _
        // Predicated region
        $region57: #{adapter_block_forward.1} parent=11 // pred_check
          %p423 = pneg %p328
        $region58: #{adapter_block_forward.1} parent=11 // pred_check_branch
          %425 = sbr.rel (%p423) target = $region60
        $region59: #{adapter_block_forward.1} parent=11 // pred_region
          _
        $region60: #{adapter_block_forward.1} parent=11 // pred_fallthru
          _
        // Predicated region
        $region61: #{adapter_block_forward.1} parent=11 // pred_check
          %p426 = pneg %p349
        $region62: #{adapter_block_forward.1} parent=11 // pred_check_branch
          %428 = sbr.rel (%p426) target = $region64
        $region63: #{adapter_block_forward.1} parent=11 // pred_region
          _
        $region64: #{adapter_block_forward.1} parent=11 // pred_fallthru
          _
      $region12: #{adapter_block_forward.1} parent=5 // pred_fallthru
        _
      %p429 = scmp.lt.s32.totalorder %s24, 2
      // Predicated region
      $region65: #{adapter_block_forward.1} parent=5 // pred_check
        %p430 = pneg %p429
      $region66: #{adapter_block_forward.1} parent=5 // pred_check_branch
        %432 = sbr.rel (%p430) target = $region68
      $region67: #{adapter_block_forward.1} parent=5 // pred_region
        // Predicated region
        $region69: #{adapter_block_forward.1} parent=67 // pred_check
          %p433 = pneg %p44
        $region70: #{adapter_block_forward.1} parent=67 // pred_check_branch
          %435 = sbr.rel (%p433) target = $region72
        $region71: #{adapter_block_forward.1} parent=67 // pred_region
          %p436 = scmp.lt.s32.totalorder %s24, 1
          %s437 = scalar_select %p436, %s24, 1
          %s438 = smul.addr %s437, 8
          %s439 = smul.addr %s438, 8
          %s440 = scalar_lea.vmem %s0, %s439
        $region72: #{adapter_block_forward.1} parent=67 // pred_fallthru
          _
        // Predicated region
        $region73: #{adapter_block_forward.1} parent=67 // pred_check
          %p441 = pneg %p70
        $region74: #{adapter_block_forward.1} parent=67 // pred_check_branch
          %443 = sbr.rel (%p441) target = $region76
        $region75: #{adapter_block_forward.1} parent=67 // pred_region
          %p444 = scmp.lt.s32.totalorder %s24, 1
          %s445 = scalar_select %p444, %s24, 1
          %s446 = smul.addr %s445, 4
          %s447 = smul.addr %s446, 8
          %s448 = scalar_lea.vmem %s1, %s447
        $region76: #{adapter_block_forward.1} parent=67 // pred_fallthru
          _
      $region68: #{adapter_block_forward.1} parent=5 // pred_fallthru
        _
      %p449 = scmp.le.s32.totalorder 1, %s24
      %p450 = scmp.lt.s32.totalorder %s24, 3
      %p451 = pnand %p449, %p450
      %p452 = pneg %p451
      // Predicated region
      $region77: #{adapter_block_forward.1} parent=5 // pred_check
        _
      $region78: #{adapter_block_forward.1} parent=5 // pred_check_branch
        %454 = sbr.rel (%p451) target = $region80
      $region79: #{adapter_block_forward.1} parent=5 // pred_region
        %s455 = ssub.s32 %s24, 1
        %p456 = scmp.lt.s32.totalorder %s29, 1
        %s457 = scalar_select %p456, %s29, 1
        %s458 = smul.addr %s457, 8
        %s459 = smul.addr %s458, 8
        %s460 = scalar_lea.vmem %s0, %s459
        %p461 = pneg %p50
        %p462 = pneg %p47
        %p463 = scmp.lt.s32.totalorder %s29, 1
        %s464 = scalar_select %p463, %s29, 1
        %s465 = smul.addr %s464, 4
        %s466 = smul.addr %s465, 8
        %s467 = scalar_lea.vmem %s1, %s466
        %p468 = pneg %p76
        %p469 = pneg %p73
        %p470 = pneg %p97
        %p471 = pneg %p94
        %p472 = pneg %p118
        %p473 = pneg %p115
        %p474 = pneg %p139
        %p475 = pneg %p136
        %p476 = pneg %p160
        %p477 = pneg %p157
        %p478 = pneg %p181
        %p479 = pneg %p178
        %p480 = pneg %p202
        %p481 = pneg %p199
        %p482 = pneg %p223
        %p483 = pneg %p220
        %p484 = pneg %p244
        %p485 = pneg %p241
        %p486 = pneg %p265
        %p487 = pneg %p262
        %p488 = pneg %p286
        %p489 = pneg %p283
        %p490 = pneg %p307
        %p491 = pneg %p304
        %p492 = pneg %p328
        %p493 = pneg %p325
        %p494 = pneg %p349
        %p495 = pneg %p346
        %p496 = pneg %p375
        %p497 = pneg %p372
        %s498 = sand.u32 %s362, 1
        %s499 = scalar_lea.sflag [#allocation4], %s498
        %s500 = sand.u32 %s362, 1
        %s501 = smul.addr %s500, 16
        %s502 = scalar_lea.vmem [#allocation3], %s501
        %p503 = scmp.lt.s32.totalorder %s29, 1
        %s504 = scalar_select %p503, %s29, 1
        %s505 = smul.addr %s504, 8
        %s506 = smul.addr %s505, 8
        %s507 = scalar_lea.vmem %s0, %s506
        %p508 = scmp.lt.s32.totalorder %s29, 1
        %s509 = scalar_select %p508, %s29, 1
        %s510 = smul.addr %s509, 4
        %s511 = smul.addr %s510, 8
        %s512 = scalar_lea.vmem %s1, %s511
        %v514 = vld [vmem:[%s507] sm:$0xff]
        %v515 = vld [vmem:[%s507 + $0x8] sm:$0xff]
        %v516 = vld [vmem:[%s507 + $0x10] sm:$0xff]
        %v517 = vld [vmem:[%s507 + $0x18] sm:$0xff]
        %v518 = vld [vmem:[%s507 + $0x20] sm:$0xff]
        %v519 = vld [vmem:[%s507 + $0x28] sm:$0xff]
        %v520 = vld [vmem:[%s507 + $0x30] sm:$0xff]
        %v521 = vld [vmem:[%s507 + $0x38] sm:$0xff]
        %v522 = vld [vmem:[%s512] sm:$0xff]
        %v523 = vld [vmem:[%s512 + $0x8] sm:$0xff]
        %v524 = vld [vmem:[%s512 + $0x10] sm:$0xff]
        %v525 = vld [vmem:[%s512 + $0x18] sm:$0xff]
        %v526 = vpack.c.bf16 %v523, %v522
        %v527 = vpack.c.bf16 %v525, %v524
        %v528 = vld [vmem:[%s2] sm:$0xf]
        %v529 = vld [vmem:[%s2 + $0x4] sm:$0xf]
        %v530 = vld [vmem:[%s2 + $0x8] sm:$0xf]
        %v531 = vld [vmem:[%s2 + $0xc] sm:$0xf]
        %v532 = vld [vmem:[%s2 + $0x10] sm:$0xf]
        %v533 = vld [vmem:[%s2 + $0x14] sm:$0xf]
        %v534 = vld [vmem:[%s3] sm:$0x1]
        %v536 = vlaneseq
        %v537 = vshrl.u32 %v536, 7
        %v538 = vsub.s32 0, %v537
        %v539 = vrot.slane %v534, %v538
        %v547 = vunpack.c.l.b16 %v528
        %v548 = vunpack.c.l.b16 %v529
        %v549 = vunpack.c.l.b16 %v530
        %v550 = vunpack.c.l.b16 %v531
        %v551 = vunpack.c.l.b16 %v532
        %v552 = vunpack.c.l.b16 %v533
        %v553 = vpack.c.b16 %v548, %v547
        %v554 = vpack.c.b16 %v550, %v549
        %v555 = vpack.c.b16 %v552, %v551
        %vm559 = vcmask 392192
        %v561 = vsel %vm559, %v526, 0
        %v564 = vsel %vm559, %v527, 0
        %566 = vmatprep.subr.bf16.mxu0 0
        %567 = vmatpush1.bf16.msra.mxu0 %v553
        %568 = vmatprep.subr.bf16.mxu0 0
        %569 = vmatpush1.bf16.msra.mxu0 %v554
        %570 = vmatprep.subr.bf16.mxu0 0
        %571 = vmatpush1.bf16.msra.mxu0 %v555
        %572 = vmatprep.subr.bf16.mxu0 0
        %573 = vmatpush1.bf16.msra.mxu0 0
        %574 = vmatprep.subr.bf16.mxu0 0
        %575 = vmatpush1.bf16.msra.mxu0 0
        %576 = vmatprep.subr.bf16.mxu0 0
        %577 = vmatpush1.bf16.msra.mxu0 0
        %578 = vmatprep.subr.bf16.mxu0 0
        %579 = vmatpush1.bf16.msra.mxu0 0
        %580 = vmatprep.subr.bf16.mxu0 0
        %581 = vmatpush1.bf16.msra.mxu0 0
        %582 = vmatprep.subr.bf16.mxu0 0
        %583 = vmatpush1.bf16.msra.mxu0 0
        %584 = vmatprep.subr.bf16.mxu0 0
        %585 = vmatpush1.bf16.msra.mxu0 0
        %586 = vmatprep.subr.bf16.mxu0 0
        %587 = vmatpush1.bf16.msra.mxu0 0
        %588 = vmatprep.subr.bf16.mxu0 0
        %589 = vmatpush1.bf16.msra.mxu0 0
        %590 = vmatprep.subr.bf16.mxu0 0
        %591 = vmatpush1.bf16.msra.mxu0 0
        %592 = vmatprep.subr.bf16.mxu0 0
        %593 = vmatpush1.bf16.msra.mxu0 0
        %594 = vmatprep.subr.bf16.mxu0 0
        %595 = vmatpush1.bf16.msra.mxu0 0
        %596 = vmatprep.subr.bf16.mxu0 0
        %597 = vmatpush1.bf16.msra.mxu0 0
        %598 = vmatprep.mubr.bf16.mxu0 0
        %599 = vmatmul.mubr.bf16.gmra.mrb[0].mxu0 %v561
        %v600 = vpop.f32.mrb[0].mxu0
        %v601 = vadd.f32 %v539, %v600
        %v602 = vpop.f32.mrb[0].mxu0
        %v603 = vpop.f32.mrb[0].mxu0
        %v604 = vadd.f32 %v539, %v603
        %v605 = vpop.f32.mrb[0].mxu0
        %606 = vmatprep.mubr.bf16.mxu0 0
        %607 = vmatmul.mubr.bf16.gmra.mrb[0].mxu0 %v564
        %v608 = vpop.f32.mrb[0].mxu0
        %v609 = vadd.f32 %v539, %v608
        %v610 = vpop.f32.mrb[0].mxu0
        %v611 = vpop.f32.mrb[0].mxu0
        %v612 = vadd.f32 %v539, %v611
        %v613 = vpop.f32.mrb[0].mxu0
        %614 = vdwg.mxu0
        %v615 = vpack.c.bf16 %v515, %v514
        %v616 = vpack.c.bf16 %v517, %v516
        %v617 = vpack.c.bf16 %v519, %v518
        %v618 = vpack.c.bf16 %v521, %v520
        %v619 = vld [vmem:[%s4] sm:$0xf]
        %v620 = vld [vmem:[%s4 + $0x4] sm:$0xf]
        %v621 = vld [vmem:[%s4 + $0x8] sm:$0xf]
        %v622 = vld [vmem:[%s4 + $0xc] sm:$0xf]
        %v623 = vld [vmem:[%s5] sm:$0x1]
        %v625 = vlaneseq
        %v626 = vshrl.u32 %v625, 7
        %v627 = vsub.s32 0, %v626
        %v628 = vrot.slane %v623, %v627
        %v634 = vunpack.c.l.b16 %v619
        %v635 = vunpack.c.l.b16 %v620
        %v636 = vunpack.c.l.b16 %v621
        %v637 = vunpack.c.l.b16 %v622
        %v638 = vpack.c.b16 %v635, %v634
        %v639 = vpack.c.b16 %v637, %v636
        %vm642 = vcmask 261120
        %v644 = vsel %vm642, %v615, 0
        %v647 = vsel %vm642, %v616, 0
        %v650 = vsel %vm642, %v617, 0
        %v653 = vsel %vm642, %v618, 0
        %655 = vmatprep.subr.bf16.mxu0 0
        %656 = vmatpush1.bf16.msra.mxu0 %v638
        %657 = vmatprep.subr.bf16.mxu0 0
        %658 = vmatpush1.bf16.msra.mxu0 %v639
        %659 = vmatprep.subr.bf16.mxu0 0
        %660 = vmatpush1.bf16.msra.mxu0 0
        %661 = vmatprep.subr.bf16.mxu0 0
        %662 = vmatpush1.bf16.msra.mxu0 0
        %663 = vmatprep.subr.bf16.mxu0 0
        %664 = vmatpush1.bf16.msra.mxu0 0
        %665 = vmatprep.subr.bf16.mxu0 0
        %666 = vmatpush1.bf16.msra.mxu0 0
        %667 = vmatprep.subr.bf16.mxu0 0
        %668 = vmatpush1.bf16.msra.mxu0 0
        %669 = vmatprep.subr.bf16.mxu0 0
        %670 = vmatpush1.bf16.msra.mxu0 0
        %671 = vmatprep.subr.bf16.mxu0 0
        %672 = vmatpush1.bf16.msra.mxu0 0
        %673 = vmatprep.subr.bf16.mxu0 0
        %674 = vmatpush1.bf16.msra.mxu0 0
        %675 = vmatprep.subr.bf16.mxu0 0
        %676 = vmatpush1.bf16.msra.mxu0 0
        %677 = vmatprep.subr.bf16.mxu0 0
        %678 = vmatpush1.bf16.msra.mxu0 0
        %679 = vmatprep.subr.bf16.mxu0 0
        %680 = vmatpush1.bf16.msra.mxu0 0
        %681 = vmatprep.subr.bf16.mxu0 0
        %682 = vmatpush1.bf16.msra.mxu0 0
        %683 = vmatprep.subr.bf16.mxu0 0
        %684 = vmatpush1.bf16.msra.mxu0 0
        %685 = vmatprep.subr.bf16.mxu0 0
        %686 = vmatpush1.bf16.msra.mxu0 0
        %687 = vmatprep.mubr.bf16.mxu0 0
        %688 = vmatmul.mubr.bf16.gmra.mrb[0].mxu0 %v644
        %v689 = vpop.f32.mrb[0].mxu0
        %v690 = vadd.f32 %v628, %v689
        %v691 = vpop.f32.mrb[0].mxu0
        %v692 = vpop.f32.mrb[0].mxu0
        %v693 = vadd.f32 %v628, %v692
        %v694 = vpop.f32.mrb[0].mxu0
        %695 = vmatprep.mubr.bf16.mxu0 0
        %696 = vmatmul.mubr.bf16.gmra.mrb[0].mxu0 %v647
        %v697 = vpop.f32.mrb[0].mxu0
        %v698 = vadd.f32 %v628, %v697
        %v699 = vpop.f32.mrb[0].mxu0
        %v700 = vpop.f32.mrb[0].mxu0
        %v701 = vadd.f32 %v628, %v700
        %v702 = vpop.f32.mrb[0].mxu0
        %703 = vmatprep.mubr.bf16.mxu0 0
        %704 = vmatmul.mubr.bf16.gmra.mrb[0].mxu0 %v650
        %v705 = vpop.f32.mrb[0].mxu0
        %v706 = vadd.f32 %v628, %v705
        %v707 = vpop.f32.mrb[0].mxu0
        %v708 = vpop.f32.mrb[0].mxu0
        %v709 = vadd.f32 %v628, %v708
        %v710 = vpop.f32.mrb[0].mxu0
        %711 = vmatprep.mubr.bf16.mxu0 0
        %712 = vmatmul.mubr.bf16.gmra.mrb[0].mxu0 %v653
        %v713 = vpop.f32.mrb[0].mxu0
        %v714 = vadd.f32 %v628, %v713
        %v715 = vpop.f32.mrb[0].mxu0
        %v716 = vpop.f32.mrb[0].mxu0
        %v717 = vadd.f32 %v628, %v716
        %v718 = vpop.f32.mrb[0].mxu0
        %719 = vdwg.mxu0
        %v720 = vpack.c.bf16 %v604, %v601
        %v721 = vpack.c.bf16 %v612, %v609
        %v722 = vld [vmem:[%s6] sm:$0xf]
        %v723 = vld [vmem:[%s6 + $0x4] sm:$0xf]
        %v724 = vld [vmem:[%s6 + $0x8] sm:$0xf]
        %v725 = vld [vmem:[%s6 + $0xc] sm:$0xf]
        %v726 = vld [vmem:[%s7] sm:$0x1]
        %v728 = vlaneseq
        %v729 = vshrl.u32 %v728, 7
        %v730 = vsub.s32 0, %v729
        %v731 = vrot.slane %v726, %v730
        %v737 = vunpack.c.l.b16 %v722
        %v738 = vunpack.c.l.b16 %v723
        %v739 = vunpack.c.l.b16 %v724
        %v740 = vunpack.c.l.b16 %v725
        %v741 = vpack.c.b16 %v738, %v737
        %v742 = vpack.c.b16 %v740, %v739
        %v746 = vsel %vm642, %v720, 0
        %v749 = vsel %vm642, %v721, 0
        %751 = vmatprep.subr.bf16.mxu0 0
        %752 = vmatpush1.bf16.msra.mxu0 %v741
        %753 = vmatprep.subr.bf16.mxu0 0
        %754 = vmatpush1.bf16.msra.mxu0 %v742
        %755 = vmatprep.subr.bf16.mxu0 0
        %756 = vmatpush1.bf16.msra.mxu0 0
        %757 = vmatprep.subr.bf16.mxu0 0
        %758 = vmatpush1.bf16.msra.mxu0 0
        %759 = vmatprep.subr.bf16.mxu0 0
        %760 = vmatpush1.bf16.msra.mxu0 0
        %761 = vmatprep.subr.bf16.mxu0 0
        %762 = vmatpush1.bf16.msra.mxu0 0
        %763 = vmatprep.subr.bf16.mxu0 0
        %764 = vmatpush1.bf16.msra.mxu0 0
        %765 = vmatprep.subr.bf16.mxu0 0
        %766 = vmatpush1.bf16.msra.mxu0 0
        %767 = vmatprep.subr.bf16.mxu0 0
        %768 = vmatpush1.bf16.msra.mxu0 0
        %769 = vmatprep.subr.bf16.mxu0 0
        %770 = vmatpush1.bf16.msra.mxu0 0
        %771 = vmatprep.subr.bf16.mxu0 0
        %772 = vmatpush1.bf16.msra.mxu0 0
        %773 = vmatprep.subr.bf16.mxu0 0
        %774 = vmatpush1.bf16.msra.mxu0 0
        %775 = vmatprep.subr.bf16.mxu0 0
        %776 = vmatpush1.bf16.msra.mxu0 0
        %777 = vmatprep.subr.bf16.mxu0 0
        %778 = vmatpush1.bf16.msra.mxu0 0
        %779 = vmatprep.subr.bf16.mxu0 0
        %780 = vmatpush1.bf16.msra.mxu0 0
        %781 = vmatprep.subr.bf16.mxu0 0
        %782 = vmatpush1.bf16.msra.mxu0 0
        %783 = vmatprep.mubr.bf16.mxu0 0
        %784 = vmatmul.mubr.bf16.gmra.mrb[0].mxu0 %v746
        %v785 = vpop.f32.mrb[0].mxu0
        %v786 = vadd.f32 %v731, %v785
        %v787 = vpop.f32.mrb[0].mxu0
        %v788 = vpop.f32.mrb[0].mxu0
        %v789 = vadd.f32 %v731, %v788
        %v790 = vpop.f32.mrb[0].mxu0
        %791 = vmatprep.mubr.bf16.mxu0 0
        %792 = vmatmul.mubr.bf16.gmra.mrb[0].mxu0 %v749
        %v793 = vpop.f32.mrb[0].mxu0
        %v794 = vadd.f32 %v731, %v793
        %v795 = vpop.f32.mrb[0].mxu0
        %v796 = vpop.f32.mrb[0].mxu0
        %v797 = vadd.f32 %v731, %v796
        %v798 = vpop.f32.mrb[0].mxu0
        %799 = vdwg.mxu0
        %v800 = vpack.c.bf16 %v693, %v690
        %v801 = vpack.c.bf16 %v701, %v698
        %v802 = vpack.c.bf16 %v709, %v706
        %v803 = vpack.c.bf16 %v717, %v714
        %v804 = vpack.c.bf16 %v789, %v786
        %v805 = vpack.c.bf16 %v797, %v794
        %vm806 = vcmask 64512
        %v808 = vsel %vm806, %v800, 0
        %v811 = vsel %vm806, %v801, 0
        %v814 = vsel %vm806, %v802, 0
        %v817 = vsel %vm806, %v803, 0
        %v820 = vsel %vm806, %v804, 0
        %v823 = vsel %vm806, %v805, 0
        %825 = vmatprep.subr.bf16.mxu0 0
        %826 = vmatpush1.bf16.xpose.msra.mxu0 %v820
        %827 = vmatprep.subr.bf16.mxu0 0
        %828 = vmatpush1.bf16.xpose.msra.mxu0 %v823
        %829 = vmatprep.subr.bf16.mxu0 0
        %830 = vmatpush1.bf16.xpose.msra.mxu0 0
        %831 = vmatprep.subr.bf16.mxu0 0
        %832 = vmatpush1.bf16.xpose.msra.mxu0 0
        %833 = vmatprep.subr.bf16.mxu0 0
        %834 = vmatpush1.bf16.xpose.msra.mxu0 0
        %835 = vmatprep.subr.bf16.mxu0 0
        %836 = vmatpush1.bf16.xpose.msra.mxu0 0
        %837 = vmatprep.subr.bf16.mxu0 0
        %838 = vmatpush1.bf16.xpose.msra.mxu0 0
        %839 = vmatprep.subr.bf16.mxu0 0
        %840 = vmatpush1.bf16.xpose.msra.mxu0 0
        %841 = vmatprep.subr.bf16.mxu0 0
        %842 = vmatpush1.bf16.xpose.msra.mxu0 0
        %843 = vmatprep.subr.bf16.mxu0 0
        %844 = vmatpush1.bf16.xpose.msra.mxu0 0
        %845 = vmatprep.subr.bf16.mxu0 0
        %846 = vmatpush1.bf16.xpose.msra.mxu0 0
        %847 = vmatprep.subr.bf16.mxu0 0
        %848 = vmatpush1.bf16.xpose.msra.mxu0 0
        %849 = vmatprep.subr.bf16.mxu0 0
        %850 = vmatpush1.bf16.xpose.msra.mxu0 0
        %851 = vmatprep.subr.bf16.mxu0 0
        %852 = vmatpush1.bf16.xpose.msra.mxu0 0
        %853 = vmatprep.subr.bf16.mxu0 0
        %854 = vmatpush1.bf16.xpose.msra.mxu0 0
        %855 = vmatprep.subr.bf16.mxu0 0
        %856 = vmatpush1.bf16.xpose.msra.mxu0 0
        %857 = vmatprep.mubr.bf16.mxu0 0
        %858 = vmatmul.mubr.bf16.gmra.mrb[0].mxu0 %v808
        %v859 = vpop.f32.mrb[0].mxu0
        %v860 = vadd.f32 0.0, %v859
        %v861 = vpop.f32.mrb[0].mxu0
        %v862 = vpop.f32.mrb[0].mxu0
        %v863 = vadd.f32 0.0, %v862
        %v864 = vpop.f32.mrb[0].mxu0
        %865 = vmatprep.mubr.bf16.mxu0 0
        %866 = vmatmul.mubr.bf16.gmra.mrb[0].mxu0 %v811
        %v867 = vpop.f32.mrb[0].mxu0
        %v868 = vadd.f32 0.0, %v867
        %v869 = vpop.f32.mrb[0].mxu0
        %v870 = vpop.f32.mrb[0].mxu0
        %v871 = vadd.f32 0.0, %v870
        %v872 = vpop.f32.mrb[0].mxu0
        %873 = vmatprep.mubr.bf16.mxu0 0
        %874 = vmatmul.mubr.bf16.gmra.mrb[0].mxu0 %v814
        %v875 = vpop.f32.mrb[0].mxu0
        %v876 = vadd.f32 0.0, %v875
        %v877 = vpop.f32.mrb[0].mxu0
        %v878 = vpop.f32.mrb[0].mxu0
        %v879 = vadd.f32 0.0, %v878
        %v880 = vpop.f32.mrb[0].mxu0
        %881 = vmatprep.mubr.bf16.mxu0 0
        %882 = vmatmul.mubr.bf16.gmra.mrb[0].mxu0 %v817
        %v883 = vpop.f32.mrb[0].mxu0
        %v884 = vadd.f32 0.0, %v883
        %v885 = vpop.f32.mrb[0].mxu0
        %v886 = vpop.f32.mrb[0].mxu0
        %v887 = vadd.f32 0.0, %v886
        %v888 = vpop.f32.mrb[0].mxu0
        %889 = vdwg.mxu0
        %v890 = vmul.f32 %v860, 0.35355338
        %v891 = vmul.f32 %v863, 0.35355338
        %v892 = vmul.f32 %v868, 0.35355338
        %v893 = vmul.f32 %v871, 0.35355338
        %v894 = vmul.f32 %v876, 0.35355338
        %v895 = vmul.f32 %v879, 0.35355338
        %v896 = vmul.f32 %v884, 0.35355338
        %v897 = vmul.f32 %v887, 0.35355338
        %v898 = vsel %vm642, %v890, -inf
        %899 = vmax.xlane.f32.xlu0 %v898
        %v900 = vpop.xlane.xlu0 %899
        %v901 = vsel %vm642, %v891, -inf
        %902 = vmax.xlane.f32.xlu0 %v901
        %v903 = vpop.xlane.xlu0 %902
        %v904 = vsel %vm642, %v892, -inf
        %905 = vmax.xlane.f32.xlu0 %v904
        %v906 = vpop.xlane.xlu0 %905
        %v907 = vsel %vm642, %v893, -inf
        %908 = vmax.xlane.f32.xlu0 %v907
        %v909 = vpop.xlane.xlu0 %908
        %v910 = vsel %vm642, %v894, -inf
        %911 = vmax.xlane.f32.xlu0 %v910
        %v912 = vpop.xlane.xlu0 %911
        %v913 = vsel %vm642, %v895, -inf
        %914 = vmax.xlane.f32.xlu0 %v913
        %v915 = vpop.xlane.xlu0 %914
        %v916 = vsel %vm642, %v896, -inf
        %917 = vmax.xlane.f32.xlu0 %v916
        %v918 = vpop.xlane.xlu0 %917
        %v919 = vsel %vm642, %v897, -inf
        %920 = vmax.xlane.f32.xlu0 %v919
        %v921 = vpop.xlane.xlu0 %920
        %v922 = vsub.f32 %v890, %v900
        %v923 = vsub.f32 %v891, %v903
        %v924 = vsub.f32 %v892, %v906
        %v925 = vsub.f32 %v893, %v909
        %v926 = vsub.f32 %v894, %v912
        %v927 = vsub.f32 %v895, %v915
        %v928 = vsub.f32 %v896, %v918
        %v929 = vsub.f32 %v897, %v921
        %v930 = vmul.f32 %v922, 1.442695
        %v931 = vpow.pop %v930
        %v932 = vmul.f32 %v923, 1.442695
        %v933 = vpow.pop %v932
        %v934 = vmul.f32 %v924, 1.442695
        %v935 = vpow.pop %v934
        %v936 = vmul.f32 %v925, 1.442695
        %v937 = vpow.pop %v936
        %v938 = vmul.f32 %v926, 1.442695
        %v939 = vpow.pop %v938
        %v940 = vmul.f32 %v927, 1.442695
        %v941 = vpow.pop %v940
        %v942 = vmul.f32 %v928, 1.442695
        %v943 = vpow.pop %v942
        %v944 = vmul.f32 %v929, 1.442695
        %v945 = vpow.pop %v944
        %v946 = vsel %vm642, %v931, 0.0
        %947 = vadd.xlane.f32.xlu0 %v946
        %v948 = vpop.xlane.xlu0 %947
        %v949 = vsel %vm642, %v933, 0.0
        %950 = vadd.xlane.f32.xlu0 %v949
        %v951 = vpop.xlane.xlu0 %950
        %v952 = vsel %vm642, %v935, 0.0
        %953 = vadd.xlane.f32.xlu0 %v952
        %v954 = vpop.xlane.xlu0 %953
        %v955 = vsel %vm642, %v937, 0.0
        %956 = vadd.xlane.f32.xlu0 %v955
        %v957 = vpop.xlane.xlu0 %956
        %v958 = vsel %vm642, %v939, 0.0
        %959 = vadd.xlane.f32.xlu0 %v958
        %v960 = vpop.xlane.xlu0 %959
        %v961 = vsel %vm642, %v941, 0.0
        %962 = vadd.xlane.f32.xlu0 %v961
        %v963 = vpop.xlane.xlu0 %962
        %v964 = vsel %vm642, %v943, 0.0
        %965 = vadd.xlane.f32.xlu0 %v964
        %v966 = vpop.xlane.xlu0 %965
        %v967 = vsel %vm642, %v945, 0.0
        %968 = vadd.xlane.f32.xlu0 %v967
        %v969 = vpop.xlane.xlu0 %968
        %v970 = vrcp.pop %v948
        %v971 = vrcp.pop %v951
        %v972 = vrcp.pop %v954
        %v973 = vrcp.pop %v957
        %v974 = vrcp.pop %v960
        %v975 = vrcp.pop %v963
        %v976 = vrcp.pop %v966
        %v977 = vrcp.pop %v969
        %v978 = vmul.f32 %v931, %v970
        %v979 = vmul.f32 %v933, %v971
        %v980 = vmul.f32 %v935, %v972
        %v981 = vmul.f32 %v937, %v973
        %v982 = vmul.f32 %v939, %v974
        %v983 = vmul.f32 %v941, %v975
        %v984 = vmul.f32 %v943, %v976
        %v985 = vmul.f32 %v945, %v977
        %v986 = vpack.c.bf16 %v979, %v978
        %v987 = vpack.c.bf16 %v981, %v980
        %v988 = vpack.c.bf16 %v983, %v982
        %v989 = vpack.c.bf16 %v985, %v984
        %992 = vrot.lane.b32.xlu0 %v804, 96
        %v993 = vpop.permute.xlu0 %992
        %994 = vrot.lane.b32.xlu0 %v805, 96
        %v995 = vpop.permute.xlu0 %994
        %v999 = vsel %vm642, %v986, 0
        %v1002 = vsel %vm642, %v987, 0
        %v1005 = vsel %vm642, %v988, 0
        %v1008 = vsel %vm642, %v989, 0
        %1010 = vmatprep.subr.bf16.mxu0 0
        %1011 = vmatpush1.bf16.msra.mxu0 %v993
        %1012 = vmatprep.subr.bf16.mxu0 0
        %1013 = vmatpush1.bf16.msra.mxu0 %v995
        %1014 = vmatprep.subr.bf16.mxu0 0
        %1015 = vmatpush1.bf16.msra.mxu0 0
        %1016 = vmatprep.subr.bf16.mxu0 0
        %1017 = vmatpush1.bf16.msra.mxu0 0
        %1018 = vmatprep.subr.bf16.mxu0 0
        %1019 = vmatpush1.bf16.msra.mxu0 0
        %1020 = vmatprep.subr.bf16.mxu0 0
        %1021 = vmatpush1.bf16.msra.mxu0 0
        %1022 = vmatprep.subr.bf16.mxu0 0
        %1023 = vmatpush1.bf16.msra.mxu0 0
        %1024 = vmatprep.subr.bf16.mxu0 0
        %1025 = vmatpush1.bf16.msra.mxu0 0
        %1026 = vmatprep.subr.bf16.mxu0 0
        %1027 = vmatpush1.bf16.msra.mxu0 0
        %1028 = vmatprep.subr.bf16.mxu0 0
        %1029 = vmatpush1.bf16.msra.mxu0 0
        %1030 = vmatprep.subr.bf16.mxu0 0
        %1031 = vmatpush1.bf16.msra.mxu0 0
        %1032 = vmatprep.subr.bf16.mxu0 0
        %1033 = vmatpush1.bf16.msra.mxu0 0
        %1034 = vmatprep.subr.bf16.mxu0 0
        %1035 = vmatpush1.bf16.msra.mxu0 0
        %1036 = vmatprep.subr.bf16.mxu0 0
        %1037 = vmatpush1.bf16.msra.mxu0 0
        %1038 = vmatprep.subr.bf16.mxu0 0
        %1039 = vmatpush1.bf16.msra.mxu0 0
        %1040 = vmatprep.subr.bf16.mxu0 0
        %1041 = vmatpush1.bf16.msra.mxu0 0
        %1042 = vmatprep.mubr.bf16.mxu0 0
        %1043 = vmatmul.mubr.bf16.gmra.mrb[0].mxu0 %v999
        %v1044 = vpop.f32.mrb[0].mxu0
        %v1045 = vadd.f32 0.0, %v1044
        %v1046 = vpop.f32.mrb[0].mxu0
        %v1047 = vpop.f32.mrb[0].mxu0
        %v1048 = vadd.f32 0.0, %v1047
        %v1049 = vpop.f32.mrb[0].mxu0
        %1050 = vmatprep.mubr.bf16.mxu0 0
        %1051 = vmatmul.mubr.bf16.gmra.mrb[0].mxu0 %v1002
        %v1052 = vpop.f32.mrb[0].mxu0
        %v1053 = vadd.f32 0.0, %v1052
        %v1054 = vpop.f32.mrb[0].mxu0
        %v1055 = vpop.f32.mrb[0].mxu0
        %v1056 = vadd.f32 0.0, %v1055
        %v1057 = vpop.f32.mrb[0].mxu0
        %1058 = vmatprep.mubr.bf16.mxu0 0
        %1059 = vmatmul.mubr.bf16.gmra.mrb[0].mxu0 %v1005
        %v1060 = vpop.f32.mrb[0].mxu0
        %v1061 = vadd.f32 0.0, %v1060
        %v1062 = vpop.f32.mrb[0].mxu0
        %v1063 = vpop.f32.mrb[0].mxu0
        %v1064 = vadd.f32 0.0, %v1063
        %v1065 = vpop.f32.mrb[0].mxu0
        %1066 = vmatprep.mubr.bf16.mxu0 0
        %1067 = vmatmul.mubr.bf16.gmra.mrb[0].mxu0 %v1008
        %v1068 = vpop.f32.mrb[0].mxu0
        %v1069 = vadd.f32 0.0, %v1068
        %v1070 = vpop.f32.mrb[0].mxu0
        %v1071 = vpop.f32.mrb[0].mxu0
        %v1072 = vadd.f32 0.0, %v1071
        %v1073 = vpop.f32.mrb[0].mxu0
        %1074 = vdwg.mxu0
        %1079 = vrot.lane.b32.xlu0 %v800, 120
        %v1080 = vpop.permute.xlu0 %1079
        %1081 = vrot.lane.b32.xlu0 %v801, 120
        %v1082 = vpop.permute.xlu0 %1081
        %1083 = vrot.lane.b32.xlu0 %v802, 120
        %v1084 = vpop.permute.xlu0 %1083
        %1085 = vrot.lane.b32.xlu0 %v803, 120
        %v1086 = vpop.permute.xlu0 %1085
        %1087 = vrot.lane.b32.xlu0 %v804, 120
        %v1088 = vpop.permute.xlu0 %1087
        %1089 = vrot.lane.b32.xlu0 %v805, 120
        %v1090 = vpop.permute.xlu0 %1089
        %v1092 = vsel %vm806, %v1080, 0
        %v1095 = vsel %vm806, %v1082, 0
        %v1098 = vsel %vm806, %v1084, 0
        %v1101 = vsel %vm806, %v1086, 0
        %v1104 = vsel %vm806, %v1088, 0
        %v1107 = vsel %vm806, %v1090, 0
        %1109 = vmatprep.subr.bf16.mxu0 0
        %1110 = vmatpush1.bf16.xpose.msra.mxu0 %v1104
        %1111 = vmatprep.subr.bf16.mxu0 0
        %1112 = vmatpush1.bf16.xpose.msra.mxu0 %v1107
        %1113 = vmatprep.subr.bf16.mxu0 0
        %1114 = vmatpush1.bf16.xpose.msra.mxu0 0
        %1115 = vmatprep.subr.bf16.mxu0 0
        %1116 = vmatpush1.bf16.xpose.msra.mxu0 0
        %1117 = vmatprep.subr.bf16.mxu0 0
        %1118 = vmatpush1.bf16.xpose.msra.mxu0 0
        %1119 = vmatprep.subr.bf16.mxu0 0
        %1120 = vmatpush1.bf16.xpose.msra.mxu0 0
        %1121 = vmatprep.subr.bf16.mxu0 0
        %1122 = vmatpush1.bf16.xpose.msra.mxu0 0
        %1123 = vmatprep.subr.bf16.mxu0 0
        %1124 = vmatpush1.bf16.xpose.msra.mxu0 0
        %1125 = vmatprep.subr.bf16.mxu0 0
        %1126 = vmatpush1.bf16.xpose.msra.mxu0 0
        %1127 = vmatprep.subr.bf16.mxu0 0
        %1128 = vmatpush1.bf16.xpose.msra.mxu0 0
        %1129 = vmatprep.subr.bf16.mxu0 0
        %1130 = vmatpush1.bf16.xpose.msra.mxu0 0
        %1131 = vmatprep.subr.bf16.mxu0 0
        %1132 = vmatpush1.bf16.xpose.msra.mxu0 0
        %1133 = vmatprep.subr.bf16.mxu0 0
        %1134 = vmatpush1.bf16.xpose.msra.mxu0 0
        %1135 = vmatprep.subr.bf16.mxu0 0
        %1136 = vmatpush1.bf16.xpose.msra.mxu0 0
        %1137 = vmatprep.subr.bf16.mxu0 0
        %1138 = vmatpush1.bf16.xpose.msra.mxu0 0
        %1139 = vmatprep.subr.bf16.mxu0 0
        %1140 = vmatpush1.bf16.xpose.msra.mxu0 0
        %1141 = vmatprep.mubr.bf16.mxu0 0
        %1142 = vmatmul.mubr.bf16.gmra.mrb[0].mxu0 %v1092
        %v1143 = vpop.f32.mrb[0].mxu0
        %v1144 = vadd.f32 0.0, %v1143
        %v1145 = vpop.f32.mrb[0].mxu0
        %v1146 = vpop.f32.mrb[0].mxu0
        %v1147 = vadd.f32 0.0, %v1146
        %v1148 = vpop.f32.mrb[0].mxu0
        %1149 = vmatprep.mubr.bf16.mxu0 0
        %1150 = vmatmul.mubr.bf16.gmra.mrb[0].mxu0 %v1095
        %v1151 = vpop.f32.mrb[0].mxu0
        %v1152 = vadd.f32 0.0, %v1151
        %v1153 = vpop.f32.mrb[0].mxu0
        %v1154 = vpop.f32.mrb[0].mxu0
        %v1155 = vadd.f32 0.0, %v1154
        %v1156 = vpop.f32.mrb[0].mxu0
        %1157 = vmatprep.mubr.bf16.mxu0 0
        %1158 = vmatmul.mubr.bf16.gmra.mrb[0].mxu0 %v1098
        %v1159 = vpop.f32.mrb[0].mxu0
        %v1160 = vadd.f32 0.0, %v1159
        %v1161 = vpop.f32.mrb[0].mxu0
        %v1162 = vpop.f32.mrb[0].mxu0
        %v1163 = vadd.f32 0.0, %v1162
        %v1164 = vpop.f32.mrb[0].mxu0
        %1165 = vmatprep.mubr.bf16.mxu0 0
        %1166 = vmatmul.mubr.bf16.gmra.mrb[0].mxu0 %v1101
        %v1167 = vpop.f32.mrb[0].mxu0
        %v1168 = vadd.f32 0.0, %v1167
        %v1169 = vpop.f32.mrb[0].mxu0
        %v1170 = vpop.f32.mrb[0].mxu0
        %v1171 = vadd.f32 0.0, %v1170
        %v1172 = vpop.f32.mrb[0].mxu0
        %1173 = vdwg.mxu0
        %v1174 = vmul.f32 %v1144, 0.35355338
        %v1175 = vmul.f32 %v1147, 0.35355338
        %v1176 = vmul.f32 %v1152, 0.35355338
        %v1177 = vmul.f32 %v1155, 0.35355338
        %v1178 = vmul.f32 %v1160, 0.35355338
        %v1179 = vmul.f32 %v1163, 0.35355338
        %v1180 = vmul.f32 %v1168, 0.35355338
        %v1181 = vmul.f32 %v1171, 0.35355338
        %v1182 = vsel %vm642, %v1174, -inf
        %1183 = vmax.xlane.f32.xlu0 %v1182
        %v1184 = vpop.xlane.xlu0 %1183
        %v1185 = vsel %vm642, %v1175, -inf
        %1186 = vmax.xlane.f32.xlu0 %v1185
        %v1187 = vpop.xlane.xlu0 %1186
        %v1188 = vsel %vm642, %v1176, -inf
        %1189 = vmax.xlane.f32.xlu0 %v1188
        %v1190 = vpop.xlane.xlu0 %1189
        %v1191 = vsel %vm642, %v1177, -inf
        %1192 = vmax.xlane.f32.xlu0 %v1191
        %v1193 = vpop.xlane.xlu0 %1192
        %v1194 = vsel %vm642, %v1178, -inf
        %1195 = vmax.xlane.f32.xlu0 %v1194
        %v1196 = vpop.xlane.xlu0 %1195
        %v1197 = vsel %vm642, %v1179, -inf
        %1198 = vmax.xlane.f32.xlu0 %v1197
        %v1199 = vpop.xlane.xlu0 %1198
        %v1200 = vsel %vm642, %v1180, -inf
        %1201 = vmax.xlane.f32.xlu0 %v1200
        %v1202 = vpop.xlane.xlu0 %1201
        %v1203 = vsel %vm642, %v1181, -inf
        %1204 = vmax.xlane.f32.xlu0 %v1203
        %v1205 = vpop.xlane.xlu0 %1204
        %v1206 = vsub.f32 %v1174, %v1184
        %v1207 = vsub.f32 %v1175, %v1187
        %v1208 = vsub.f32 %v1176, %v1190
        %v1209 = vsub.f32 %v1177, %v1193
        %v1210 = vsub.f32 %v1178, %v1196
        %v1211 = vsub.f32 %v1179, %v1199
        %v1212 = vsub.f32 %v1180, %v1202
        %v1213 = vsub.f32 %v1181, %v1205
        %v1214 = vmul.f32 %v1206, 1.442695
        %v1215 = vpow.pop %v1214
        %v1216 = vmul.f32 %v1207, 1.442695
        %v1217 = vpow.pop %v1216
        %v1218 = vmul.f32 %v1208, 1.442695
        %v1219 = vpow.pop %v1218
        %v1220 = vmul.f32 %v1209, 1.442695
        %v1221 = vpow.pop %v1220
        %v1222 = vmul.f32 %v1210, 1.442695
        %v1223 = vpow.pop %v1222
        %v1224 = vmul.f32 %v1211, 1.442695
        %v1225 = vpow.pop %v1224
        %v1226 = vmul.f32 %v1212, 1.442695
        %v1227 = vpow.pop %v1226
        %v1228 = vmul.f32 %v1213, 1.442695
        %v1229 = vpow.pop %v1228
        %v1230 = vsel %vm642, %v1215, 0.0
        %1231 = vadd.xlane.f32.xlu0 %v1230
        %v1232 = vpop.xlane.xlu0 %1231
        %v1233 = vsel %vm642, %v1217, 0.0
        %1234 = vadd.xlane.f32.xlu0 %v1233
        %v1235 = vpop.xlane.xlu0 %1234
        %v1236 = vsel %vm642, %v1219, 0.0
        %1237 = vadd.xlane.f32.xlu0 %v1236
        %v1238 = vpop.xlane.xlu0 %1237
        %v1239 = vsel %vm642, %v1221, 0.0
        %1240 = vadd.xlane.f32.xlu0 %v1239
        %v1241 = vpop.xlane.xlu0 %1240
        %v1242 = vsel %vm642, %v1223, 0.0
        %1243 = vadd.xlane.f32.xlu0 %v1242
        %v1244 = vpop.xlane.xlu0 %1243
        %v1245 = vsel %vm642, %v1225, 0.0
        %1246 = vadd.xlane.f32.xlu0 %v1245
        %v1247 = vpop.xlane.xlu0 %1246
        %v1248 = vsel %vm642, %v1227, 0.0
        %1249 = vadd.xlane.f32.xlu0 %v1248
        %v1250 = vpop.xlane.xlu0 %1249
        %v1251 = vsel %vm642, %v1229, 0.0
        %1252 = vadd.xlane.f32.xlu0 %v1251
        %v1253 = vpop.xlane.xlu0 %1252
        %v1254 = vrcp.pop %v1232
        %v1255 = vrcp.pop %v1235
        %v1256 = vrcp.pop %v1238
        %v1257 = vrcp.pop %v1241
        %v1258 = vrcp.pop %v1244
        %v1259 = vrcp.pop %v1247
        %v1260 = vrcp.pop %v1250
        %v1261 = vrcp.pop %v1253
        %v1262 = vmul.f32 %v1215, %v1254
        %v1263 = vmul.f32 %v1217, %v1255
        %v1264 = vmul.f32 %v1219, %v1256
        %v1265 = vmul.f32 %v1221, %v1257
        %v1266 = vmul.f32 %v1223, %v1258
        %v1267 = vmul.f32 %v1225, %v1259
        %v1268 = vmul.f32 %v1227, %v1260
        %v1269 = vmul.f32 %v1229, %v1261
        %v1270 = vpack.c.bf16 %v1263, %v1262
        %v1271 = vpack.c.bf16 %v1265, %v1264
        %v1272 = vpack.c.bf16 %v1267, %v1266
        %v1273 = vpack.c.bf16 %v1269, %v1268
        %1274 = vrot.lane.b32.xlu0 %v804, 88
        %v1275 = vpop.permute.xlu0 %1274
        %1276 = vrot.lane.b32.xlu0 %v805, 88
        %v1277 = vpop.permute.xlu0 %1276
        %v1281 = vsel %vm642, %v1270, 0
        %v1284 = vsel %vm642, %v1271, 0
        %v1287 = vsel %vm642, %v1272, 0
        %v1290 = vsel %vm642, %v1273, 0
        %1292 = vmatprep.subr.bf16.mxu0 0
        %1293 = vmatpush1.bf16.msra.mxu0 %v1275
        %1294 = vmatprep.subr.bf16.mxu0 0
        %1295 = vmatpush1.bf16.msra.mxu0 %v1277
        %1296 = vmatprep.subr.bf16.mxu0 0
        %1297 = vmatpush1.bf16.msra.mxu0 0
        %1298 = vmatprep.subr.bf16.mxu0 0
        %1299 = vmatpush1.bf16.msra.mxu0 0
        %1300 = vmatprep.subr.bf16.mxu0 0
        %1301 = vmatpush1.bf16.msra.mxu0 0
        %1302 = vmatprep.subr.bf16.mxu0 0
        %1303 = vmatpush1.bf16.msra.mxu0 0
        %1304 = vmatprep.subr.bf16.mxu0 0
        %1305 = vmatpush1.bf16.msra.mxu0 0
        %1306 = vmatprep.subr.bf16.mxu0 0
        %1307 = vmatpush1.bf16.msra.mxu0 0
        %1308 = vmatprep.subr.bf16.mxu0 0
        %1309 = vmatpush1.bf16.msra.mxu0 0
        %1310 = vmatprep.subr.bf16.mxu0 0
        %1311 = vmatpush1.bf16.msra.mxu0 0
        %1312 = vmatprep.subr.bf16.mxu0 0
        %1313 = vmatpush1.bf16.msra.mxu0 0
        %1314 = vmatprep.subr.bf16.mxu0 0
        %1315 = vmatpush1.bf16.msra.mxu0 0
        %1316 = vmatprep.subr.bf16.mxu0 0
        %1317 = vmatpush1.bf16.msra.mxu0 0
        %1318 = vmatprep.subr.bf16.mxu0 0
        %1319 = vmatpush1.bf16.msra.mxu0 0
        %1320 = vmatprep.subr.bf16.mxu0 0
        %1321 = vmatpush1.bf16.msra.mxu0 0
        %1322 = vmatprep.subr.bf16.mxu0 0
        %1323 = vmatpush1.bf16.msra.mxu0 0
        %1324 = vmatprep.mubr.bf16.mxu0 0
        %1325 = vmatmul.mubr.bf16.gmra.mrb[0].mxu0 %v1281
        %v1326 = vpop.f32.mrb[0].mxu0
        %v1327 = vadd.f32 0.0, %v1326
        %v1328 = vpop.f32.mrb[0].mxu0
        %v1329 = vpop.f32.mrb[0].mxu0
        %v1330 = vadd.f32 0.0, %v1329
        %v1331 = vpop.f32.mrb[0].mxu0
        %1332 = vmatprep.mubr.bf16.mxu0 0
        %1333 = vmatmul.mubr.bf16.gmra.mrb[0].mxu0 %v1284
        %v1334 = vpop.f32.mrb[0].mxu0
        %v1335 = vadd.f32 0.0, %v1334
        %v1336 = vpop.f32.mrb[0].mxu0
        %v1337 = vpop.f32.mrb[0].mxu0
        %v1338 = vadd.f32 0.0, %v1337
        %v1339 = vpop.f32.mrb[0].mxu0
        %1340 = vmatprep.mubr.bf16.mxu0 0
        %1341 = vmatmul.mubr.bf16.gmra.mrb[0].mxu0 %v1287
        %v1342 = vpop.f32.mrb[0].mxu0
        %v1343 = vadd.f32 0.0, %v1342
        %v1344 = vpop.f32.mrb[0].mxu0
        %v1345 = vpop.f32.mrb[0].mxu0
        %v1346 = vadd.f32 0.0, %v1345
        %v1347 = vpop.f32.mrb[0].mxu0
        %1348 = vmatprep.mubr.bf16.mxu0 0
        %1349 = vmatmul.mubr.bf16.gmra.mrb[0].mxu0 %v1290
        %v1350 = vpop.f32.mrb[0].mxu0
        %v1351 = vadd.f32 0.0, %v1350
        %v1352 = vpop.f32.mrb[0].mxu0
        %v1353 = vpop.f32.mrb[0].mxu0
        %v1354 = vadd.f32 0.0, %v1353
        %v1355 = vpop.f32.mrb[0].mxu0
        %1356 = vdwg.mxu0
        %1357 = vrot.lane.b32.xlu0 %v800, 112
        %v1358 = vpop.permute.xlu0 %1357
        %1359 = vrot.lane.b32.xlu0 %v801, 112
        %v1360 = vpop.permute.xlu0 %1359
        %1361 = vrot.lane.b32.xlu0 %v802, 112
        %v1362 = vpop.permute.xlu0 %1361
        %1363 = vrot.lane.b32.xlu0 %v803, 112
        %v1364 = vpop.permute.xlu0 %1363
        %1365 = vrot.lane.b32.xlu0 %v804, 112
        %v1366 = vpop.permute.xlu0 %1365
        %1367 = vrot.lane.b32.xlu0 %v805, 112
        %v1368 = vpop.permute.xlu0 %1367
        %v1370 = vsel %vm806, %v1358, 0
        %v1373 = vsel %vm806, %v1360, 0
        %v1376 = vsel %vm806, %v1362, 0
        %v1379 = vsel %vm806, %v1364, 0
        %v1382 = vsel %vm806, %v1366, 0
        %v1385 = vsel %vm806, %v1368, 0
        %1387 = vmatprep.subr.bf16.mxu0 0
        %1388 = vmatpush1.bf16.xpose.msra.mxu0 %v1382
        %1389 = vmatprep.subr.bf16.mxu0 0
        %1390 = vmatpush1.bf16.xpose.msra.mxu0 %v1385
        %1391 = vmatprep.subr.bf16.mxu0 0
        %1392 = vmatpush1.bf16.xpose.msra.mxu0 0
        %1393 = vmatprep.subr.bf16.mxu0 0
        %1394 = vmatpush1.bf16.xpose.msra.mxu0 0
        %1395 = vmatprep.subr.bf16.mxu0 0
        %1396 = vmatpush1.bf16.xpose.msra.mxu0 0
        %1397 = vmatprep.subr.bf16.mxu0 0
        %1398 = vmatpush1.bf16.xpose.msra.mxu0 0
        %1399 = vmatprep.subr.bf16.mxu0 0
        %1400 = vmatpush1.bf16.xpose.msra.mxu0 0
        %1401 = vmatprep.subr.bf16.mxu0 0
        %1402 = vmatpush1.bf16.xpose.msra.mxu0 0
        %1403 = vmatprep.subr.bf16.mxu0 0
        %1404 = vmatpush1.bf16.xpose.msra.mxu0 0
        %1405 = vmatprep.subr.bf16.mxu0 0
        %1406 = vmatpush1.bf16.xpose.msra.mxu0 0
        %1407 = vmatprep.subr.bf16.mxu0 0
        %1408 = vmatpush1.bf16.xpose.msra.mxu0 0
        %1409 = vmatprep.subr.bf16.mxu0 0
        %1410 = vmatpush1.bf16.xpose.msra.mxu0 0
        %1411 = vmatprep.subr.bf16.mxu0 0
        %1412 = vmatpush1.bf16.xpose.msra.mxu0 0
        %1413 = vmatprep.subr.bf16.mxu0 0
        %1414 = vmatpush1.bf16.xpose.msra.mxu0 0
        %1415 = vmatprep.subr.bf16.mxu0 0
        %1416 = vmatpush1.bf16.xpose.msra.mxu0 0
        %1417 = vmatprep.subr.bf16.mxu0 0
        %1418 = vmatpush1.bf16.xpose.msra.mxu0 0
        %1419 = vmatprep.mubr.bf16.mxu0 0
        %1420 = vmatmul.mubr.bf16.gmra.mrb[0].mxu0 %v1370
        %v1421 = vpop.f32.mrb[0].mxu0
        %v1422 = vadd.f32 0.0, %v1421
        %v1423 = vpop.f32.mrb[0].mxu0
        %v1424 = vpop.f32.mrb[0].mxu0
        %v1425 = vadd.f32 0.0, %v1424
        %v1426 = vpop.f32.mrb[0].mxu0
        %1427 = vmatprep.mubr.bf16.mxu0 0
        %1428 = vmatmul.mubr.bf16.gmra.mrb[0].mxu0 %v1373
        %v1429 = vpop.f32.mrb[0].mxu0
        %v1430 = vadd.f32 0.0, %v1429
        %v1431 = vpop.f32.mrb[0].mxu0
        %v1432 = vpop.f32.mrb[0].mxu0
        %v1433 = vadd.f32 0.0, %v1432
        %v1434 = vpop.f32.mrb[0].mxu0
        %1435 = vmatprep.mubr.bf16.mxu0 0
        %1436 = vmatmul.mubr.bf16.gmra.mrb[0].mxu0 %v1376
        %v1437 = vpop.f32.mrb[0].mxu0
        %v1438 = vadd.f32 0.0, %v1437
        %v1439 = vpop.f32.mrb[0].mxu0
        %v1440 = vpop.f32.mrb[0].mxu0
        %v1441 = vadd.f32 0.0, %v1440
        %v1442 = vpop.f32.mrb[0].mxu0
        %1443 = vmatprep.mubr.bf16.mxu0 0
        %1444 = vmatmul.mubr.bf16.gmra.mrb[0].mxu0 %v1379
        %v1445 = vpop.f32.mrb[0].mxu0
        %v1446 = vadd.f32 0.0, %v1445
        %v1447 = vpop.f32.mrb[0].mxu0
        %v1448 = vpop.f32.mrb[0].mxu0
        %v1449 = vadd.f32 0.0, %v1448
        %v1450 = vpop.f32.mrb[0].mxu0
        %1451 = vdwg.mxu0
        %v1452 = vmul.f32 %v1422, 0.35355338
        %v1453 = vmul.f32 %v1425, 0.35355338
        %v1454 = vmul.f32 %v1430, 0.35355338
        %v1455 = vmul.f32 %v1433, 0.35355338
        %v1456 = vmul.f32 %v1438, 0.35355338
        %v1457 = vmul.f32 %v1441, 0.35355338
        %v1458 = vmul.f32 %v1446, 0.35355338
        %v1459 = vmul.f32 %v1449, 0.35355338
        %v1460 = vsel %vm642, %v1452, -inf
        %1461 = vmax.xlane.f32.xlu0 %v1460
        %v1462 = vpop.xlane.xlu0 %1461
        %v1463 = vsel %vm642, %v1453, -inf
        %1464 = vmax.xlane.f32.xlu0 %v1463
        %v1465 = vpop.xlane.xlu0 %1464
        %v1466 = vsel %vm642, %v1454, -inf
        %1467 = vmax.xlane.f32.xlu0 %v1466
        %v1468 = vpop.xlane.xlu0 %1467
        %v1469 = vsel %vm642, %v1455, -inf
        %1470 = vmax.xlane.f32.xlu0 %v1469
        %v1471 = vpop.xlane.xlu0 %1470
        %v1472 = vsel %vm642, %v1456, -inf
        %1473 = vmax.xlane.f32.xlu0 %v1472
        %v1474 = vpop.xlane.xlu0 %1473
        %v1475 = vsel %vm642, %v1457, -inf
        %1476 = vmax.xlane.f32.xlu0 %v1475
        %v1477 = vpop.xlane.xlu0 %1476
        %v1478 = vsel %vm642, %v1458, -inf
        %1479 = vmax.xlane.f32.xlu0 %v1478
        %v1480 = vpop.xlane.xlu0 %1479
        %v1481 = vsel %vm642, %v1459, -inf
        %1482 = vmax.xlane.f32.xlu0 %v1481
        %v1483 = vpop.xlane.xlu0 %1482
        %v1484 = vsub.f32 %v1452, %v1462
        %v1485 = vsub.f32 %v1453, %v1465
        %v1486 = vsub.f32 %v1454, %v1468
        %v1487 = vsub.f32 %v1455, %v1471
        %v1488 = vsub.f32 %v1456, %v1474
        %v1489 = vsub.f32 %v1457, %v1477
        %v1490 = vsub.f32 %v1458, %v1480
        %v1491 = vsub.f32 %v1459, %v1483
        %v1492 = vmul.f32 %v1484, 1.442695
        %v1493 = vpow.pop %v1492
        %v1494 = vmul.f32 %v1485, 1.442695
        %v1495 = vpow.pop %v1494
        %v1496 = vmul.f32 %v1486, 1.442695
        %v1497 = vpow.pop %v1496
        %v1498 = vmul.f32 %v1487, 1.442695
        %v1499 = vpow.pop %v1498
        %v1500 = vmul.f32 %v1488, 1.442695
        %v1501 = vpow.pop %v1500
        %v1502 = vmul.f32 %v1489, 1.442695
        %v1503 = vpow.pop %v1502
        %v1504 = vmul.f32 %v1490, 1.442695
        %v1505 = vpow.pop %v1504
        %v1506 = vmul.f32 %v1491, 1.442695
        %v1507 = vpow.pop %v1506
        %v1508 = vsel %vm642, %v1493, 0.0
        %1509 = vadd.xlane.f32.xlu0 %v1508
        %v1510 = vpop.xlane.xlu0 %1509
        %v1511 = vsel %vm642, %v1495, 0.0
        %1512 = vadd.xlane.f32.xlu0 %v1511
        %v1513 = vpop.xlane.xlu0 %1512
        %v1514 = vsel %vm642, %v1497, 0.0
        %1515 = vadd.xlane.f32.xlu0 %v1514
        %v1516 = vpop.xlane.xlu0 %1515
        %v1517 = vsel %vm642, %v1499, 0.0
        %1518 = vadd.xlane.f32.xlu0 %v1517
        %v1519 = vpop.xlane.xlu0 %1518
        %v1520 = vsel %vm642, %v1501, 0.0
        %1521 = vadd.xlane.f32.xlu0 %v1520
        %v1522 = vpop.xlane.xlu0 %1521
        %v1523 = vsel %vm642, %v1503, 0.0
        %1524 = vadd.xlane.f32.xlu0 %v1523
        %v1525 = vpop.xlane.xlu0 %1524
        %v1526 = vsel %vm642, %v1505, 0.0
        %1527 = vadd.xlane.f32.xlu0 %v1526
        %v1528 = vpop.xlane.xlu0 %1527
        %v1529 = vsel %vm642, %v1507, 0.0
        %1530 = vadd.xlane.f32.xlu0 %v1529
        %v1531 = vpop.xlane.xlu0 %1530
        %v1532 = vrcp.pop %v1510
        %v1533 = vrcp.pop %v1513
        %v1534 = vrcp.pop %v1516
        %v1535 = vrcp.pop %v1519
        %v1536 = vrcp.pop %v1522
        %v1537 = vrcp.pop %v1525
        %v1538 = vrcp.pop %v1528
        %v1539 = vrcp.pop %v1531
        %v1540 = vmul.f32 %v1493, %v1532
        %v1541 = vmul.f32 %v1495, %v1533
        %v1542 = vmul.f32 %v1497, %v1534
        %v1543 = vmul.f32 %v1499, %v1535
        %v1544 = vmul.f32 %v1501, %v1536
        %v1545 = vmul.f32 %v1503, %v1537
        %v1546 = vmul.f32 %v1505, %v1538
        %v1547 = vmul.f32 %v1507, %v1539
        %v1548 = vpack.c.bf16 %v1541, %v1540
        %v1549 = vpack.c.bf16 %v1543, %v1542
        %v1550 = vpack.c.bf16 %v1545, %v1544
        %v1551 = vpack.c.bf16 %v1547, %v1546
        %1552 = vrot.lane.b32.xlu0 %v804, 80
        %v1553 = vpop.permute.xlu0 %1552
        %1554 = vrot.lane.b32.xlu0 %v805, 80
        %v1555 = vpop.permute.xlu0 %1554
        %v1559 = vsel %vm642, %v1548, 0
        %v1562 = vsel %vm642, %v1549, 0
        %v1565 = vsel %vm642, %v1550, 0
        %v1568 = vsel %vm642, %v1551, 0
        %1570 = vmatprep.subr.bf16.mxu0 0
        %1571 = vmatpush1.bf16.msra.mxu0 %v1553
        %1572 = vmatprep.subr.bf16.mxu0 0
        %1573 = vmatpush1.bf16.msra.mxu0 %v1555
        %1574 = vmatprep.subr.bf16.mxu0 0
        %1575 = vmatpush1.bf16.msra.mxu0 0
        %1576 = vmatprep.subr.bf16.mxu0 0
        %1577 = vmatpush1.bf16.msra.mxu0 0
        %1578 = vmatprep.subr.bf16.mxu0 0
        %1579 = vmatpush1.bf16.msra.mxu0 0
        %1580 = vmatprep.subr.bf16.mxu0 0
        %1581 = vmatpush1.bf16.msra.mxu0 0
        %1582 = vmatprep.subr.bf16.mxu0 0
        %1583 = vmatpush1.bf16.msra.mxu0 0
        %1584 = vmatprep.subr.bf16.mxu0 0
        %1585 = vmatpush1.bf16.msra.mxu0 0
        %1586 = vmatprep.subr.bf16.mxu0 0
        %1587 = vmatpush1.bf16.msra.mxu0 0
        %1588 = vmatprep.subr.bf16.mxu0 0
        %1589 = vmatpush1.bf16.msra.mxu0 0
        %1590 = vmatprep.subr.bf16.mxu0 0
        %1591 = vmatpush1.bf16.msra.mxu0 0
        %1592 = vmatprep.subr.bf16.mxu0 0
        %1593 = vmatpush1.bf16.msra.mxu0 0
        %1594 = vmatprep.subr.bf16.mxu0 0
        %1595 = vmatpush1.bf16.msra.mxu0 0
        %1596 = vmatprep.subr.bf16.mxu0 0
        %1597 = vmatpush1.bf16.msra.mxu0 0
        %1598 = vmatprep.subr.bf16.mxu0 0
        %1599 = vmatpush1.bf16.msra.mxu0 0
        %1600 = vmatprep.subr.bf16.mxu0 0
        %1601 = vmatpush1.bf16.msra.mxu0 0
        %1602 = vmatprep.mubr.bf16.mxu0 0
        %1603 = vmatmul.mubr.bf16.gmra.mrb[0].mxu0 %v1559
        %v1604 = vpop.f32.mrb[0].mxu0
        %v1605 = vadd.f32 0.0, %v1604
        %v1606 = vpop.f32.mrb[0].mxu0
        %v1607 = vpop.f32.mrb[0].mxu0
        %v1608 = vadd.f32 0.0, %v1607
        %v1609 = vpop.f32.mrb[0].mxu0
        %1610 = vmatprep.mubr.bf16.mxu0 0
        %1611 = vmatmul.mubr.bf16.gmra.mrb[0].mxu0 %v1562
        %v1612 = vpop.f32.mrb[0].mxu0
        %v1613 = vadd.f32 0.0, %v1612
        %v1614 = vpop.f32.mrb[0].mxu0
        %v1615 = vpop.f32.mrb[0].mxu0
        %v1616 = vadd.f32 0.0, %v1615
        %v1617 = vpop.f32.mrb[0].mxu0
        %1618 = vmatprep.mubr.bf16.mxu0 0
        %1619 = vmatmul.mubr.bf16.gmra.mrb[0].mxu0 %v1565
        %v1620 = vpop.f32.mrb[0].mxu0
        %v1621 = vadd.f32 0.0, %v1620
        %v1622 = vpop.f32.mrb[0].mxu0
        %v1623 = vpop.f32.mrb[0].mxu0
        %v1624 = vadd.f32 0.0, %v1623
        %v1625 = vpop.f32.mrb[0].mxu0
        %1626 = vmatprep.mubr.bf16.mxu0 0
        %1627 = vmatmul.mubr.bf16.gmra.mrb[0].mxu0 %v1568
        %v1628 = vpop.f32.mrb[0].mxu0
        %v1629 = vadd.f32 0.0, %v1628
        %v1630 = vpop.f32.mrb[0].mxu0
        %v1631 = vpop.f32.mrb[0].mxu0
        %v1632 = vadd.f32 0.0, %v1631
        %v1633 = vpop.f32.mrb[0].mxu0
        %1634 = vdwg.mxu0
        %1635 = vrot.lane.b32.xlu0 %v800, 104
        %v1636 = vpop.permute.xlu0 %1635
        %1637 = vrot.lane.b32.xlu0 %v801, 104
        %v1638 = vpop.permute.xlu0 %1637
        %1639 = vrot.lane.b32.xlu0 %v802, 104
        %v1640 = vpop.permute.xlu0 %1639
        %1641 = vrot.lane.b32.xlu0 %v803, 104
        %v1642 = vpop.permute.xlu0 %1641
        %1643 = vrot.lane.b32.xlu0 %v804, 104
        %v1644 = vpop.permute.xlu0 %1643
        %1645 = vrot.lane.b32.xlu0 %v805, 104
        %v1646 = vpop.permute.xlu0 %1645
        %v1648 = vsel %vm806, %v1636, 0
        %v1651 = vsel %vm806, %v1638, 0
        %v1654 = vsel %vm806, %v1640, 0
        %v1657 = vsel %vm806, %v1642, 0
        %v1660 = vsel %vm806, %v1644, 0
        %v1663 = vsel %vm806, %v1646, 0
        %1665 = vmatprep.subr.bf16.mxu0 0
        %1666 = vmatpush1.bf16.xpose.msra.mxu0 %v1660
        %1667 = vmatprep.subr.bf16.mxu0 0
        %1668 = vmatpush1.bf16.xpose.msra.mxu0 %v1663
        %1669 = vmatprep.subr.bf16.mxu0 0
        %1670 = vmatpush1.bf16.xpose.msra.mxu0 0
        %1671 = vmatprep.subr.bf16.mxu0 0
        %1672 = vmatpush1.bf16.xpose.msra.mxu0 0
        %1673 = vmatprep.subr.bf16.mxu0 0
        %1674 = vmatpush1.bf16.xpose.msra.mxu0 0
        %1675 = vmatprep.subr.bf16.mxu0 0
        %1676 = vmatpush1.bf16.xpose.msra.mxu0 0
        %1677 = vmatprep.subr.bf16.mxu0 0
        %1678 = vmatpush1.bf16.xpose.msra.mxu0 0
        %1679 = vmatprep.subr.bf16.mxu0 0
        %1680 = vmatpush1.bf16.xpose.msra.mxu0 0
        %1681 = vmatprep.subr.bf16.mxu0 0
        %1682 = vmatpush1.bf16.xpose.msra.mxu0 0
        %1683 = vmatprep.subr.bf16.mxu0 0
        %1684 = vmatpush1.bf16.xpose.msra.mxu0 0
        %1685 = vmatprep.subr.bf16.mxu0 0
        %1686 = vmatpush1.bf16.xpose.msra.mxu0 0
        %1687 = vmatprep.subr.bf16.mxu0 0
        %1688 = vmatpush1.bf16.xpose.msra.mxu0 0
        %1689 = vmatprep.subr.bf16.mxu0 0
        %1690 = vmatpush1.bf16.xpose.msra.mxu0 0
        %1691 = vmatprep.subr.bf16.mxu0 0
        %1692 = vmatpush1.bf16.xpose.msra.mxu0 0
        %1693 = vmatprep.subr.bf16.mxu0 0
        %1694 = vmatpush1.bf16.xpose.msra.mxu0 0
        %1695 = vmatprep.subr.bf16.mxu0 0
        %1696 = vmatpush1.bf16.xpose.msra.mxu0 0
        %1697 = vmatprep.mubr.bf16.mxu0 0
        %1698 = vmatmul.mubr.bf16.gmra.mrb[0].mxu0 %v1648
        %v1699 = vpop.f32.mrb[0].mxu0
        %v1700 = vadd.f32 0.0, %v1699
        %v1701 = vpop.f32.mrb[0].mxu0
        %v1702 = vpop.f32.mrb[0].mxu0
        %v1703 = vadd.f32 0.0, %v1702
        %v1704 = vpop.f32.mrb[0].mxu0
        %1705 = vmatprep.mubr.bf16.mxu0 0
        %1706 = vmatmul.mubr.bf16.gmra.mrb[0].mxu0 %v1651
        %v1707 = vpop.f32.mrb[0].mxu0
        %v1708 = vadd.f32 0.0, %v1707
        %v1709 = vpop.f32.mrb[0].mxu0
        %v1710 = vpop.f32.mrb[0].mxu0
        %v1711 = vadd.f32 0.0, %v1710
        %v1712 = vpop.f32.mrb[0].mxu0
        %1713 = vmatprep.mubr.bf16.mxu0 0
        %1714 = vmatmul.mubr.bf16.gmra.mrb[0].mxu0 %v1654
        %v1715 = vpop.f32.mrb[0].mxu0
        %v1716 = vadd.f32 0.0, %v1715
        %v1717 = vpop.f32.mrb[0].mxu0
        %v1718 = vpop.f32.mrb[0].mxu0
        %v1719 = vadd.f32 0.0, %v1718
        %v1720 = vpop.f32.mrb[0].mxu0
        %1721 = vmatprep.mubr.bf16.mxu0 0
        %1722 = vmatmul.mubr.bf16.gmra.mrb[0].mxu0 %v1657
        %v1723 = vpop.f32.mrb[0].mxu0
        %v1724 = vadd.f32 0.0, %v1723
        %v1725 = vpop.f32.mrb[0].mxu0
        %v1726 = vpop.f32.mrb[0].mxu0
        %v1727 = vadd.f32 0.0, %v1726
        %v1728 = vpop.f32.mrb[0].mxu0
        %1729 = vdwg.mxu0
        %v1730 = vmul.f32 %v1700, 0.35355338
        %v1731 = vmul.f32 %v1703, 0.35355338
        %v1732 = vmul.f32 %v1708, 0.35355338
        %v1733 = vmul.f32 %v1711, 0.35355338
        %v1734 = vmul.f32 %v1716, 0.35355338
        %v1735 = vmul.f32 %v1719, 0.35355338
        %v1736 = vmul.f32 %v1724, 0.35355338
        %v1737 = vmul.f32 %v1727, 0.35355338
        %v1738 = vsel %vm642, %v1730, -inf
        %1739 = vmax.xlane.f32.xlu0 %v1738
        %v1740 = vpop.xlane.xlu0 %1739
        %v1741 = vsel %vm642, %v1731, -inf
        %1742 = vmax.xlane.f32.xlu0 %v1741
        %v1743 = vpop.xlane.xlu0 %1742
        %v1744 = vsel %vm642, %v1732, -inf
        %1745 = vmax.xlane.f32.xlu0 %v1744
        %v1746 = vpop.xlane.xlu0 %1745
        %v1747 = vsel %vm642, %v1733, -inf
        %1748 = vmax.xlane.f32.xlu0 %v1747
        %v1749 = vpop.xlane.xlu0 %1748
        %v1750 = vsel %vm642, %v1734, -inf
        %1751 = vmax.xlane.f32.xlu0 %v1750
        %v1752 = vpop.xlane.xlu0 %1751
        %v1753 = vsel %vm642, %v1735, -inf
        %1754 = vmax.xlane.f32.xlu0 %v1753
        %v1755 = vpop.xlane.xlu0 %1754
        %v1756 = vsel %vm642, %v1736, -inf
        %1757 = vmax.xlane.f32.xlu0 %v1756
        %v1758 = vpop.xlane.xlu0 %1757
        %v1759 = vsel %vm642, %v1737, -inf
        %1760 = vmax.xlane.f32.xlu0 %v1759
        %v1761 = vpop.xlane.xlu0 %1760
        %v1762 = vsub.f32 %v1730, %v1740
        %v1763 = vsub.f32 %v1731, %v1743
        %v1764 = vsub.f32 %v1732, %v1746
        %v1765 = vsub.f32 %v1733, %v1749
        %v1766 = vsub.f32 %v1734, %v1752
        %v1767 = vsub.f32 %v1735, %v1755
        %v1768 = vsub.f32 %v1736, %v1758
        %v1769 = vsub.f32 %v1737, %v1761
        %v1770 = vmul.f32 %v1762, 1.442695
        %v1771 = vpow.pop %v1770
        %v1772 = vmul.f32 %v1763, 1.442695
        %v1773 = vpow.pop %v1772
        %v1774 = vmul.f32 %v1764, 1.442695
        %v1775 = vpow.pop %v1774
        %v1776 = vmul.f32 %v1765, 1.442695
        %v1777 = vpow.pop %v1776
        %v1778 = vmul.f32 %v1766, 1.442695
        %v1779 = vpow.pop %v1778
        %v1780 = vmul.f32 %v1767, 1.442695
        %v1781 = vpow.pop %v1780
        %v1782 = vmul.f32 %v1768, 1.442695
        %v1783 = vpow.pop %v1782
        %v1784 = vmul.f32 %v1769, 1.442695
        %v1785 = vpow.pop %v1784
        %v1786 = vsel %vm642, %v1771, 0.0
        %1787 = vadd.xlane.f32.xlu0 %v1786
        %v1788 = vpop.xlane.xlu0 %1787
        %v1789 = vsel %vm642, %v1773, 0.0
        %1790 = vadd.xlane.f32.xlu0 %v1789
        %v1791 = vpop.xlane.xlu0 %1790
        %v1792 = vsel %vm642, %v1775, 0.0
        %1793 = vadd.xlane.f32.xlu0 %v1792
        %v1794 = vpop.xlane.xlu0 %1793
        %v1795 = vsel %vm642, %v1777, 0.0
        %1796 = vadd.xlane.f32.xlu0 %v1795
        %v1797 = vpop.xlane.xlu0 %1796
        %v1798 = vsel %vm642, %v1779, 0.0
        %1799 = vadd.xlane.f32.xlu0 %v1798
        %v1800 = vpop.xlane.xlu0 %1799
        %v1801 = vsel %vm642, %v1781, 0.0
        %1802 = vadd.xlane.f32.xlu0 %v1801
        %v1803 = vpop.xlane.xlu0 %1802
        %v1804 = vsel %vm642, %v1783, 0.0
        %1805 = vadd.xlane.f32.xlu0 %v1804
        %v1806 = vpop.xlane.xlu0 %1805
        %v1807 = vsel %vm642, %v1785, 0.0
        %1808 = vadd.xlane.f32.xlu0 %v1807
        %v1809 = vpop.xlane.xlu0 %1808
        %v1810 = vrcp.pop %v1788
        %v1811 = vrcp.pop %v1791
        %v1812 = vrcp.pop %v1794
        %v1813 = vrcp.pop %v1797
        %v1814 = vrcp.pop %v1800
        %v1815 = vrcp.pop %v1803
        %v1816 = vrcp.pop %v1806
        %v1817 = vrcp.pop %v1809
        %v1818 = vmul.f32 %v1771, %v1810
        %v1819 = vmul.f32 %v1773, %v1811
        %v1820 = vmul.f32 %v1775, %v1812
        %v1821 = vmul.f32 %v1777, %v1813
        %v1822 = vmul.f32 %v1779, %v1814
        %v1823 = vmul.f32 %v1781, %v1815
        %v1824 = vmul.f32 %v1783, %v1816
        %v1825 = vmul.f32 %v1785, %v1817
        %v1826 = vpack.c.bf16 %v1819, %v1818
        %v1827 = vpack.c.bf16 %v1821, %v1820
        %v1828 = vpack.c.bf16 %v1823, %v1822
        %v1829 = vpack.c.bf16 %v1825, %v1824
        %1830 = vrot.lane.b32.xlu0 %v804, 72
        %v1831 = vpop.permute.xlu0 %1830
        %1832 = vrot.lane.b32.xlu0 %v805, 72
        %v1833 = vpop.permute.xlu0 %1832
        %v1837 = vsel %vm642, %v1826, 0
        %v1840 = vsel %vm642, %v1827, 0
        %v1843 = vsel %vm642, %v1828, 0
        %v1846 = vsel %vm642, %v1829, 0
        %1848 = vmatprep.subr.bf16.mxu0 0
        %1849 = vmatpush1.bf16.msra.mxu0 %v1831
        %1850 = vmatprep.subr.bf16.mxu0 0
        %1851 = vmatpush1.bf16.msra.mxu0 %v1833
        %1852 = vmatprep.subr.bf16.mxu0 0
        %1853 = vmatpush1.bf16.msra.mxu0 0
        %1854 = vmatprep.subr.bf16.mxu0 0
        %1855 = vmatpush1.bf16.msra.mxu0 0
        %1856 = vmatprep.subr.bf16.mxu0 0
        %1857 = vmatpush1.bf16.msra.mxu0 0
        %1858 = vmatprep.subr.bf16.mxu0 0
        %1859 = vmatpush1.bf16.msra.mxu0 0
        %1860 = vmatprep.subr.bf16.mxu0 0
        %1861 = vmatpush1.bf16.msra.mxu0 0
        %1862 = vmatprep.subr.bf16.mxu0 0
        %1863 = vmatpush1.bf16.msra.mxu0 0
        %1864 = vmatprep.subr.bf16.mxu0 0
        %1865 = vmatpush1.bf16.msra.mxu0 0
        %1866 = vmatprep.subr.bf16.mxu0 0
        %1867 = vmatpush1.bf16.msra.mxu0 0
        %1868 = vmatprep.subr.bf16.mxu0 0
        %1869 = vmatpush1.bf16.msra.mxu0 0
        %1870 = vmatprep.subr.bf16.mxu0 0
        %1871 = vmatpush1.bf16.msra.mxu0 0
        %1872 = vmatprep.subr.bf16.mxu0 0
        %1873 = vmatpush1.bf16.msra.mxu0 0
        %1874 = vmatprep.subr.bf16.mxu0 0
        %1875 = vmatpush1.bf16.msra.mxu0 0
        %1876 = vmatprep.subr.bf16.mxu0 0
        %1877 = vmatpush1.bf16.msra.mxu0 0
        %1878 = vmatprep.subr.bf16.mxu0 0
        %1879 = vmatpush1.bf16.msra.mxu0 0
        %1880 = vmatprep.mubr.bf16.mxu0 0
        %1881 = vmatmul.mubr.bf16.gmra.mrb[0].mxu0 %v1837
        %v1882 = vpop.f32.mrb[0].mxu0
        %v1883 = vadd.f32 0.0, %v1882
        %v1884 = vpop.f32.mrb[0].mxu0
        %v1885 = vpop.f32.mrb[0].mxu0
        %v1886 = vadd.f32 0.0, %v1885
        %v1887 = vpop.f32.mrb[0].mxu0
        %1888 = vmatprep.mubr.bf16.mxu0 0
        %1889 = vmatmul.mubr.bf16.gmra.mrb[0].mxu0 %v1840
        %v1890 = vpop.f32.mrb[0].mxu0
        %v1891 = vadd.f32 0.0, %v1890
        %v1892 = vpop.f32.mrb[0].mxu0
        %v1893 = vpop.f32.mrb[0].mxu0
        %v1894 = vadd.f32 0.0, %v1893
        %v1895 = vpop.f32.mrb[0].mxu0
        %1896 = vmatprep.mubr.bf16.mxu0 0
        %1897 = vmatmul.mubr.bf16.gmra.mrb[0].mxu0 %v1843
        %v1898 = vpop.f32.mrb[0].mxu0
        %v1899 = vadd.f32 0.0, %v1898
        %v1900 = vpop.f32.mrb[0].mxu0
        %v1901 = vpop.f32.mrb[0].mxu0
        %v1902 = vadd.f32 0.0, %v1901
        %v1903 = vpop.f32.mrb[0].mxu0
        %1904 = vmatprep.mubr.bf16.mxu0 0
        %1905 = vmatmul.mubr.bf16.gmra.mrb[0].mxu0 %v1846
        %v1906 = vpop.f32.mrb[0].mxu0
        %v1907 = vadd.f32 0.0, %v1906
        %v1908 = vpop.f32.mrb[0].mxu0
        %v1909 = vpop.f32.mrb[0].mxu0
        %v1910 = vadd.f32 0.0, %v1909
        %v1911 = vpop.f32.mrb[0].mxu0
        %1912 = vdwg.mxu0
        %1921 = vrot.lane.b32.xlu0 %v1327, 8
        %v1922 = vpop.permute.xlu0 %1921
        %1923 = vrot.lane.b32.xlu0 %v1330, 8
        %v1924 = vpop.permute.xlu0 %1923
        %1925 = vrot.lane.b32.xlu0 %v1335, 8
        %v1926 = vpop.permute.xlu0 %1925
        %1927 = vrot.lane.b32.xlu0 %v1338, 8
        %v1928 = vpop.permute.xlu0 %1927
        %1929 = vrot.lane.b32.xlu0 %v1343, 8
        %v1930 = vpop.permute.xlu0 %1929
        %1931 = vrot.lane.b32.xlu0 %v1346, 8
        %v1932 = vpop.permute.xlu0 %1931
        %1933 = vrot.lane.b32.xlu0 %v1351, 8
        %v1934 = vpop.permute.xlu0 %1933
        %1935 = vrot.lane.b32.xlu0 %v1354, 8
        %v1936 = vpop.permute.xlu0 %1935
        %1953 = vrot.lane.b32.xlu0 %v1605, 16
        %v1954 = vpop.permute.xlu0 %1953
        %1955 = vrot.lane.b32.xlu0 %v1608, 16
        %v1956 = vpop.permute.xlu0 %1955
        %1957 = vrot.lane.b32.xlu0 %v1613, 16
        %v1958 = vpop.permute.xlu0 %1957
        %1959 = vrot.lane.b32.xlu0 %v1616, 16
        %v1960 = vpop.permute.xlu0 %1959
        %1961 = vrot.lane.b32.xlu0 %v1621, 16
        %v1962 = vpop.permute.xlu0 %1961
        %1963 = vrot.lane.b32.xlu0 %v1624, 16
        %v1964 = vpop.permute.xlu0 %1963
        %1965 = vrot.lane.b32.xlu0 %v1629, 16
        %v1966 = vpop.permute.xlu0 %1965
        %1967 = vrot.lane.b32.xlu0 %v1632, 16
        %v1968 = vpop.permute.xlu0 %1967
        %1985 = vrot.lane.b32.xlu0 %v1883, 24
        %v1986 = vpop.permute.xlu0 %1985
        %1987 = vrot.lane.b32.xlu0 %v1886, 24
        %v1988 = vpop.permute.xlu0 %1987
        %1989 = vrot.lane.b32.xlu0 %v1891, 24
        %v1990 = vpop.permute.xlu0 %1989
        %1991 = vrot.lane.b32.xlu0 %v1894, 24
        %v1992 = vpop.permute.xlu0 %1991
        %1993 = vrot.lane.b32.xlu0 %v1899, 24
        %v1994 = vpop.permute.xlu0 %1993
        %1995 = vrot.lane.b32.xlu0 %v1902, 24
        %v1996 = vpop.permute.xlu0 %1995
        %1997 = vrot.lane.b32.xlu0 %v1907, 24
        %v1998 = vpop.permute.xlu0 %1997
        %1999 = vrot.lane.b32.xlu0 %v1910, 24
        %v2000 = vpop.permute.xlu0 %1999
        %v2009 = vsel %vm806, %v1045, %v1922
        %v2010 = vsel %vm806, %v1048, %v1924
        %v2011 = vsel %vm806, %v1053, %v1926
        %v2012 = vsel %vm806, %v1056, %v1928
        %v2013 = vsel %vm806, %v1061, %v1930
        %v2014 = vsel %vm806, %v1064, %v1932
        %v2015 = vsel %vm806, %v1069, %v1934
        %v2016 = vsel %vm806, %v1072, %v1936
        %vm2017 = vcmask 130048
        %v2018 = vsel %vm2017, %v2009, %v1954
        %v2019 = vsel %vm2017, %v2010, %v1956
        %v2020 = vsel %vm2017, %v2011, %v1958
        %v2021 = vsel %vm2017, %v2012, %v1960
        %v2022 = vsel %vm2017, %v2013, %v1962
        %v2023 = vsel %vm2017, %v2014, %v1964
        %v2024 = vsel %vm2017, %v2015, %v1966
        %v2025 = vsel %vm2017, %v2016, %v1968
        %vm2026 = vcmask 195584
        %v2027 = vsel %vm2026, %v2018, %v1986
        %v2028 = vsel %vm2026, %v2019, %v1988
        %v2029 = vsel %vm2026, %v2020, %v1990
        %v2030 = vsel %vm2026, %v2021, %v1992
        %v2031 = vsel %vm2026, %v2022, %v1994
        %v2032 = vsel %vm2026, %v2023, %v1996
        %v2033 = vsel %vm2026, %v2024, %v1998
        %v2034 = vsel %vm2026, %v2025, %v2000
        %v2035 = vpack.c.bf16 %v2028, %v2027
        %v2036 = vpack.c.bf16 %v2030, %v2029
        %v2037 = vpack.c.bf16 %v2032, %v2031
        %v2038 = vpack.c.bf16 %v2034, %v2033
        %v2039 = vld [vmem:[%s8] sm:$0xf]
        %v2040 = vld [vmem:[%s8 + $0x4] sm:$0xf]
        %v2041 = vld [vmem:[%s8 + $0x8] sm:$0xf]
        %v2042 = vld [vmem:[%s8 + $0xc] sm:$0xf]
        %v2043 = vld [vmem:[%s9] sm:$0x1]
        %v2045 = vlaneseq
        %v2046 = vshrl.u32 %v2045, 7
        %v2047 = vsub.s32 0, %v2046
        %v2048 = vrot.slane %v2043, %v2047
        %v2054 = vunpack.c.l.b16 %v2039
        %v2055 = vunpack.c.l.b16 %v2040
        %v2056 = vunpack.c.l.b16 %v2041
        %v2057 = vunpack.c.l.b16 %v2042
        %v2058 = vpack.c.b16 %v2055, %v2054
        %v2059 = vpack.c.b16 %v2057, %v2056
        %v2063 = vsel %vm642, %v2035, 0
        %v2066 = vsel %vm642, %v2036, 0
        %v2069 = vsel %vm642, %v2037, 0
        %v2072 = vsel %vm642, %v2038, 0
        %2074 = vmatprep.subr.bf16.mxu0 0
        %2075 = vmatpush1.bf16.msra.mxu0 %v2058
        %2076 = vmatprep.subr.bf16.mxu0 0
        %2077 = vmatpush1.bf16.msra.mxu0 %v2059
        %2078 = vmatprep.subr.bf16.mxu0 0
        %2079 = vmatpush1.bf16.msra.mxu0 0
        %2080 = vmatprep.subr.bf16.mxu0 0
        %2081 = vmatpush1.bf16.msra.mxu0 0
        %2082 = vmatprep.subr.bf16.mxu0 0
        %2083 = vmatpush1.bf16.msra.mxu0 0
        %2084 = vmatprep.subr.bf16.mxu0 0
        %2085 = vmatpush1.bf16.msra.mxu0 0
        %2086 = vmatprep.subr.bf16.mxu0 0
        %2087 = vmatpush1.bf16.msra.mxu0 0
        %2088 = vmatprep.subr.bf16.mxu0 0
        %2089 = vmatpush1.bf16.msra.mxu0 0
        %2090 = vmatprep.subr.bf16.mxu0 0
        %2091 = vmatpush1.bf16.msra.mxu0 0
        %2092 = vmatprep.subr.bf16.mxu0 0
        %2093 = vmatpush1.bf16.msra.mxu0 0
        %2094 = vmatprep.subr.bf16.mxu0 0
        %2095 = vmatpush1.bf16.msra.mxu0 0
        %2096 = vmatprep.subr.bf16.mxu0 0
        %2097 = vmatpush1.bf16.msra.mxu0 0
        %2098 = vmatprep.subr.bf16.mxu0 0
        %2099 = vmatpush1.bf16.msra.mxu0 0
        %2100 = vmatprep.subr.bf16.mxu0 0
        %2101 = vmatpush1.bf16.msra.mxu0 0
        %2102 = vmatprep.subr.bf16.mxu0 0
        %2103 = vmatpush1.bf16.msra.mxu0 0
        %2104 = vmatprep.subr.bf16.mxu0 0
        %2105 = vmatpush1.bf16.msra.mxu0 0
        %2106 = vmatprep.mubr.bf16.mxu0 0
        %2107 = vmatmul.mubr.bf16.gmra.mrb[0].mxu0 %v2063
        %v2108 = vpop.f32.mrb[0].mxu0
        %v2109 = vadd.f32 %v2048, %v2108
        %v2110 = vpop.f32.mrb[0].mxu0
        %v2111 = vpop.f32.mrb[0].mxu0
        %v2112 = vadd.f32 %v2048, %v2111
        %v2113 = vpop.f32.mrb[0].mxu0
        %2114 = vmatprep.mubr.bf16.mxu0 0
        %2115 = vmatmul.mubr.bf16.gmra.mrb[0].mxu0 %v2066
        %v2116 = vpop.f32.mrb[0].mxu0
        %v2117 = vadd.f32 %v2048, %v2116
        %v2118 = vpop.f32.mrb[0].mxu0
        %v2119 = vpop.f32.mrb[0].mxu0
        %v2120 = vadd.f32 %v2048, %v2119
        %v2121 = vpop.f32.mrb[0].mxu0
        %2122 = vmatprep.mubr.bf16.mxu0 0
        %2123 = vmatmul.mubr.bf16.gmra.mrb[0].mxu0 %v2069
        %v2124 = vpop.f32.mrb[0].mxu0
        %v2125 = vadd.f32 %v2048, %v2124
        %v2126 = vpop.f32.mrb[0].mxu0
        %v2127 = vpop.f32.mrb[0].mxu0
        %v2128 = vadd.f32 %v2048, %v2127
        %v2129 = vpop.f32.mrb[0].mxu0
        %2130 = vmatprep.mubr.bf16.mxu0 0
        %2131 = vmatmul.mubr.bf16.gmra.mrb[0].mxu0 %v2072
        %v2132 = vpop.f32.mrb[0].mxu0
        %v2133 = vadd.f32 %v2048, %v2132
        %v2134 = vpop.f32.mrb[0].mxu0
        %v2135 = vpop.f32.mrb[0].mxu0
        %v2136 = vadd.f32 %v2048, %v2135
        %v2137 = vpop.f32.mrb[0].mxu0
        %2138 = vdwg.mxu0
        %v2139 = vadd.f32 %v514, %v2109
        %v2140 = vadd.f32 %v515, %v2112
        %v2141 = vadd.f32 %v516, %v2117
        %v2142 = vadd.f32 %v517, %v2120
        %v2143 = vadd.f32 %v518, %v2125
        %v2144 = vadd.f32 %v519, %v2128
        %v2145 = vadd.f32 %v520, %v2133
        %v2146 = vadd.f32 %v521, %v2136
        %v2147 = vsel %vm642, %v2139, 0.0
        %2148 = vadd.xlane.f32.xlu0 %v2147
        %v2149 = vpop.xlane.xlu0 %2148
        %v2150 = vsel %vm642, %v2140, 0.0
        %2151 = vadd.xlane.f32.xlu0 %v2150
        %v2152 = vpop.xlane.xlu0 %2151
        %v2153 = vsel %vm642, %v2141, 0.0
        %2154 = vadd.xlane.f32.xlu0 %v2153
        %v2155 = vpop.xlane.xlu0 %2154
        %v2156 = vsel %vm642, %v2142, 0.0
        %2157 = vadd.xlane.f32.xlu0 %v2156
        %v2158 = vpop.xlane.xlu0 %2157
        %v2159 = vsel %vm642, %v2143, 0.0
        %2160 = vadd.xlane.f32.xlu0 %v2159
        %v2161 = vpop.xlane.xlu0 %2160
        %v2162 = vsel %vm642, %v2144, 0.0
        %2163 = vadd.xlane.f32.xlu0 %v2162
        %v2164 = vpop.xlane.xlu0 %2163
        %v2165 = vsel %vm642, %v2145, 0.0
        %2166 = vadd.xlane.f32.xlu0 %v2165
        %v2167 = vpop.xlane.xlu0 %2166
        %v2168 = vsel %vm642, %v2146, 0.0
        %2169 = vadd.xlane.f32.xlu0 %v2168
        %v2170 = vpop.xlane.xlu0 %2169
        %v2171 = vrcp.pop 32.0
        %v2172 = vmul.f32 %v2149, %v2171
        %v2173 = vmul.f32 %v2152, %v2171
        %v2174 = vmul.f32 %v2155, %v2171
        %v2175 = vmul.f32 %v2158, %v2171
        %v2176 = vmul.f32 %v2161, %v2171
        %v2177 = vmul.f32 %v2164, %v2171
        %v2178 = vmul.f32 %v2167, %v2171
        %v2179 = vmul.f32 %v2170, %v2171
        %v2180 = vsub.f32 %v2139, %v2172
        %v2181 = vsub.f32 %v2140, %v2173
        %v2182 = vsub.f32 %v2141, %v2174
        %v2183 = vsub.f32 %v2142, %v2175
        %v2184 = vsub.f32 %v2143, %v2176
        %v2185 = vsub.f32 %v2144, %v2177
        %v2186 = vsub.f32 %v2145, %v2178
        %v2187 = vsub.f32 %v2146, %v2179
        %v2188 = vmul.f32 %v2180, %v2180
        %v2189 = vmul.f32 %v2181, %v2181
        %v2190 = vmul.f32 %v2182, %v2182
        %v2191 = vmul.f32 %v2183, %v2183
        %v2192 = vmul.f32 %v2184, %v2184
        %v2193 = vmul.f32 %v2185, %v2185
        %v2194 = vmul.f32 %v2186, %v2186
        %v2195 = vmul.f32 %v2187, %v2187
        %v2196 = vsel %vm642, %v2188, 0.0
        %2197 = vadd.xlane.f32.xlu0 %v2196
        %v2198 = vpop.xlane.xlu0 %2197
        %v2199 = vsel %vm642, %v2189, 0.0
        %2200 = vadd.xlane.f32.xlu0 %v2199
        %v2201 = vpop.xlane.xlu0 %2200
        %v2202 = vsel %vm642, %v2190, 0.0
        %2203 = vadd.xlane.f32.xlu0 %v2202
        %v2204 = vpop.xlane.xlu0 %2203
        %v2205 = vsel %vm642, %v2191, 0.0
        %2206 = vadd.xlane.f32.xlu0 %v2205
        %v2207 = vpop.xlane.xlu0 %2206
        %v2208 = vsel %vm642, %v2192, 0.0
        %2209 = vadd.xlane.f32.xlu0 %v2208
        %v2210 = vpop.xlane.xlu0 %2209
        %v2211 = vsel %vm642, %v2193, 0.0
        %2212 = vadd.xlane.f32.xlu0 %v2211
        %v2213 = vpop.xlane.xlu0 %2212
        %v2214 = vsel %vm642, %v2194, 0.0
        %2215 = vadd.xlane.f32.xlu0 %v2214
        %v2216 = vpop.xlane.xlu0 %2215
        %v2217 = vsel %vm642, %v2195, 0.0
        %2218 = vadd.xlane.f32.xlu0 %v2217
        %v2219 = vpop.xlane.xlu0 %2218
        %v2220 = vmul.f32 %v2198, %v2171
        %v2221 = vmul.f32 %v2201, %v2171
        %v2222 = vmul.f32 %v2204, %v2171
        %v2223 = vmul.f32 %v2207, %v2171
        %v2224 = vmul.f32 %v2210, %v2171
        %v2225 = vmul.f32 %v2213, %v2171
        %v2226 = vmul.f32 %v2216, %v2171
        %v2227 = vmul.f32 %v2219, %v2171
        %v2228 = vadd.f32 %v2220, 1e-05
        %v2229 = vadd.f32 %v2221, 1e-05
        %v2230 = vadd.f32 %v2222, 1e-05
        %v2231 = vadd.f32 %v2223, 1e-05
        %v2232 = vadd.f32 %v2224, 1e-05
        %v2233 = vadd.f32 %v2225, 1e-05
        %v2234 = vadd.f32 %v2226, 1e-05
        %v2235 = vadd.f32 %v2227, 1e-05
        %v2236 = vrsqrt.pop %v2228
        %v2237 = vrsqrt.pop %v2229
        %v2238 = vrsqrt.pop %v2230
        %v2239 = vrsqrt.pop %v2231
        %v2240 = vrsqrt.pop %v2232
        %v2241 = vrsqrt.pop %v2233
        %v2242 = vrsqrt.pop %v2234
        %v2243 = vrsqrt.pop %v2235
        %v2244 = vmul.f32 %v2180, %v2236
        %v2245 = vmul.f32 %v2181, %v2237
        %v2246 = vmul.f32 %v2182, %v2238
        %v2247 = vmul.f32 %v2183, %v2239
        %v2248 = vmul.f32 %v2184, %v2240
        %v2249 = vmul.f32 %v2185, %v2241
        %v2250 = vmul.f32 %v2186, %v2242
        %v2251 = vmul.f32 %v2187, %v2243
        %v2252 = vld [vmem:[%s10] sm:$0x1]
        %v2254 = vlaneseq
        %v2255 = vshrl.u32 %v2254, 7
        %v2256 = vsub.s32 0, %v2255
        %v2257 = vrot.slane %v2252, %v2256
        %v2259 = vmul.f32 %v2244, %v2257
        %v2260 = vmul.f32 %v2245, %v2257
        %v2261 = vmul.f32 %v2246, %v2257
        %v2262 = vmul.f32 %v2247, %v2257
        %v2263 = vmul.f32 %v2248, %v2257
        %v2264 = vmul.f32 %v2249, %v2257
        %v2265 = vmul.f32 %v2250, %v2257
        %v2266 = vmul.f32 %v2251, %v2257
        %v2267 = vld [vmem:[%s11] sm:$0x1]
        %v2269 = vlaneseq
        %v2270 = vshrl.u32 %v2269, 7
        %v2271 = vsub.s32 0, %v2270
        %v2272 = vrot.slane %v2267, %v2271
        %v2274 = vadd.f32 %v2259, %v2272
        %v2275 = vadd.f32 %v2260, %v2272
        %v2276 = vadd.f32 %v2261, %v2272
        %v2277 = vadd.f32 %v2262, %v2272
        %v2278 = vadd.f32 %v2263, %v2272
        %v2279 = vadd.f32 %v2264, %v2272
        %v2280 = vadd.f32 %v2265, %v2272
        %v2281 = vadd.f32 %v2266, %v2272
        %2282 = vst.msk [vmem:[#allocation2] sm:$0xff] %vm642, 0.0
        %vm2283 = vcmask 254976
        %2284 = vst.msk [vmem:[#allocation2 + $0x8] sm:$0x3] %vm2283, 0.0
        %2285 = vst.msk [vmem:[#allocation2 + $0x10] sm:$0xff] %vm642, 0.0
        %2286 = vst.msk [vmem:[#allocation2 + $0x18] sm:$0x3] %vm2283, 0.0
        %2287 = vst.msk [vmem:[#allocation2 + $0x20] sm:$0xff] %vm642, 0.0
        %2288 = vst.msk [vmem:[#allocation2 + $0x28] sm:$0x3] %vm2283, 0.0
        %2289 = vst.msk [vmem:[#allocation2 + $0x30] sm:$0xff] %vm642, 0.0
        %2290 = vst.msk [vmem:[#allocation2 + $0x38] sm:$0x3] %vm2283, 0.0
        %2291 = vst.msk [vmem:[#allocation2 + $0x40] sm:$0xff] %vm642, 0.0
        %2292 = vst.msk [vmem:[#allocation2 + $0x48] sm:$0x3] %vm2283, 0.0
        %2293 = vst.msk [vmem:[#allocation2 + $0x50] sm:$0xff] %vm642, 0.0
        %2294 = vst.msk [vmem:[#allocation2 + $0x58] sm:$0x3] %vm2283, 0.0
        %2295 = vst.msk [vmem:[#allocation2 + $0x60] sm:$0xff] %vm642, 0.0
        %2296 = vst.msk [vmem:[#allocation2 + $0x68] sm:$0x3] %vm2283, 0.0
        %2297 = vst.msk [vmem:[#allocation2 + $0x70] sm:$0xff] %vm642, 0.0
        %2298 = vst.msk [vmem:[#allocation2 + $0x78] sm:$0x3] %vm2283, 0.0
        %2299 = vst.msk [vmem:[#allocation2 + $0x80] sm:$0xff] %vm642, 0.0
        %2300 = vst.msk [vmem:[#allocation2 + $0x88] sm:$0x3] %vm2283, 0.0
        %2301 = vst.msk [vmem:[#allocation2 + $0x90] sm:$0xff] %vm642, 0.0
        %2302 = vst.msk [vmem:[#allocation2 + $0x98] sm:$0x3] %vm2283, 0.0
        %s2303 = scalar_lea.vmem [#allocation2], 16
        %2304 = vst.msk [vmem:[%s2303 + $0x1] sm:$0xff] %vm642, %v2274
        %2305 = vst.msk [vmem:[%s2303 + $0x11] sm:$0xff] %vm642, %v2275
        %2306 = vst.msk [vmem:[%s2303 + $0x21] sm:$0xff] %vm642, %v2276
        %2307 = vst.msk [vmem:[%s2303 + $0x31] sm:$0xff] %vm642, %v2277
        %2308 = vst.msk [vmem:[%s2303 + $0x41] sm:$0xff] %vm642, %v2278
        %2309 = vst.msk [vmem:[%s2303 + $0x51] sm:$0xff] %vm642, %v2279
        %2310 = vst.msk [vmem:[%s2303 + $0x61] sm:$0xff] %vm642, %v2280
        %2311 = vst.msk [vmem:[%s2303 + $0x71] sm:$0xff] %vm642, %v2281
        %v2312 = vld [vmem:[#allocation2] sm:$0xff]
        %v2313 = vld [vmem:[#allocation2 + $0x10] sm:$0xff]
        %v2314 = vld [vmem:[#allocation2 + $0x20] sm:$0xff]
        %v2315 = vld [vmem:[#allocation2 + $0x30] sm:$0xff]
        %v2316 = vld [vmem:[#allocation2 + $0x40] sm:$0xff]
        %v2317 = vld [vmem:[#allocation2 + $0x50] sm:$0xff]
        %v2318 = vld [vmem:[#allocation2 + $0x60] sm:$0xff]
        %v2319 = vld [vmem:[#allocation2 + $0x70] sm:$0xff]
        %v2320 = vld [vmem:[#allocation2 + $0x1] sm:$0xff]
        %v2321 = vld [vmem:[#allocation2 + $0x11] sm:$0xff]
        %v2322 = vld [vmem:[#allocation2 + $0x21] sm:$0xff]
        %v2323 = vld [vmem:[#allocation2 + $0x31] sm:$0xff]
        %v2324 = vld [vmem:[#allocation2 + $0x41] sm:$0xff]
        %v2325 = vld [vmem:[#allocation2 + $0x51] sm:$0xff]
        %v2326 = vld [vmem:[#allocation2 + $0x61] sm:$0xff]
        %v2327 = vld [vmem:[#allocation2 + $0x71] sm:$0xff]
        %v2328 = vld [vmem:[#allocation2 + $0x2] sm:$0xff]
        %v2329 = vld [vmem:[#allocation2 + $0x12] sm:$0xff]
        %v2330 = vld [vmem:[#allocation2 + $0x22] sm:$0xff]
        %v2331 = vld [vmem:[#allocation2 + $0x32] sm:$0xff]
        %v2332 = vld [vmem:[#allocation2 + $0x42] sm:$0xff]
        %v2333 = vld [vmem:[#allocation2 + $0x52] sm:$0xff]
        %v2334 = vld [vmem:[#allocation2 + $0x62] sm:$0xff]
        %v2335 = vld [vmem:[#allocation2 + $0x72] sm:$0xff]
        %v2336 = vld [vmem:[%s2303] sm:$0xff]
        %v2337 = vld [vmem:[%s2303 + $0x10] sm:$0xff]
        %v2338 = vld [vmem:[%s2303 + $0x20] sm:$0xff]
        %v2339 = vld [vmem:[%s2303 + $0x30] sm:$0xff]
        %v2340 = vld [vmem:[%s2303 + $0x40] sm:$0xff]
        %v2341 = vld [vmem:[%s2303 + $0x50] sm:$0xff]
        %v2342 = vld [vmem:[%s2303 + $0x60] sm:$0xff]
        %v2343 = vld [vmem:[%s2303 + $0x70] sm:$0xff]
        %v2344 = vld [vmem:[%s2303 + $0x1] sm:$0xff]
        %v2345 = vld [vmem:[%s2303 + $0x11] sm:$0xff]
        %v2346 = vld [vmem:[%s2303 + $0x21] sm:$0xff]
        %v2347 = vld [vmem:[%s2303 + $0x31] sm:$0xff]
        %v2348 = vld [vmem:[%s2303 + $0x41] sm:$0xff]
        %v2349 = vld [vmem:[%s2303 + $0x51] sm:$0xff]
        %v2350 = vld [vmem:[%s2303 + $0x61] sm:$0xff]
        %v2351 = vld [vmem:[%s2303 + $0x71] sm:$0xff]
        %v2352 = vld [vmem:[%s2303 + $0x2] sm:$0xff]
        %v2353 = vld [vmem:[%s2303 + $0x12] sm:$0xff]
        %v2354 = vld [vmem:[%s2303 + $0x22] sm:$0xff]
        %v2355 = vld [vmem:[%s2303 + $0x32] sm:$0xff]
        %v2356 = vld [vmem:[%s2303 + $0x42] sm:$0xff]
        %v2357 = vld [vmem:[%s2303 + $0x52] sm:$0xff]
        %v2358 = vld [vmem:[%s2303 + $0x62] sm:$0xff]
        %v2359 = vld [vmem:[%s2303 + $0x72] sm:$0xff]
        %s2360 = scalar_lea.vmem [#allocation2], 32
        %v2361 = vld [vmem:[%s2360] sm:$0xff]
        %v2362 = vld [vmem:[%s2360 + $0x10] sm:$0xff]
        %v2363 = vld [vmem:[%s2360 + $0x20] sm:$0xff]
        %v2364 = vld [vmem:[%s2360 + $0x30] sm:$0xff]
        %v2365 = vld [vmem:[%s2360 + $0x40] sm:$0xff]
        %v2366 = vld [vmem:[%s2360 + $0x50] sm:$0xff]
        %v2367 = vld [vmem:[%s2360 + $0x60] sm:$0xff]
        %v2368 = vld [vmem:[%s2360 + $0x70] sm:$0xff]
        %v2369 = vld [vmem:[%s2360 + $0x1] sm:$0xff]
        %v2370 = vld [vmem:[%s2360 + $0x11] sm:$0xff]
        %v2371 = vld [vmem:[%s2360 + $0x21] sm:$0xff]
        %v2372 = vld [vmem:[%s2360 + $0x31] sm:$0xff]
        %v2373 = vld [vmem:[%s2360 + $0x41] sm:$0xff]
        %v2374 = vld [vmem:[%s2360 + $0x51] sm:$0xff]
        %v2375 = vld [vmem:[%s2360 + $0x61] sm:$0xff]
        %v2376 = vld [vmem:[%s2360 + $0x71] sm:$0xff]
        %v2377 = vld [vmem:[%s2360 + $0x2] sm:$0xff]
        %v2378 = vld [vmem:[%s2360 + $0x12] sm:$0xff]
        %v2379 = vld [vmem:[%s2360 + $0x22] sm:$0xff]
        %v2380 = vld [vmem:[%s2360 + $0x32] sm:$0xff]
        %v2381 = vld [vmem:[%s2360 + $0x42] sm:$0xff]
        %v2382 = vld [vmem:[%s2360 + $0x52] sm:$0xff]
        %v2383 = vld [vmem:[%s2360 + $0x62] sm:$0xff]
        %v2384 = vld [vmem:[%s2360 + $0x72] sm:$0xff]
        %2393 = vrot.lane.b32.xlu0 %v2320, 32
        %v2394 = vpop.permute.xlu0 %2393
        %2395 = vrot.lane.b32.xlu0 %v2321, 32
        %v2396 = vpop.permute.xlu0 %2395
        %2397 = vrot.lane.b32.xlu0 %v2322, 32
        %v2398 = vpop.permute.xlu0 %2397
        %2399 = vrot.lane.b32.xlu0 %v2323, 32
        %v2400 = vpop.permute.xlu0 %2399
        %2401 = vrot.lane.b32.xlu0 %v2324, 32
        %v2402 = vpop.permute.xlu0 %2401
        %2403 = vrot.lane.b32.xlu0 %v2325, 32
        %v2404 = vpop.permute.xlu0 %2403
        %2405 = vrot.lane.b32.xlu0 %v2326, 32
        %v2406 = vpop.permute.xlu0 %2405
        %2407 = vrot.lane.b32.xlu0 %v2327, 32
        %v2408 = vpop.permute.xlu0 %2407
        %2425 = vrot.lane.b32.xlu0 %v2328, 64
        %v2426 = vpop.permute.xlu0 %2425
        %2427 = vrot.lane.b32.xlu0 %v2329, 64
        %v2428 = vpop.permute.xlu0 %2427
        %2429 = vrot.lane.b32.xlu0 %v2330, 64
        %v2430 = vpop.permute.xlu0 %2429
        %2431 = vrot.lane.b32.xlu0 %v2331, 64
        %v2432 = vpop.permute.xlu0 %2431
        %2433 = vrot.lane.b32.xlu0 %v2332, 64
        %v2434 = vpop.permute.xlu0 %2433
        %2435 = vrot.lane.b32.xlu0 %v2333, 64
        %v2436 = vpop.permute.xlu0 %2435
        %2437 = vrot.lane.b32.xlu0 %v2334, 64
        %v2438 = vpop.permute.xlu0 %2437
        %2439 = vrot.lane.b32.xlu0 %v2335, 64
        %v2440 = vpop.permute.xlu0 %2439
        %2457 = vrot.lane.b32.xlu0 %v2336, 96
        %v2458 = vpop.permute.xlu0 %2457
        %2459 = vrot.lane.b32.xlu0 %v2337, 96
        %v2460 = vpop.permute.xlu0 %2459
        %2461 = vrot.lane.b32.xlu0 %v2338, 96
        %v2462 = vpop.permute.xlu0 %2461
        %2463 = vrot.lane.b32.xlu0 %v2339, 96
        %v2464 = vpop.permute.xlu0 %2463
        %2465 = vrot.lane.b32.xlu0 %v2340, 96
        %v2466 = vpop.permute.xlu0 %2465
        %2467 = vrot.lane.b32.xlu0 %v2341, 96
        %v2468 = vpop.permute.xlu0 %2467
        %2469 = vrot.lane.b32.xlu0 %v2342, 96
        %v2470 = vpop.permute.xlu0 %2469
        %2471 = vrot.lane.b32.xlu0 %v2343, 96
        %v2472 = vpop.permute.xlu0 %2471
        %2489 = vrot.lane.b32.xlu0 %v2352, 32
        %v2490 = vpop.permute.xlu0 %2489
        %2491 = vrot.lane.b32.xlu0 %v2353, 32
        %v2492 = vpop.permute.xlu0 %2491
        %2493 = vrot.lane.b32.xlu0 %v2354, 32
        %v2494 = vpop.permute.xlu0 %2493
        %2495 = vrot.lane.b32.xlu0 %v2355, 32
        %v2496 = vpop.permute.xlu0 %2495
        %2497 = vrot.lane.b32.xlu0 %v2356, 32
        %v2498 = vpop.permute.xlu0 %2497
        %2499 = vrot.lane.b32.xlu0 %v2357, 32
        %v2500 = vpop.permute.xlu0 %2499
        %2501 = vrot.lane.b32.xlu0 %v2358, 32
        %v2502 = vpop.permute.xlu0 %2501
        %2503 = vrot.lane.b32.xlu0 %v2359, 32
        %v2504 = vpop.permute.xlu0 %2503
        %2521 = vrot.lane.b32.xlu0 %v2361, 64
        %v2522 = vpop.permute.xlu0 %2521
        %2523 = vrot.lane.b32.xlu0 %v2362, 64
        %v2524 = vpop.permute.xlu0 %2523
        %2525 = vrot.lane.b32.xlu0 %v2363, 64
        %v2526 = vpop.permute.xlu0 %2525
        %2527 = vrot.lane.b32.xlu0 %v2364, 64
        %v2528 = vpop.permute.xlu0 %2527
        %2529 = vrot.lane.b32.xlu0 %v2365, 64
        %v2530 = vpop.permute.xlu0 %2529
        %2531 = vrot.lane.b32.xlu0 %v2366, 64
        %v2532 = vpop.permute.xlu0 %2531
        %2533 = vrot.lane.b32.xlu0 %v2367, 64
        %v2534 = vpop.permute.xlu0 %2533
        %2535 = vrot.lane.b32.xlu0 %v2368, 64
        %v2536 = vpop.permute.xlu0 %2535
        %2553 = vrot.lane.b32.xlu0 %v2369, 96
        %v2554 = vpop.permute.xlu0 %2553
        %2555 = vrot.lane.b32.xlu0 %v2370, 96
        %v2556 = vpop.permute.xlu0 %2555
        %2557 = vrot.lane.b32.xlu0 %v2371, 96
        %v2558 = vpop.permute.xlu0 %2557
        %2559 = vrot.lane.b32.xlu0 %v2372, 96
        %v2560 = vpop.permute.xlu0 %2559
        %2561 = vrot.lane.b32.xlu0 %v2373, 96
        %v2562 = vpop.permute.xlu0 %2561
        %2563 = vrot.lane.b32.xlu0 %v2374, 96
        %v2564 = vpop.permute.xlu0 %2563
        %2565 = vrot.lane.b32.xlu0 %v2375, 96
        %v2566 = vpop.permute.xlu0 %2565
        %2567 = vrot.lane.b32.xlu0 %v2376, 96
        %v2568 = vpop.permute.xlu0 %2567
        %v2577 = vsel %vm642, %v2312, %v2394
        %v2578 = vsel %vm642, %v2313, %v2396
        %v2579 = vsel %vm642, %v2314, %v2398
        %v2580 = vsel %vm642, %v2315, %v2400
        %v2581 = vsel %vm642, %v2316, %v2402
        %v2582 = vsel %vm642, %v2317, %v2404
        %v2583 = vsel %vm642, %v2318, %v2406
        %v2584 = vsel %vm642, %v2319, %v2408
        %vm2585 = vcmask 523264
        %v2586 = vsel %vm2585, %v2577, %v2426
        %v2587 = vsel %vm2585, %v2578, %v2428
        %v2588 = vsel %vm2585, %v2579, %v2430
        %v2589 = vsel %vm2585, %v2580, %v2432
        %v2590 = vsel %vm2585, %v2581, %v2434
        %v2591 = vsel %vm2585, %v2582, %v2436
        %v2592 = vsel %vm2585, %v2583, %v2438
        %v2593 = vsel %vm2585, %v2584, %v2440
        %vm2594 = vcmask 785408
        %v2595 = vsel %vm2594, %v2586, %v2458
        %v2596 = vsel %vm2594, %v2587, %v2460
        %v2597 = vsel %vm2594, %v2588, %v2462
        %v2598 = vsel %vm2594, %v2589, %v2464
        %v2599 = vsel %vm2594, %v2590, %v2466
        %v2600 = vsel %vm2594, %v2591, %v2468
        %v2601 = vsel %vm2594, %v2592, %v2470
        %v2602 = vsel %vm2594, %v2593, %v2472
        %v2603 = vsel %vm642, %v2344, %v2490
        %v2604 = vsel %vm642, %v2345, %v2492
        %v2605 = vsel %vm642, %v2346, %v2494
        %v2606 = vsel %vm642, %v2347, %v2496
        %v2607 = vsel %vm642, %v2348, %v2498
        %v2608 = vsel %vm642, %v2349, %v2500
        %v2609 = vsel %vm642, %v2350, %v2502
        %v2610 = vsel %vm642, %v2351, %v2504
        %v2611 = vsel %vm2585, %v2603, %v2522
        %v2612 = vsel %vm2585, %v2604, %v2524
        %v2613 = vsel %vm2585, %v2605, %v2526
        %v2614 = vsel %vm2585, %v2606, %v2528
        %v2615 = vsel %vm2585, %v2607, %v2530
        %v2616 = vsel %vm2585, %v2608, %v2532
        %v2617 = vsel %vm2585, %v2609, %v2534
        %v2618 = vsel %vm2585, %v2610, %v2536
        %v2619 = vsel %vm2594, %v2611, %v2554
        %v2620 = vsel %vm2594, %v2612, %v2556
        %v2621 = vsel %vm2594, %v2613, %v2558
        %v2622 = vsel %vm2594, %v2614, %v2560
        %v2623 = vsel %vm2594, %v2615, %v2562
        %v2624 = vsel %vm2594, %v2616, %v2564
        %v2625 = vsel %vm2594, %v2617, %v2566
        %v2626 = vsel %vm2594, %v2618, %v2568
        %v2627 = vpack.c.bf16 %v2596, %v2595
        %v2628 = vpack.c.bf16 %v2620, %v2619
        %v2629 = vpack.c.bf16 %v2378, %v2377
        %v2630 = vpack.c.bf16 %v2598, %v2597
        %v2631 = vpack.c.bf16 %v2622, %v2621
        %v2632 = vpack.c.bf16 %v2380, %v2379
        %v2633 = vpack.c.bf16 %v2600, %v2599
        %v2634 = vpack.c.bf16 %v2624, %v2623
        %v2635 = vpack.c.bf16 %v2382, %v2381
        %v2636 = vpack.c.bf16 %v2602, %v2601
        %v2637 = vpack.c.bf16 %v2626, %v2625
        %v2638 = vpack.c.bf16 %v2384, %v2383
        %v2639 = vld [vmem:[%s12] sm:$0xf]
        %v2640 = vld [vmem:[%s12 + $0x4] sm:$0xf]
        %v2641 = vld [vmem:[%s12 + $0x8] sm:$0xf]
        %v2642 = vld [vmem:[%s12 + $0xc] sm:$0xf]
        %v2643 = vld [vmem:[%s12 + $0x10] sm:$0xf]
        %v2644 = vld [vmem:[%s12 + $0x14] sm:$0xf]
        %v2645 = vld [vmem:[%s12 + $0x18] sm:$0xf]
        %v2646 = vld [vmem:[%s12 + $0x1c] sm:$0xf]
        %v2647 = vld [vmem:[%s12 + $0x20] sm:$0xf]
        %v2648 = vld [vmem:[%s12 + $0x24] sm:$0xf]
        %v2649 = vld [vmem:[%s12 + $0x28] sm:$0xf]
        %v2650 = vld [vmem:[%s12 + $0x2c] sm:$0xf]
        %v2651 = vld [vmem:[%s12 + $0x30] sm:$0xf]
        %v2652 = vld [vmem:[%s12 + $0x34] sm:$0xf]
        %v2653 = vld [vmem:[%s12 + $0x38] sm:$0xf]
        %v2654 = vld [vmem:[%s12 + $0x3c] sm:$0xf]
        %v2655 = vld [vmem:[%s12 + $0x40] sm:$0xf]
        %v2656 = vld [vmem:[%s12 + $0x44] sm:$0xf]
        %v2657 = vld [vmem:[%s12 + $0x48] sm:$0xf]
        %v2658 = vld [vmem:[%s12 + $0x4c] sm:$0xf]
        %v2659 = vld [vmem:[%s12 + $0x50] sm:$0xf]
        %v2660 = vld [vmem:[%s12 + $0x54] sm:$0xf]
        %v2661 = vld [vmem:[%s12 + $0x58] sm:$0xf]
        %v2662 = vld [vmem:[%s12 + $0x5c] sm:$0xf]
        %v2663 = vld [vmem:[%s12 + $0x60] sm:$0xf]
        %v2664 = vld [vmem:[%s12 + $0x64] sm:$0xf]
        %v2665 = vld [vmem:[%s12 + $0x68] sm:$0xf]
        %v2666 = vld [vmem:[%s12 + $0x6c] sm:$0xf]
        %v2667 = vld [vmem:[%s12 + $0x70] sm:$0xf]
        %v2668 = vld [vmem:[%s12 + $0x74] sm:$0xf]
        %v2669 = vld [vmem:[%s12 + $0x78] sm:$0xf]
        %v2670 = vld [vmem:[%s12 + $0x7c] sm:$0xf]
        %v2671 = vld [vmem:[%s12 + $0x80] sm:$0xf]
        %v2672 = vld [vmem:[%s12 + $0x84] sm:$0xf]
        %v2673 = vld [vmem:[%s12 + $0x88] sm:$0xf]
        %v2674 = vld [vmem:[%s12 + $0x8c] sm:$0xf]
        %v2711 = vunpack.c.l.b16 %v2639
        %v2712 = vunpack.c.l.b16 %v2640
        %v2713 = vunpack.c.l.b16 %v2641
        %v2714 = vunpack.c.l.b16 %v2642
        %v2715 = vunpack.c.l.b16 %v2643
        %v2716 = vunpack.c.l.b16 %v2644
        %v2717 = vunpack.c.l.b16 %v2645
        %v2718 = vunpack.c.l.b16 %v2646
        %v2719 = vunpack.c.l.b16 %v2647
        %v2720 = vunpack.c.l.b16 %v2648
        %v2721 = vunpack.c.l.b16 %v2649
        %v2722 = vunpack.c.l.b16 %v2650
        %v2723 = vunpack.c.l.b16 %v2651
        %v2724 = vunpack.c.l.b16 %v2652
        %v2725 = vunpack.c.l.b16 %v2653
        %v2726 = vunpack.c.l.b16 %v2654
        %v2727 = vunpack.c.l.b16 %v2655
        %v2728 = vunpack.c.l.b16 %v2656
        %v2729 = vunpack.c.l.b16 %v2657
        %v2730 = vunpack.c.l.b16 %v2658
        %v2731 = vunpack.c.l.b16 %v2659
        %v2732 = vunpack.c.l.b16 %v2660
        %v2733 = vunpack.c.l.b16 %v2661
        %v2734 = vunpack.c.l.b16 %v2662
        %v2735 = vunpack.c.l.b16 %v2663
        %v2736 = vunpack.c.l.b16 %v2664
        %v2737 = vunpack.c.l.b16 %v2665
        %v2738 = vunpack.c.l.b16 %v2666
        %v2739 = vunpack.c.l.b16 %v2667
        %v2740 = vunpack.c.l.b16 %v2668
        %v2741 = vunpack.c.l.b16 %v2669
        %v2742 = vunpack.c.l.b16 %v2670
        %v2743 = vunpack.c.l.b16 %v2671
        %v2744 = vunpack.c.l.b16 %v2672
        %v2745 = vunpack.c.l.b16 %v2673
        %v2746 = vunpack.c.l.b16 %v2674
        %v2747 = vpack.c.b16 %v2712, %v2711
        %v2748 = vpack.c.b16 %v2714, %v2713
        %v2749 = vpack.c.b16 %v2716, %v2715
        %v2750 = vpack.c.b16 %v2718, %v2717
        %v2751 = vpack.c.b16 %v2720, %v2719
        %v2752 = vpack.c.b16 %v2722, %v2721
        %v2753 = vpack.c.b16 %v2724, %v2723
        %v2754 = vpack.c.b16 %v2726, %v2725
        %v2755 = vpack.c.b16 %v2728, %v2727
        %v2756 = vpack.c.b16 %v2730, %v2729
        %v2757 = vpack.c.b16 %v2732, %v2731
        %v2758 = vpack.c.b16 %v2734, %v2733
        %v2759 = vpack.c.b16 %v2736, %v2735
        %v2760 = vpack.c.b16 %v2738, %v2737
        %v2761 = vpack.c.b16 %v2740, %v2739
        %v2762 = vpack.c.b16 %v2742, %v2741
        %v2763 = vpack.c.b16 %v2744, %v2743
        %v2764 = vpack.c.b16 %v2746, %v2745
        %v2784 = vsel %vm642, %v2629, 0
        %v2787 = vsel %vm642, %v2632, 0
        %v2790 = vsel %vm642, %v2635, 0
        %v2793 = vsel %vm642, %v2638, 0
        %2795 = vmatprep.subr.bf16.mxu0 0
        %2796 = vmatpush1.bf16.msra.mxu0 %v2747
        %2797 = vmatprep.subr.bf16.mxu0 0
        %2798 = vmatpush1.bf16.msra.mxu0 %v2748
        %2799 = vmatprep.subr.bf16.mxu0 0
        %2800 = vmatpush1.bf16.msra.mxu0 %v2749
        %2801 = vmatprep.subr.bf16.mxu0 0
        %2802 = vmatpush1.bf16.msra.mxu0 %v2750
        %2803 = vmatprep.subr.bf16.mxu0 0
        %2804 = vmatpush1.bf16.msra.mxu0 %v2751
        %2805 = vmatprep.subr.bf16.mxu0 0
        %2806 = vmatpush1.bf16.msra.mxu0 %v2752
        %2807 = vmatprep.subr.bf16.mxu0 0
        %2808 = vmatpush1.bf16.msra.mxu0 %v2753
        %2809 = vmatprep.subr.bf16.mxu0 0
        %2810 = vmatpush1.bf16.msra.mxu0 %v2754
        %2811 = vmatprep.subr.bf16.mxu0 0
        %2812 = vmatpush1.bf16.msra.mxu0 %v2755
        %2813 = vmatprep.subr.bf16.mxu0 0
        %2814 = vmatpush1.bf16.msra.mxu0 %v2756
        %2815 = vmatprep.subr.bf16.mxu0 0
        %2816 = vmatpush1.bf16.msra.mxu0 %v2757
        %2817 = vmatprep.subr.bf16.mxu0 0
        %2818 = vmatpush1.bf16.msra.mxu0 %v2758
        %2819 = vmatprep.subr.bf16.mxu0 0
        %2820 = vmatpush1.bf16.msra.mxu0 %v2759
        %2821 = vmatprep.subr.bf16.mxu0 0
        %2822 = vmatpush1.bf16.msra.mxu0 %v2760
        %2823 = vmatprep.subr.bf16.mxu0 0
        %2824 = vmatpush1.bf16.msra.mxu0 %v2761
        %2825 = vmatprep.subr.bf16.mxu0 0
        %2826 = vmatpush1.bf16.msra.mxu0 %v2762
        %2827 = vmatprep.mubr.bf16.mxu0 %v2628
        %2828 = vmatmul.mubr.bf16.gmra.mrb[0].mxu0 %v2627
        %v2829 = vpop.f32.mrb[0].mxu0
        %v2830 = vadd.f32 0.0, %v2829
        %v2831 = vpop.f32.mrb[0].mxu0
        %v2832 = vpop.f32.mrb[0].mxu0
        %v2833 = vadd.f32 0.0, %v2832
        %v2834 = vpop.f32.mrb[0].mxu0
        %2835 = vmatprep.mubr.bf16.mxu0 %v2631
        %2836 = vmatmul.mubr.bf16.gmra.mrb[0].mxu0 %v2630
        %v2837 = vpop.f32.mrb[0].mxu0
        %v2838 = vadd.f32 0.0, %v2837
        %v2839 = vpop.f32.mrb[0].mxu0
        %v2840 = vpop.f32.mrb[0].mxu0
        %v2841 = vadd.f32 0.0, %v2840
        %v2842 = vpop.f32.mrb[0].mxu0
        %2843 = vmatprep.mubr.bf16.mxu0 %v2634
        %2844 = vmatmul.mubr.bf16.gmra.mrb[0].mxu0 %v2633
        %v2845 = vpop.f32.mrb[0].mxu0
        %v2846 = vadd.f32 0.0, %v2845
        %v2847 = vpop.f32.mrb[0].mxu0
        %v2848 = vpop.f32.mrb[0].mxu0
        %v2849 = vadd.f32 0.0, %v2848
        %v2850 = vpop.f32.mrb[0].mxu0
        %2851 = vmatprep.mubr.bf16.mxu0 %v2637
        %2852 = vmatmul.mubr.bf16.gmra.mrb[0].mxu0 %v2636
        %v2853 = vpop.f32.mrb[0].mxu0
        %v2854 = vadd.f32 0.0, %v2853
        %v2855 = vpop.f32.mrb[0].mxu0
        %v2856 = vpop.f32.mrb[0].mxu0
        %v2857 = vadd.f32 0.0, %v2856
        %v2858 = vpop.f32.mrb[0].mxu0
        %2859 = vdwg.mxu0
        %2860 = vmatprep.subr.bf16.mxu0 0
        %2861 = vmatpush1.bf16.msra.mxu0 %v2763
        %2862 = vmatprep.subr.bf16.mxu0 0
        %2863 = vmatpush1.bf16.msra.mxu0 %v2764
        %2864 = vmatprep.subr.bf16.mxu0 0
        %2865 = vmatpush1.bf16.msra.mxu0 0
        %2866 = vmatprep.subr.bf16.mxu0 0
        %2867 = vmatpush1.bf16.msra.mxu0 0
        %2868 = vmatprep.subr.bf16.mxu0 0
        %2869 = vmatpush1.bf16.msra.mxu0 0
        %2870 = vmatprep.subr.bf16.mxu0 0
        %2871 = vmatpush1.bf16.msra.mxu0 0
        %2872 = vmatprep.subr.bf16.mxu0 0
        %2873 = vmatpush1.bf16.msra.mxu0 0
        %2874 = vmatprep.subr.bf16.mxu0 0
        %2875 = vmatpush1.bf16.msra.mxu0 0
        %2876 = vmatprep.subr.bf16.mxu0 0
        %2877 = vmatpush1.bf16.msra.mxu0 0
        %2878 = vmatprep.subr.bf16.mxu0 0
        %2879 = vmatpush1.bf16.msra.mxu0 0
        %2880 = vmatprep.subr.bf16.mxu0 0
        %2881 = vmatpush1.bf16.msra.mxu0 0
        %2882 = vmatprep.subr.bf16.mxu0 0
        %2883 = vmatpush1.bf16.msra.mxu0 0
        %2884 = vmatprep.subr.bf16.mxu0 0
        %2885 = vmatpush1.bf16.msra.mxu0 0
        %2886 = vmatprep.subr.bf16.mxu0 0
        %2887 = vmatpush1.bf16.msra.mxu0 0
        %2888 = vmatprep.subr.bf16.mxu0 0
        %2889 = vmatpush1.bf16.msra.mxu0 0
        %2890 = vmatprep.subr.bf16.mxu0 0
        %2891 = vmatpush1.bf16.msra.mxu0 0
        %2892 = vmatprep.mubr.bf16.mxu0 0
        %2893 = vmatmul.mubr.bf16.gmra.mrb[0].mxu0 %v2784
        %v2894 = vpop.f32.mrb[0].mxu0
        %v2895 = vadd.f32 %v2830, %v2894
        %v2896 = vpop.f32.mrb[0].mxu0
        %v2897 = vpop.f32.mrb[0].mxu0
        %v2898 = vadd.f32 %v2833, %v2897
        %v2899 = vpop.f32.mrb[0].mxu0
        %2900 = vmatprep.mubr.bf16.mxu0 0
        %2901 = vmatmul.mubr.bf16.gmra.mrb[0].mxu0 %v2787
        %v2902 = vpop.f32.mrb[0].mxu0
        %v2903 = vadd.f32 %v2838, %v2902
        %v2904 = vpop.f32.mrb[0].mxu0
        %v2905 = vpop.f32.mrb[0].mxu0
        %v2906 = vadd.f32 %v2841, %v2905
        %v2907 = vpop.f32.mrb[0].mxu0
        %2908 = vmatprep.mubr.bf16.mxu0 0
        %2909 = vmatmul.mubr.bf16.gmra.mrb[0].mxu0 %v2790
        %v2910 = vpop.f32.mrb[0].mxu0
        %v2911 = vadd.f32 %v2846, %v2910
        %v2912 = vpop.f32.mrb[0].mxu0
        %v2913 = vpop.f32.mrb[0].mxu0
        %v2914 = vadd.f32 %v2849, %v2913
        %v2915 = vpop.f32.mrb[0].mxu0
        %2916 = vmatprep.mubr.bf16.mxu0 0
        %2917 = vmatmul.mubr.bf16.gmra.mrb[0].mxu0 %v2793
        %v2918 = vpop.f32.mrb[0].mxu0
        %v2919 = vadd.f32 %v2854, %v2918
        %v2920 = vpop.f32.mrb[0].mxu0
        %v2921 = vpop.f32.mrb[0].mxu0
        %v2922 = vadd.f32 %v2857, %v2921
        %v2923 = vpop.f32.mrb[0].mxu0
        %2924 = vdwg.mxu0
        %v2925 = vld [vmem:[%s13] sm:$0x1]
        %v2927 = vlaneseq
        %v2928 = vshrl.u32 %v2927, 7
        %v2929 = vsub.s32 0, %v2928
        %v2930 = vrot.slane %v2925, %v2929
        %v2932 = vmul.f32 %v2895, %v2930
        %v2933 = vmul.f32 %v2898, %v2930
        %v2934 = vmul.f32 %v2903, %v2930
        %v2935 = vmul.f32 %v2906, %v2930
        %v2936 = vmul.f32 %v2911, %v2930
        %v2937 = vmul.f32 %v2914, %v2930
        %v2938 = vmul.f32 %v2919, %v2930
        %v2939 = vmul.f32 %v2922, %v2930
        %v2940 = vld [vmem:[%s14] sm:$0x1]
        %v2942 = vlaneseq
        %v2943 = vshrl.u32 %v2942, 7
        %v2944 = vsub.s32 0, %v2943
        %v2945 = vrot.slane %v2940, %v2944
        %v2947 = vadd.f32 %v2932, %v2945
        %v2948 = vadd.f32 %v2933, %v2945
        %v2949 = vadd.f32 %v2934, %v2945
        %v2950 = vadd.f32 %v2935, %v2945
        %v2951 = vadd.f32 %v2936, %v2945
        %v2952 = vadd.f32 %v2937, %v2945
        %v2953 = vadd.f32 %v2938, %v2945
        %v2954 = vadd.f32 %v2939, %v2945
        %v2955 = vmul.f32 %v2947, 0.5
        %v2956 = vmul.f32 %v2948, 0.5
        %v2957 = vmul.f32 %v2949, 0.5
        %v2958 = vmul.f32 %v2950, 0.5
        %v2959 = vmul.f32 %v2951, 0.5
        %v2960 = vmul.f32 %v2952, 0.5
        %v2961 = vmul.f32 %v2953, 0.5
        %v2962 = vmul.f32 %v2954, 0.5
        %v2963 = vmul.f32 %v2947, 0.70710677
        %v2964 = vmul.f32 %v2948, 0.70710677
        %v2965 = vmul.f32 %v2949, 0.70710677
        %v2966 = vmul.f32 %v2950, 0.70710677
        %v2967 = vmul.f32 %v2951, 0.70710677
        %v2968 = vmul.f32 %v2952, 0.70710677
        %v2969 = vmul.f32 %v2953, 0.70710677
        %v2970 = vmul.f32 %v2954, 0.70710677
        %v2971 = vand.u32 2147483647, %v2963
        %v2972 = vand.u32 2147483647, %v2964
        %v2973 = vand.u32 2147483647, %v2965
        %v2974 = vand.u32 2147483647, %v2966
        %v2975 = vand.u32 2147483647, %v2967
        %v2976 = vand.u32 2147483647, %v2968
        %v2977 = vand.u32 2147483647, %v2969
        %v2978 = vand.u32 2147483647, %v2970
        %v2979 = vmul.f32 %v2971, 0.3275911
        %v2980 = vmul.f32 %v2972, 0.3275911
        %v2981 = vmul.f32 %v2973, 0.3275911
        %v2982 = vmul.f32 %v2974, 0.3275911
        %v2983 = vmul.f32 %v2975, 0.3275911
        %v2984 = vmul.f32 %v2976, 0.3275911
        %v2985 = vmul.f32 %v2977, 0.3275911
        %v2986 = vmul.f32 %v2978, 0.3275911
        %v2987 = vadd.f32 %v2979, 1.0
        %v2988 = vadd.f32 %v2980, 1.0
        %v2989 = vadd.f32 %v2981, 1.0
        %v2990 = vadd.f32 %v2982, 1.0
        %v2991 = vadd.f32 %v2983, 1.0
        %v2992 = vadd.f32 %v2984, 1.0
        %v2993 = vadd.f32 %v2985, 1.0
        %v2994 = vadd.f32 %v2986, 1.0
        %v2995 = vrcp.pop %v2987
        %v2996 = vmul.f32 1.0, %v2995
        %v2997 = vrcp.pop %v2988
        %v2998 = vmul.f32 1.0, %v2997
        %v2999 = vrcp.pop %v2989
        %v3000 = vmul.f32 1.0, %v2999
        %v3001 = vrcp.pop %v2990
        %v3002 = vmul.f32 1.0, %v3001
        %v3003 = vrcp.pop %v2991
        %v3004 = vmul.f32 1.0, %v3003
        %v3005 = vrcp.pop %v2992
        %v3006 = vmul.f32 1.0, %v3005
        %v3007 = vrcp.pop %v2993
        %v3008 = vmul.f32 1.0, %v3007
        %v3009 = vrcp.pop %v2994
        %v3010 = vmul.f32 1.0, %v3009
        %v3011 = vmul.f32 %v2996, 1.0614054
        %v3012 = vmul.f32 %v2998, 1.0614054
        %v3013 = vmul.f32 %v3000, 1.0614054
        %v3014 = vmul.f32 %v3002, 1.0614054
        %v3015 = vmul.f32 %v3004, 1.0614054
        %v3016 = vmul.f32 %v3006, 1.0614054
        %v3017 = vmul.f32 %v3008, 1.0614054
        %v3018 = vmul.f32 %v3010, 1.0614054
        %v3019 = vadd.f32 %v3011, -1.4531521
        %v3020 = vadd.f32 %v3012, -1.4531521
        %v3021 = vadd.f32 %v3013, -1.4531521
        %v3022 = vadd.f32 %v3014, -1.4531521
        %v3023 = vadd.f32 %v3015, -1.4531521
        %v3024 = vadd.f32 %v3016, -1.4531521
        %v3025 = vadd.f32 %v3017, -1.4531521
        %v3026 = vadd.f32 %v3018, -1.4531521
        %v3027 = vmul.f32 %v3019, %v2996
        %v3028 = vmul.f32 %v3020, %v2998
        %v3029 = vmul.f32 %v3021, %v3000
        %v3030 = vmul.f32 %v3022, %v3002
        %v3031 = vmul.f32 %v3023, %v3004
        %v3032 = vmul.f32 %v3024, %v3006
        %v3033 = vmul.f32 %v3025, %v3008
        %v3034 = vmul.f32 %v3026, %v3010
        %v3035 = vadd.f32 %v3027, 1.4214138
        %v3036 = vadd.f32 %v3028, 1.4214138
        %v3037 = vadd.f32 %v3029, 1.4214138
        %v3038 = vadd.f32 %v3030, 1.4214138
        %v3039 = vadd.f32 %v3031, 1.4214138
        %v3040 = vadd.f32 %v3032, 1.4214138
        %v3041 = vadd.f32 %v3033, 1.4214138
        %v3042 = vadd.f32 %v3034, 1.4214138
        %v3043 = vmul.f32 %v3035, %v2996
        %v3044 = vmul.f32 %v3036, %v2998
        %v3045 = vmul.f32 %v3037, %v3000
        %v3046 = vmul.f32 %v3038, %v3002
        %v3047 = vmul.f32 %v3039, %v3004
        %v3048 = vmul.f32 %v3040, %v3006
        %v3049 = vmul.f32 %v3041, %v3008
        %v3050 = vmul.f32 %v3042, %v3010
        %v3051 = vadd.f32 %v3043, -0.28449672
        %v3052 = vadd.f32 %v3044, -0.28449672
        %v3053 = vadd.f32 %v3045, -0.28449672
        %v3054 = vadd.f32 %v3046, -0.28449672
        %v3055 = vadd.f32 %v3047, -0.28449672
        %v3056 = vadd.f32 %v3048, -0.28449672
        %v3057 = vadd.f32 %v3049, -0.28449672
        %v3058 = vadd.f32 %v3050, -0.28449672
        %v3059 = vmul.f32 %v3051, %v2996
        %v3060 = vmul.f32 %v3052, %v2998
        %v3061 = vmul.f32 %v3053, %v3000
        %v3062 = vmul.f32 %v3054, %v3002
        %v3063 = vmul.f32 %v3055, %v3004
        %v3064 = vmul.f32 %v3056, %v3006
        %v3065 = vmul.f32 %v3057, %v3008
        %v3066 = vmul.f32 %v3058, %v3010
        %v3067 = vadd.f32 %v3059, 0.2548296
        %v3068 = vadd.f32 %v3060, 0.2548296
        %v3069 = vadd.f32 %v3061, 0.2548296
        %v3070 = vadd.f32 %v3062, 0.2548296
        %v3071 = vadd.f32 %v3063, 0.2548296
        %v3072 = vadd.f32 %v3064, 0.2548296
        %v3073 = vadd.f32 %v3065, 0.2548296
        %v3074 = vadd.f32 %v3066, 0.2548296
        %v3075 = vmul.f32 %v3067, %v2996
        %v3076 = vmul.f32 %v3068, %v2998
        %v3077 = vmul.f32 %v3069, %v3000
        %v3078 = vmul.f32 %v3070, %v3002
        %v3079 = vmul.f32 %v3071, %v3004
        %v3080 = vmul.f32 %v3072, %v3006
        %v3081 = vmul.f32 %v3073, %v3008
        %v3082 = vmul.f32 %v3074, %v3010
        %v3083 = vsub.f32 0.0, %v2971
        %v3084 = vsub.f32 0.0, %v2972
        %v3085 = vsub.f32 0.0, %v2973
        %v3086 = vsub.f32 0.0, %v2974
        %v3087 = vsub.f32 0.0, %v2975
        %v3088 = vsub.f32 0.0, %v2976
        %v3089 = vsub.f32 0.0, %v2977
        %v3090 = vsub.f32 0.0, %v2978
        %v3091 = vmul.f32 %v3083, %v2971
        %v3092 = vmul.f32 %v3084, %v2972
        %v3093 = vmul.f32 %v3085, %v2973
        %v3094 = vmul.f32 %v3086, %v2974
        %v3095 = vmul.f32 %v3087, %v2975
        %v3096 = vmul.f32 %v3088, %v2976
        %v3097 = vmul.f32 %v3089, %v2977
        %v3098 = vmul.f32 %v3090, %v2978
        %v3099 = vmul.f32 %v3091, 1.442695
        %v3100 = vpow.pop %v3099
        %v3101 = vmul.f32 %v3092, 1.442695
        %v3102 = vpow.pop %v3101
        %v3103 = vmul.f32 %v3093, 1.442695
        %v3104 = vpow.pop %v3103
        %v3105 = vmul.f32 %v3094, 1.442695
        %v3106 = vpow.pop %v3105
        %v3107 = vmul.f32 %v3095, 1.442695
        %v3108 = vpow.pop %v3107
        %v3109 = vmul.f32 %v3096, 1.442695
        %v3110 = vpow.pop %v3109
        %v3111 = vmul.f32 %v3097, 1.442695
        %v3112 = vpow.pop %v3111
        %v3113 = vmul.f32 %v3098, 1.442695
        %v3114 = vpow.pop %v3113
        %v3115 = vmul.f32 %v3075, %v3100
        %v3116 = vmul.f32 %v3076, %v3102
        %v3117 = vmul.f32 %v3077, %v3104
        %v3118 = vmul.f32 %v3078, %v3106
        %v3119 = vmul.f32 %v3079, %v3108
        %v3120 = vmul.f32 %v3080, %v3110
        %v3121 = vmul.f32 %v3081, %v3112
        %v3122 = vmul.f32 %v3082, %v3114
        %v3123 = vsub.f32 1.0, %v3115
        %v3124 = vsub.f32 1.0, %v3116
        %v3125 = vsub.f32 1.0, %v3117
        %v3126 = vsub.f32 1.0, %v3118
        %v3127 = vsub.f32 1.0, %v3119
        %v3128 = vsub.f32 1.0, %v3120
        %v3129 = vsub.f32 1.0, %v3121
        %v3130 = vsub.f32 1.0, %v3122
        %vm3131 = vcmp.ge.f32.partialorder %v2963, 0.0
        %vm3132 = vcmp.ge.f32.partialorder %v2964, 0.0
        %vm3133 = vcmp.ge.f32.partialorder %v2965, 0.0
        %vm3134 = vcmp.ge.f32.partialorder %v2966, 0.0
        %vm3135 = vcmp.ge.f32.partialorder %v2967, 0.0
        %vm3136 = vcmp.ge.f32.partialorder %v2968, 0.0
        %vm3137 = vcmp.ge.f32.partialorder %v2969, 0.0
        %vm3138 = vcmp.ge.f32.partialorder %v2970, 0.0
        %v3139 = vsub.f32 0.0, %v3123
        %v3140 = vsub.f32 0.0, %v3124
        %v3141 = vsub.f32 0.0, %v3125
        %v3142 = vsub.f32 0.0, %v3126
        %v3143 = vsub.f32 0.0, %v3127
        %v3144 = vsub.f32 0.0, %v3128
        %v3145 = vsub.f32 0.0, %v3129
        %v3146 = vsub.f32 0.0, %v3130
        %v3147 = vsel %vm3131, %v3123, %v3139
        %v3148 = vsel %vm3132, %v3124, %v3140
        %v3149 = vsel %vm3133, %v3125, %v3141
        %v3150 = vsel %vm3134, %v3126, %v3142
        %v3151 = vsel %vm3135, %v3127, %v3143
        %v3152 = vsel %vm3136, %v3128, %v3144
        %v3153 = vsel %vm3137, %v3129, %v3145
        %v3154 = vsel %vm3138, %v3130, %v3146
        %v3155 = vadd.f32 %v3147, 1.0
        %v3156 = vadd.f32 %v3148, 1.0
        %v3157 = vadd.f32 %v3149, 1.0
        %v3158 = vadd.f32 %v3150, 1.0
        %v3159 = vadd.f32 %v3151, 1.0
        %v3160 = vadd.f32 %v3152, 1.0
        %v3161 = vadd.f32 %v3153, 1.0
        %v3162 = vadd.f32 %v3154, 1.0
        %v3163 = vmul.f32 %v2955, %v3155
        %v3164 = vmul.f32 %v2956, %v3156
        %v3165 = vmul.f32 %v2957, %v3157
        %v3166 = vmul.f32 %v2958, %v3158
        %v3167 = vmul.f32 %v2959, %v3159
        %v3168 = vmul.f32 %v2960, %v3160
        %v3169 = vmul.f32 %v2961, %v3161
        %v3170 = vmul.f32 %v2962, %v3162
        %v3179 = vcombine.high %v3163, %v3163
        %v3181 = vunpack.c.l.s4 1983009808
        %v3182 = vunpack.c.0.s8 %v3181
        %v3183 = vlaneseq
        %v3184 = vshrl.u32 %v3183, 7
        %v3185 = vsub.s32 %v3182, %v3184
        %v3186 = vrot.slane %v3163, %v3185
        %v3188 = vunpack.c.l.s4 1983009808
        %v3189 = vunpack.c.0.s8 %v3188
        %v3190 = vlaneseq
        %v3191 = vshrl.u32 %v3190, 7
        %v3192 = vsub.s32 %v3189, %v3191
        %v3193 = vrot.slane %v3179, %v3192
        %v3194 = vcombine.high %v3186, %v3186
        %v3195 = vcombine.high %v3193, %v3193
        %v3196 = vcombine.high %v3164, %v3164
        %v3198 = vunpack.c.l.s4 1983009808
        %v3199 = vunpack.c.0.s8 %v3198
        %v3200 = vlaneseq
        %v3201 = vshrl.u32 %v3200, 7
        %v3202 = vsub.s32 %v3199, %v3201
        %v3203 = vrot.slane %v3164, %v3202
        %v3205 = vunpack.c.l.s4 1983009808
        %v3206 = vunpack.c.0.s8 %v3205
        %v3207 = vlaneseq
        %v3208 = vshrl.u32 %v3207, 7
        %v3209 = vsub.s32 %v3206, %v3208
        %v3210 = vrot.slane %v3196, %v3209
        %v3211 = vcombine.high %v3203, %v3203
        %v3212 = vcombine.high %v3210, %v3210
        %v3213 = vcombine.high %v3165, %v3165
        %v3215 = vunpack.c.l.s4 1983009808
        %v3216 = vunpack.c.0.s8 %v3215
        %v3217 = vlaneseq
        %v3218 = vshrl.u32 %v3217, 7
        %v3219 = vsub.s32 %v3216, %v3218
        %v3220 = vrot.slane %v3165, %v3219
        %v3222 = vunpack.c.l.s4 1983009808
        %v3223 = vunpack.c.0.s8 %v3222
        %v3224 = vlaneseq
        %v3225 = vshrl.u32 %v3224, 7
        %v3226 = vsub.s32 %v3223, %v3225
        %v3227 = vrot.slane %v3213, %v3226
        %v3228 = vcombine.high %v3220, %v3220
        %v3229 = vcombine.high %v3227, %v3227
        %v3230 = vcombine.high %v3166, %v3166
        %v3232 = vunpack.c.l.s4 1983009808
        %v3233 = vunpack.c.0.s8 %v3232
        %v3234 = vlaneseq
        %v3235 = vshrl.u32 %v3234, 7
        %v3236 = vsub.s32 %v3233, %v3235
        %v3237 = vrot.slane %v3166, %v3236
        %v3239 = vunpack.c.l.s4 1983009808
        %v3240 = vunpack.c.0.s8 %v3239
        %v3241 = vlaneseq
        %v3242 = vshrl.u32 %v3241, 7
        %v3243 = vsub.s32 %v3240, %v3242
        %v3244 = vrot.slane %v3230, %v3243
        %v3245 = vcombine.high %v3237, %v3237
        %v3246 = vcombine.high %v3244, %v3244
        %v3247 = vcombine.high %v3167, %v3167
        %v3249 = vunpack.c.l.s4 1983009808
        %v3250 = vunpack.c.0.s8 %v3249
        %v3251 = vlaneseq
        %v3252 = vshrl.u32 %v3251, 7
        %v3253 = vsub.s32 %v3250, %v3252
        %v3254 = vrot.slane %v3167, %v3253
        %v3256 = vunpack.c.l.s4 1983009808
        %v3257 = vunpack.c.0.s8 %v3256
        %v3258 = vlaneseq
        %v3259 = vshrl.u32 %v3258, 7
        %v3260 = vsub.s32 %v3257, %v3259
        %v3261 = vrot.slane %v3247, %v3260
        %v3262 = vcombine.high %v3254, %v3254
        %v3263 = vcombine.high %v3261, %v3261
        %v3264 = vcombine.high %v3168, %v3168
        %v3266 = vunpack.c.l.s4 1983009808
        %v3267 = vunpack.c.0.s8 %v3266
        %v3268 = vlaneseq
        %v3269 = vshrl.u32 %v3268, 7
        %v3270 = vsub.s32 %v3267, %v3269
        %v3271 = vrot.slane %v3168, %v3270
        %v3273 = vunpack.c.l.s4 1983009808
        %v3274 = vunpack.c.0.s8 %v3273
        %v3275 = vlaneseq
        %v3276 = vshrl.u32 %v3275, 7
        %v3277 = vsub.s32 %v3274, %v3276
        %v3278 = vrot.slane %v3264, %v3277
        %v3279 = vcombine.high %v3271, %v3271
        %v3280 = vcombine.high %v3278, %v3278
        %v3281 = vcombine.high %v3169, %v3169
        %v3283 = vunpack.c.l.s4 1983009808
        %v3284 = vunpack.c.0.s8 %v3283
        %v3285 = vlaneseq
        %v3286 = vshrl.u32 %v3285, 7
        %v3287 = vsub.s32 %v3284, %v3286
        %v3288 = vrot.slane %v3169, %v3287
        %v3290 = vunpack.c.l.s4 1983009808
        %v3291 = vunpack.c.0.s8 %v3290
        %v3292 = vlaneseq
        %v3293 = vshrl.u32 %v3292, 7
        %v3294 = vsub.s32 %v3291, %v3293
        %v3295 = vrot.slane %v3281, %v3294
        %v3296 = vcombine.high %v3288, %v3288
        %v3297 = vcombine.high %v3295, %v3295
        %v3298 = vcombine.high %v3170, %v3170
        %v3300 = vunpack.c.l.s4 1983009808
        %v3301 = vunpack.c.0.s8 %v3300
        %v3302 = vlaneseq
        %v3303 = vshrl.u32 %v3302, 7
        %v3304 = vsub.s32 %v3301, %v3303
        %v3305 = vrot.slane %v3170, %v3304
        %v3307 = vunpack.c.l.s4 1983009808
        %v3308 = vunpack.c.0.s8 %v3307
        %v3309 = vlaneseq
        %v3310 = vshrl.u32 %v3309, 7
        %v3311 = vsub.s32 %v3308, %v3310
        %v3312 = vrot.slane %v3298, %v3311
        %v3313 = vcombine.high %v3305, %v3305
        %v3314 = vcombine.high %v3312, %v3312
        %v3347 = vrot.slane %v3186, 7
        %v3348 = vrot.slane %v3347, 2
        %v3349 = vrot.slane %v3194, 7
        %v3350 = vrot.slane %v3349, 2
        %v3351 = vrot.slane %v3193, 7
        %v3352 = vrot.slane %v3351, 2
        %v3353 = vrot.slane %v3195, 7
        %v3354 = vrot.slane %v3353, 2
        %v3355 = vrot.slane %v3220, 7
        %v3356 = vrot.slane %v3355, 2
        %v3357 = vrot.slane %v3228, 7
        %v3358 = vrot.slane %v3357, 2
        %v3359 = vrot.slane %v3227, 7
        %v3360 = vrot.slane %v3359, 2
        %v3361 = vrot.slane %v3229, 7
        %v3362 = vrot.slane %v3361, 2
        %v3363 = vrot.slane %v3254, 7
        %v3364 = vrot.slane %v3363, 2
        %v3365 = vrot.slane %v3262, 7
        %v3366 = vrot.slane %v3365, 2
        %v3367 = vrot.slane %v3261, 7
        %v3368 = vrot.slane %v3367, 2
        %v3369 = vrot.slane %v3263, 7
        %v3370 = vrot.slane %v3369, 2
        %v3371 = vrot.slane %v3288, 7
        %v3372 = vrot.slane %v3371, 2
        %v3373 = vrot.slane %v3296, 7
        %v3374 = vrot.slane %v3373, 2
        %v3375 = vrot.slane %v3295, 7
        %v3376 = vrot.slane %v3375, 2
        %v3377 = vrot.slane %v3297, 7
        %v3378 = vrot.slane %v3377, 2
        %v3395 = vmax.f32 %v3186, %v3348
        %v3396 = vmax.f32 %v3194, %v3350
        %v3397 = vmax.f32 %v3193, %v3352
        %v3398 = vmax.f32 %v3195, %v3354
        %v3399 = vmax.f32 %v3220, %v3356
        %v3400 = vmax.f32 %v3228, %v3358
        %v3401 = vmax.f32 %v3227, %v3360
        %v3402 = vmax.f32 %v3229, %v3362
        %v3403 = vmax.f32 %v3254, %v3364
        %v3404 = vmax.f32 %v3262, %v3366
        %v3405 = vmax.f32 %v3261, %v3368
        %v3406 = vmax.f32 %v3263, %v3370
        %v3407 = vmax.f32 %v3288, %v3372
        %v3408 = vmax.f32 %v3296, %v3374
        %v3409 = vmax.f32 %v3295, %v3376
        %v3410 = vmax.f32 %v3297, %v3378
        %v3411 = vrot.slane %v3203, 7
        %v3412 = vrot.slane %v3411, 2
        %v3413 = vrot.slane %v3211, 7
        %v3414 = vrot.slane %v3413, 2
        %v3415 = vrot.slane %v3210, 7
        %v3416 = vrot.slane %v3415, 2
        %v3417 = vrot.slane %v3212, 7
        %v3418 = vrot.slane %v3417, 2
        %v3419 = vrot.slane %v3237, 7
        %v3420 = vrot.slane %v3419, 2
        %v3421 = vrot.slane %v3245, 7
        %v3422 = vrot.slane %v3421, 2
        %v3423 = vrot.slane %v3244, 7
        %v3424 = vrot.slane %v3423, 2
        %v3425 = vrot.slane %v3246, 7
        %v3426 = vrot.slane %v3425, 2
        %v3427 = vrot.slane %v3271, 7
        %v3428 = vrot.slane %v3427, 2
        %v3429 = vrot.slane %v3279, 7
        %v3430 = vrot.slane %v3429, 2
        %v3431 = vrot.slane %v3278, 7
        %v3432 = vrot.slane %v3431, 2
        %v3433 = vrot.slane %v3280, 7
        %v3434 = vrot.slane %v3433, 2
        %v3435 = vrot.slane %v3305, 7
        %v3436 = vrot.slane %v3435, 2
        %v3437 = vrot.slane %v3313, 7
        %v3438 = vrot.slane %v3437, 2
        %v3439 = vrot.slane %v3312, 7
        %v3440 = vrot.slane %v3439, 2
        %v3441 = vrot.slane %v3314, 7
        %v3442 = vrot.slane %v3441, 2
        %v3459 = vmax.f32 %v3203, %v3412
        %v3460 = vmax.f32 %v3211, %v3414
        %v3461 = vmax.f32 %v3210, %v3416
        %v3462 = vmax.f32 %v3212, %v3418
        %v3463 = vmax.f32 %v3237, %v3420
        %v3464 = vmax.f32 %v3245, %v3422
        %v3465 = vmax.f32 %v3244, %v3424
        %v3466 = vmax.f32 %v3246, %v3426
        %v3467 = vmax.f32 %v3271, %v3428
        %v3468 = vmax.f32 %v3279, %v3430
        %v3469 = vmax.f32 %v3278, %v3432
        %v3470 = vmax.f32 %v3280, %v3434
        %v3471 = vmax.f32 %v3305, %v3436
        %v3472 = vmax.f32 %v3313, %v3438
        %v3473 = vmax.f32 %v3312, %v3440
        %v3474 = vmax.f32 %v3314, %v3442
        %v3475 = vmax.f32 %v3395, %v3459
        %v3476 = vmax.f32 %v3396, %v3460
        %v3477 = vmax.f32 %v3397, %v3461
        %v3478 = vmax.f32 %v3398, %v3462
        %v3479 = vmax.f32 %v3399, %v3463
        %v3480 = vmax.f32 %v3400, %v3464
        %v3481 = vmax.f32 %v3401, %v3465
        %v3482 = vmax.f32 %v3402, %v3466
        %v3483 = vmax.f32 %v3403, %v3467
        %v3484 = vmax.f32 %v3404, %v3468
        %v3485 = vmax.f32 %v3405, %v3469
        %v3486 = vmax.f32 %v3406, %v3470
        %v3487 = vmax.f32 %v3407, %v3471
        %v3488 = vmax.f32 %v3408, %v3472
        %v3489 = vmax.f32 %v3409, %v3473
        %v3490 = vmax.f32 %v3410, %v3474
        %v3507 = vlaneseq
        %v3508 = vshrl.u32 %v3507, 7
        %v3509 = vsub.s32 0, %v3508
        %v3510 = vrot.slane %v3475, %v3509
        %v3511 = vlaneseq
        %v3512 = vshrl.u32 %v3511, 7
        %v3513 = vsub.s32 0, %v3512
        %v3514 = vrot.slane %v3476, %v3513
        %v3515 = vlaneseq
        %v3516 = vshrl.u32 %v3515, 7
        %v3517 = vsub.s32 0, %v3516
        %v3518 = vrot.slane %v3477, %v3517
        %v3519 = vlaneseq
        %v3520 = vshrl.u32 %v3519, 7
        %v3521 = vsub.s32 0, %v3520
        %v3522 = vrot.slane %v3478, %v3521
        %v3523 = vlaneseq
        %v3524 = vshrl.u32 %v3523, 7
        %v3525 = vsub.s32 0, %v3524
        %v3526 = vrot.slane %v3479, %v3525
        %v3527 = vlaneseq
        %v3528 = vshrl.u32 %v3527, 7
        %v3529 = vsub.s32 0, %v3528
        %v3530 = vrot.slane %v3480, %v3529
        %v3531 = vlaneseq
        %v3532 = vshrl.u32 %v3531, 7
        %v3533 = vsub.s32 0, %v3532
        %v3534 = vrot.slane %v3481, %v3533
        %v3535 = vlaneseq
        %v3536 = vshrl.u32 %v3535, 7
        %v3537 = vsub.s32 0, %v3536
        %v3538 = vrot.slane %v3482, %v3537
        %v3539 = vlaneseq
        %v3540 = vshrl.u32 %v3539, 7
        %v3541 = vsub.s32 0, %v3540
        %v3542 = vrot.slane %v3483, %v3541
        %v3543 = vlaneseq
        %v3544 = vshrl.u32 %v3543, 7
        %v3545 = vsub.s32 0, %v3544
        %v3546 = vrot.slane %v3484, %v3545
        %v3547 = vlaneseq
        %v3548 = vshrl.u32 %v3547, 7
        %v3549 = vsub.s32 0, %v3548
        %v3550 = vrot.slane %v3485, %v3549
        %v3551 = vlaneseq
        %v3552 = vshrl.u32 %v3551, 7
        %v3553 = vsub.s32 0, %v3552
        %v3554 = vrot.slane %v3486, %v3553
        %v3555 = vlaneseq
        %v3556 = vshrl.u32 %v3555, 7
        %v3557 = vsub.s32 0, %v3556
        %v3558 = vrot.slane %v3487, %v3557
        %v3559 = vlaneseq
        %v3560 = vshrl.u32 %v3559, 7
        %v3561 = vsub.s32 0, %v3560
        %v3562 = vrot.slane %v3488, %v3561
        %v3563 = vlaneseq
        %v3564 = vshrl.u32 %v3563, 7
        %v3565 = vsub.s32 0, %v3564
        %v3566 = vrot.slane %v3489, %v3565
        %v3567 = vlaneseq
        %v3568 = vshrl.u32 %v3567, 7
        %v3569 = vsub.s32 0, %v3568
        %v3570 = vrot.slane %v3490, %v3569
        %vm3571 = vcmask 1041409
        %v3572 = vsel %vm3571, %v3514, %v3510
        %vm3573 = vcmask 1042434
        %v3574 = vsel %vm3573, %v3518, %v3572
        %vm3575 = vcmask 1043459
        %v3576 = vsel %vm3575, %v3522, %v3574
        %v3577 = vsel %vm3571, %v3530, %v3526
        %v3578 = vsel %vm3573, %v3534, %v3577
        %v3579 = vsel %vm3575, %v3538, %v3578
        %v3580 = vsel %vm3571, %v3546, %v3542
        %v3581 = vsel %vm3573, %v3550, %v3580
        %v3582 = vsel %vm3575, %v3554, %v3581
        %v3583 = vsel %vm3571, %v3562, %v3558
        %v3584 = vsel %vm3573, %v3566, %v3583
        %v3585 = vsel %vm3575, %v3570, %v3584
        %vm3590 = vcmask 125952
        %3591 = vst.msk [vmem:[%s502] sm:$0xf] %vm3590, %v3576
        %3592 = vst.msk [vmem:[%s502 + $0x4] sm:$0xf] %vm3590, %v3579
        %3593 = vst.msk [vmem:[%s502 + $0x8] sm:$0xf] %vm3590, %v3582
        %3594 = vst.msk [vmem:[%s502 + $0xc] sm:$0xf] %vm3590, %v3585
        %s3595 = sand.u32 %s362, 1
        %s3596 = scalar_lea.sflag [#allocation4], %s3595
        %s3597 = sand.u32 %s362, 1
        %s3598 = smul.addr %s3597, 16
        %s3599 = scalar_lea.vmem [#allocation3], %s3598
        // Predicated region
        $region81: #{adapter_block_forward.1} parent=79 // pred_check
          %p3600 = pneg %p372
        $region82: #{adapter_block_forward.1} parent=79 // pred_check_branch
          %3602 = sbr.rel (%p3600) target = $region84
        $region83: #{adapter_block_forward.1} parent=79 // pred_region
          %s3604 = ssub.s32 256, 256
          %3605 = vsyncadd %s3596, %s3604
          %s3606 = smul.addr %s29, 4
          %s3607 = smul.addr %s3606, 64
          %s3608 = scalar_lea.hbm %s15, %s3607
          %s3609 = sshll.u32 %s3599, 4
          %s3610 = int_to_ptr.vmem [resolvable:$true] %s3609
          %3615 = dma.vmem_to_hbm [thread:$0]  %s3610, 256, %s3608, %s3596, 64, 64, 4
        $region84: #{adapter_block_forward.1} parent=79 // pred_fallthru
          _
      $region80: #{adapter_block_forward.1} parent=5 // pred_fallthru
        _
      %p3616 = scmp.le.s32.totalorder 2, %s24
      // Predicated region
      $region85: #{adapter_block_forward.1} parent=5 // pred_check
        %p3617 = pneg %p3616
      $region86: #{adapter_block_forward.1} parent=5 // pred_check_branch
        %3619 = sbr.rel (%p3617) target = $region88
      $region87: #{adapter_block_forward.1} parent=5 // pred_region
        %s3620 = ssub.s32 %s24, 2
        // Predicated region
        $region89: #{adapter_block_forward.1} parent=87 // pred_check
          %p3621 = pneg %p378
        $region90: #{adapter_block_forward.1} parent=87 // pred_check_branch
          %3623 = sbr.rel (%p3621) target = $region92
        $region91: #{adapter_block_forward.1} parent=87 // pred_region
          %s3624 = sand.u32 %s363, 1
          %s3625 = scalar_lea.sflag [#allocation4], %s3624
          %s3626 = sand.u32 %s363, 1
          %s3627 = smul.addr %s3626, 16
          %s3628 = scalar_lea.vmem [#allocation3], %s3627
          %3629 = dma.done %s3625, 256
        $region92: #{adapter_block_forward.1} parent=87 // pred_fallthru
          _
      $region88: #{adapter_block_forward.1} parent=5 // pred_fallthru
        _
    $region6: #{adapter_block_forward.1} parent=1 // loop_footer
      %s28 = sadd.s32 1, %s24
    $region7: #{adapter_block_forward.1} parent=1 // loop_footer_branch
      %23 = sbr.rel target = $region3
    $region8: #{adapter_block_forward.1} parent=1 // loop_exit
      _
    %3630 = vsyncpa [#allocation4], 1
    %s3631 = scalar_lea.sflag [#allocation4], 1
    %3632 = vsyncpa %s3631, 1

</llo_original>
